<compile_context>
chip_gen: v7x
topology: tpu7x:2x2x1
jax: 0.10.0
libtpu: 0.0.40
codegen_flags: <defaults>
</compile_context>

<pallas_src>
import jax
import jax.numpy as jnp
from jax.experimental import pallas as pl
from jax.experimental.pallas import tpu as pltpu


# -------------------- Pallas kernel: fused GEMM + bias + PReLU ------------- #
# Single K block (K <= 2048 for every layer of this model), so there is no
# reduction grid axis, no accumulator scratch and no init/finalize branches.

def _gemm_bias_prelu_kernel(a_ref, b_ref, bias_ref, alpha_ref, o_ref):
    y = jnp.dot(a_ref[...], b_ref[...], preferred_element_type=jnp.float32)
    y = y + bias_ref[...]                      # (tm, tn) + (1, tn)
    alpha = alpha_ref[0]                       # scalar PReLU weight (SMEM)
    o_ref[...] = jnp.where(y >= 0, y, alpha * y).astype(o_ref.dtype)


def _round_up(x, m):
    return (x + m - 1) // m * m


def gemm_bias_prelu(a, b, bias, alpha):
    """out = PReLU(a @ b + bias); a: (M,K), b: (K,N), bias: (N,), alpha: (1,)."""
    M, K = a.shape
    _, N = b.shape

    Kp = _round_up(K, 128)                 # zero-padded K, one resident block
    Mp = _round_up(M, 8)                   # sublane multiple
    Np = _round_up(N, 128)                 # lane multiple (lane-dense out spec)
    tm = Mp if Mp <= 512 else 256
    tn = Np if Np <= 512 else 256
    Mp = _round_up(Mp, tm)
    Np = _round_up(Np, tn)

    # Pads are tiny and fuse with the im2col producer under jit.
    a_p = jnp.pad(a.astype(jnp.float32), ((0, Mp - M), (0, Kp - K)))
    b_p = jnp.pad(b.astype(jnp.float32), ((0, Kp - K), (0, Np - N)))
    bias_p = jnp.pad(bias.astype(jnp.float32), (0, Np - N)).reshape(1, Np)

    out = pl.pallas_call(
        _gemm_bias_prelu_kernel,
        out_shape=jax.ShapeDtypeStruct((Mp, Np), jnp.float32),
        grid_spec=pltpu.PrefetchScalarGridSpec(
            num_scalar_prefetch=0,
            grid=(Mp // tm, Np // tn),
            in_specs=[
                pl.BlockSpec((tm, Kp), lambda i, j: (i, 0)),
                pl.BlockSpec((Kp, tn), lambda i, j: (0, j)),
                pl.BlockSpec((1, tn), lambda i, j: (0, j)),
                pl.BlockSpec(memory_space=pltpu.MemorySpace.SMEM),
            ],
            out_specs=pl.BlockSpec((tm, tn), lambda i, j: (i, j)),
        ),
        compiler_params=pltpu.CompilerParams(
            dimension_semantics=("parallel", "parallel"),
            vmem_limit_bytes=32 * 1024 * 1024),
    )(a_p, b_p, bias_p, alpha)
    return out[:M, :N]


# -------------------- im2col / conv wrappers (glue, plain JAX) ------------- #

def _im2col(x, kh, kw, sh, sw):
    # x: (N, C, H, W) -> (N*OH*OW, C*kh*kw), K flattened as (C, kh, kw)
    N, C, H, W = x.shape
    OH = (H - kh) // sh + 1
    OW = (W - kw) // sw + 1
    cols = []
    for i in range(kh):
        for j in range(kw):
            cols.append(x[:, :, i:i + sh * OH:sh, j:j + sw * OW:sw])
    cols = jnp.stack(cols, axis=0).reshape(kh, kw, N, C, OH, OW)
    cols = cols.transpose(2, 4, 5, 3, 0, 1).reshape(N * OH * OW, C * kh * kw)
    return cols, OH, OW


def conv2d_prelu(x, w, b, stride, alpha):
    # w: (Cout, Cin, kh, kw), valid padding, square stride
    Cout, Cin, kh, kw = w.shape
    N = x.shape[0]
    cols, OH, OW = _im2col(x, kh, kw, stride, stride)
    wmat = w.reshape(Cout, Cin * kh * kw).T          # (K, Cout), K = (C, kh, kw)
    y = gemm_bias_prelu(cols, wmat, b, alpha)        # (N*OH*OW, Cout)
    return y.reshape(N, OH, OW, Cout).transpose(0, 3, 1, 2)


def conv_transpose2d_prelu(x, w_t, b, stride, out_pad, alpha):
    """ConvTranspose2d (padding=0) + PReLU via sub-pixel decomposition.

    w_t: (Cin, Cout, k, k); stride s divides k (r = k // s).  Equivalent to a
    stride-1 valid conv on the (r-1)-padded input with s*s*Cout output channels
    (phase (p,q) uses the flipped kernel sub-sampled at ((s-1-p)::s,(s-1-q)::s))
    followed by an s x s pixel shuffle.  output_padding rows/cols receive a
    zero conv contribution, i.e. PReLU(bias).
    """
    Cin, Cout, kh, kw = w_t.shape
    N, C, H, W = x.shape
    s = stride
    r = kh // s
    assert kh == kw and r * s == kh, "stride must divide the kernel size"

    # (r-1) spatial zero-pad so every output phase is a valid r x r conv.
    xp = jnp.pad(x, ((0, 0), (0, 0), (r - 1, r - 1), (r - 1, r - 1)))

    # Build the stride-1 weight matrix (Cin*r*r, s*s*Cout); columns ordered
    # (p, q, co), rows ordered (ci, m', n') to match _im2col's K flattening.
    w6 = jnp.flip(w_t, (2, 3)).reshape(Cin, Cout, r, s, r, s)
    w6 = jnp.flip(w6, (3, 5))                              # (ci,co,m',p,n',q)
    wmat = w6.transpose(0, 2, 4, 3, 5, 1).reshape(Cin * r * r, s * s * Cout)
    bias_t = jnp.tile(b, s * s)                            # per (p,q,co) column

    cols, Hc, Wc = _im2col(xp, r, r, 1, 1)                 # (N*Hc*Wc, Cin*r*r)
    y = gemm_bias_prelu(cols, wmat, bias_t, alpha)         # (N*Hc*Wc, s*s*Cout)

    # Pixel shuffle: out[n, co, s*u+p, s*v+q] = y[n, u, v, p, q, co]
    y = y.reshape(N, Hc, Wc, s, s, Cout).transpose(0, 5, 1, 3, 2, 4)
    base = y.reshape(N, Cout, s * Hc, s * Wc)

    oph, opw = out_pad
    if oph == 0 and opw == 0:
        return base
    # output_padding rows/cols have empty receptive fields -> PReLU(bias).
    OH, OW = s * Hc + oph, s * Wc + opw
    pad_val = jnp.where(b >= 0, b, alpha[0] * b).astype(base.dtype)
    full = jnp.broadcast_to(pad_val.reshape(1, Cout, 1, 1), (N, Cout, OH, OW))
    return full.at[:, :, :s * Hc, :s * Wc].set(base)


# -------------------- model ------------------------------------------------ #

def init_params(key):
    ks = jax.random.split(key, 12)

    def w(k, shape, fan_in):
        return jax.random.normal(k, shape, jnp.float32) / jnp.sqrt(fan_in)

    p = {
        "conv1_w": w(ks[0], (128, 3, 8, 8), 3 * 64),
        "conv1_b": 0.01 * jax.random.normal(ks[1], (128,), jnp.float32),
        "conv2_w": w(ks[2], (64, 128, 4, 4), 128 * 16),
        "conv2_b": 0.01 * jax.random.normal(ks[3], (64,), jnp.float32),
        "conv3_w": w(ks[4], (64, 64, 4, 4), 64 * 16),
        "conv3_b": 0.01 * jax.random.normal(ks[5], (64,), jnp.float32),
        "tconv1_w": w(ks[6], (64, 64, 4, 4), 64 * 16),      # (Cin, Cout, kh, kw)
        "tconv1_b": 0.01 * jax.random.normal(ks[7], (64,), jnp.float32),
        "tconv2_w": w(ks[8], (64, 128, 4, 4), 64 * 16),
        "tconv2_b": 0.01 * jax.random.normal(ks[9], (128,), jnp.float32),
        "tconv3_w": w(ks[10], (128, 3, 8, 8), 128 * 64),
        "tconv3_b": 0.01 * jax.random.normal(ks[11], (3,), jnp.float32),
        "prelu_a": jnp.array([0.25], jnp.float32),           # nn.PReLU() default
    }
    return p


def auto_encoder_forward(p, x):
    a = p["prelu_a"]
    # encoder (forward_pass)
    x1 = conv2d_prelu(x, p["conv1_w"], p["conv1_b"], 4, a)
    x2 = conv2d_prelu(x1, p["conv2_w"], p["conv2_b"], 2, a)
    x3 = conv2d_prelu(x2, p["conv3_w"], p["conv3_b"], 2, a)
    # decoder (reconstruct_pass) — PReLU after every layer, incl. the last
    # (matches the reference module).
    y = conv_transpose2d_prelu(x3, p["tconv1_w"], p["tconv1_b"], 2, (1, 0), a)
    y = conv_transpose2d_prelu(y, p["tconv2_w"], p["tconv2_b"], 2, (1, 0), a)
    y = conv_transpose2d_prelu(y, p["tconv3_w"], p["tconv3_b"], 4, (0, 0), a)
    return y


if __name__ == "__main__":
    key = jax.random.PRNGKey(0)
    pkey, xkey = jax.random.split(key)
    params = init_params(pkey)
    # smallest spatial size that survives the encoder strides: 48x48
    x = jax.random.normal(xkey, (2, 3, 48, 48), jnp.float32)

    forward = jax.jit(auto_encoder_forward)
    out = jax.block_until_ready(forward(params, x))
    # encoder: 48 -> 11 -> 4 -> 1 ; decoder: 1 -> (5,4) -> (13,10) -> (56,44)
    assert out.shape == (2, 3, 56, 44), out.shape
    assert jnp.all(jnp.isfinite(out))
    print("KERNEL_OK")
</pallas_src>

<mosaic_0001>
module attributes {stable_mosaic.version = 11 : i64} {
  func.func @_gemm_bias_prelu_kernel(%arg0: i32, %arg1: i32, %arg2: memref<248x256xf32, #tpu.memory_space<vmem>>, %arg3: memref<256x128xf32, #tpu.memory_space<vmem>>, %arg4: memref<1x128xf32, #tpu.memory_space<vmem>>, %arg5: memref<1xf32, #tpu.memory_space<smem>>, %arg6: memref<248x128xf32, #tpu.memory_space<vmem>>) attributes {dimension_semantics = [#tpu.dimension_semantics<parallel>, #tpu.dimension_semantics<parallel>], iteration_bounds = array<i64: 1, 1>, scalar_prefetch = 0 : i64, scratch_operands = 0 : i64, tpu.core_type = #tpu.core_type<tc>, window_params = [{transform_indices = @transform_0, window_bounds = array<i64: 248, 256>}, {transform_indices = @transform_1, window_bounds = array<i64: 256, 128>}, {transform_indices = @transform_2, window_bounds = array<i64: 1, 128>}, {transform_indices = @transform_3, window_bounds = array<i64: 1>}, {transform_indices = @transform_4, window_bounds = array<i64: 248, 128>}]} {
    %c0 = arith.constant 0 : index
    %c0_0 = arith.constant 0 : index
    %0 = vector.load %arg2[%c0, %c0_0] : memref<248x256xf32, #tpu.memory_space<vmem>>, vector<248x256xf32>
    %c0_1 = arith.constant 0 : index
    %c0_2 = arith.constant 0 : index
    %1 = vector.load %arg3[%c0_1, %c0_2] : memref<256x128xf32, #tpu.memory_space<vmem>>, vector<256x128xf32>
    %cst = arith.constant dense<0.000000e+00> : vector<248x128xf32>
    %2 = tpu.matmul %0, %1, %cst {dimension_numbers = #tpu.dot_dimension_numbers<[1], [0], [0], [1], [0, 0, 1, 1], [], []>} : vector<248x256xf32>, vector<256x128xf32>, vector<248x128xf32> -> vector<248x128xf32>
    %c0_3 = arith.constant 0 : index
    %c0_4 = arith.constant 0 : index
    %3 = vector.load %arg4[%c0_3, %c0_4] : memref<1x128xf32, #tpu.memory_space<vmem>>, vector<1x128xf32>
    %4 = vector.broadcast %3 : vector<1x128xf32> to vector<248x128xf32>
    %5 = arith.addf %2, %4 : vector<248x128xf32>
    %c0_5 = arith.constant 0 : index
    %6 = memref.load %arg5[%c0_5] : memref<1xf32, #tpu.memory_space<smem>>
    %cst_6 = arith.constant 0.000000e+00 : f32
    %7 = vector.broadcast %cst_6 : f32 to vector<248x128xf32>
    %8 = arith.cmpf oge, %5, %7 : vector<248x128xf32>
    %9 = vector.broadcast %6 : f32 to vector<248x128xf32>
    %10 = arith.mulf %9, %5 : vector<248x128xf32>
    %11 = arith.select %8, %5, %10 : vector<248x128xi1>, vector<248x128xf32>
    %c0_7 = arith.constant 0 : index
    %c0_8 = arith.constant 0 : index
    %12 = vector.load %arg6[%c0_7, %c0_8] : memref<248x128xf32, #tpu.memory_space<vmem>>, vector<248x128xf32>
    tpu.vector_store %arg6[%c0_7, %c0_8], %11 {strides = array<i32>} : memref<248x128xf32, #tpu.memory_space<vmem>>, vector<248x128xf32>,
    return
  }
  func.func @transform_0(%arg0: i32, %arg1: i32) -> (i32, i32) {
    %c0_i32 = arith.constant 0 : i32
    %c0_i32_0 = arith.constant 0 : i32
    return %arg0, %c0_i32 : i32, i32
  }
  func.func @transform_1(%arg0: i32, %arg1: i32) -> (i32, i32) {
    %c0_i32 = arith.constant 0 : i32
    %c0_i32_0 = arith.constant 0 : i32
    return %c0_i32, %arg1 : i32, i32
  }
  func.func @transform_2(%arg0: i32, %arg1: i32) -> (i32, i32) {
    %c0_i32 = arith.constant 0 : i32
    %c0_i32_0 = arith.constant 0 : i32
    return %c0_i32, %arg1 : i32, i32
  }
  func.func @transform_3(%arg0: i32, %arg1: i32) -> i32 {
    %c0_i32 = arith.constant 0 : i32
    %c0_i32_0 = arith.constant 0 : i32
    return %c0_i32 : i32
  }
  func.func @transform_4(%arg0: i32, %arg1: i32) -> (i32, i32) {
    %c0_i32 = arith.constant 0 : i32
    return %arg0, %arg1 : i32, i32
  }
}

module attributes {stable_mosaic.version = 11 : i64} {
  func.func @_gemm_bias_prelu_kernel(%arg0: i32, %arg1: i32, %arg2: memref<32x2048xf32, #tpu.memory_space<vmem>>, %arg3: memref<2048x128xf32, #tpu.memory_space<vmem>>, %arg4: memref<1x128xf32, #tpu.memory_space<vmem>>, %arg5: memref<1xf32, #tpu.memory_space<smem>>, %arg6: memref<32x128xf32, #tpu.memory_space<vmem>>) attributes {dimension_semantics = [#tpu.dimension_semantics<parallel>, #tpu.dimension_semantics<parallel>], iteration_bounds = array<i64: 1, 1>, scalar_prefetch = 0 : i64, scratch_operands = 0 : i64, tpu.core_type = #tpu.core_type<tc>, window_params = [{transform_indices = @transform_0, window_bounds = array<i64: 32, 2048>}, {transform_indices = @transform_1, window_bounds = array<i64: 2048, 128>}, {transform_indices = @transform_2, window_bounds = array<i64: 1, 128>}, {transform_indices = @transform_3, window_bounds = array<i64: 1>}, {transform_indices = @transform_4, window_bounds = array<i64: 32, 128>}]} {
    %c0 = arith.constant 0 : index
    %c0_0 = arith.constant 0 : index
    %0 = vector.load %arg2[%c0, %c0_0] : memref<32x2048xf32, #tpu.memory_space<vmem>>, vector<32x2048xf32>
    %c0_1 = arith.constant 0 : index
    %c0_2 = arith.constant 0 : index
    %1 = vector.load %arg3[%c0_1, %c0_2] : memref<2048x128xf32, #tpu.memory_space<vmem>>, vector<2048x128xf32>
    %cst = arith.constant dense<0.000000e+00> : vector<32x128xf32>
    %2 = tpu.matmul %0, %1, %cst {dimension_numbers = #tpu.dot_dimension_numbers<[1], [0], [0], [1], [0, 0, 1, 1], [], []>} : vector<32x2048xf32>, vector<2048x128xf32>, vector<32x128xf32> -> vector<32x128xf32>
    %c0_3 = arith.constant 0 : index
    %c0_4 = arith.constant 0 : index
    %3 = vector.load %arg4[%c0_3, %c0_4] : memref<1x128xf32, #tpu.memory_space<vmem>>, vector<1x128xf32>
    %4 = vector.broadcast %3 : vector<1x128xf32> to vector<32x128xf32>
    %5 = arith.addf %2, %4 : vector<32x128xf32>
    %c0_5 = arith.constant 0 : index
    %6 = memref.load %arg5[%c0_5] : memref<1xf32, #tpu.memory_space<smem>>
    %cst_6 = arith.constant 0.000000e+00 : f32
    %7 = vector.broadcast %cst_6 : f32 to vector<32x128xf32>
    %8 = arith.cmpf oge, %5, %7 : vector<32x128xf32>
    %9 = vector.broadcast %6 : f32 to vector<32x128xf32>
    %10 = arith.mulf %9, %5 : vector<32x128xf32>
    %11 = arith.select %8, %5, %10 : vector<32x128xi1>, vector<32x128xf32>
    %c0_7 = arith.constant 0 : index
    %c0_8 = arith.constant 0 : index
    %12 = vector.load %arg6[%c0_7, %c0_8] : memref<32x128xf32, #tpu.memory_space<vmem>>, vector<32x128xf32>
    tpu.vector_store %arg6[%c0_7, %c0_8], %11 {strides = array<i32>} : memref<32x128xf32, #tpu.memory_space<vmem>>, vector<32x128xf32>,
    return
  }
  func.func @transform_0(%arg0: i32, %arg1: i32) -> (i32, i32) {
    %c0_i32 = arith.constant 0 : i32
    %c0_i32_0 = arith.constant 0 : i32
    return %arg0, %c0_i32 : i32, i32
  }
  func.func @transform_1(%arg0: i32, %arg1: i32) -> (i32, i32) {
    %c0_i32 = arith.constant 0 : i32
    %c0_i32_0 = arith.constant 0 : i32
    return %c0_i32, %arg1 : i32, i32
  }
  func.func @transform_2(%arg0: i32, %arg1: i32) -> (i32, i32) {
    %c0_i32 = arith.constant 0 : i32
    %c0_i32_0 = arith.constant 0 : i32
    return %c0_i32, %arg1 : i32, i32
  }
  func.func @transform_3(%arg0: i32, %arg1: i32) -> i32 {
    %c0_i32 = arith.constant 0 : i32
    %c0_i32_0 = arith.constant 0 : i32
    return %c0_i32 : i32
  }
  func.func @transform_4(%arg0: i32, %arg1: i32) -> (i32, i32) {
    %c0_i32 = arith.constant 0 : i32
    return %arg0, %arg1 : i32, i32
  }
}

module attributes {stable_mosaic.version = 11 : i64} {
  func.func @_gemm_bias_prelu_kernel(%arg0: i32, %arg1: i32, %arg2: memref<8x1024xf32, #tpu.memory_space<vmem>>, %arg3: memref<1024x128xf32, #tpu.memory_space<vmem>>, %arg4: memref<1x128xf32, #tpu.memory_space<vmem>>, %arg5: memref<1xf32, #tpu.memory_space<smem>>, %arg6: memref<8x128xf32, #tpu.memory_space<vmem>>) attributes {dimension_semantics = [#tpu.dimension_semantics<parallel>, #tpu.dimension_semantics<parallel>], iteration_bounds = array<i64: 1, 1>, scalar_prefetch = 0 : i64, scratch_operands = 0 : i64, tpu.core_type = #tpu.core_type<tc>, window_params = [{transform_indices = @transform_0, window_bounds = array<i64: 8, 1024>}, {transform_indices = @transform_1, window_bounds = array<i64: 1024, 128>}, {transform_indices = @transform_2, window_bounds = array<i64: 1, 128>}, {transform_indices = @transform_3, window_bounds = array<i64: 1>}, {transform_indices = @transform_4, window_bounds = array<i64: 8, 128>}]} {
    %c0 = arith.constant 0 : index
    %c0_0 = arith.constant 0 : index
    %0 = vector.load %arg2[%c0, %c0_0] : memref<8x1024xf32, #tpu.memory_space<vmem>>, vector<8x1024xf32>
    %c0_1 = arith.constant 0 : index
    %c0_2 = arith.constant 0 : index
    %1 = vector.load %arg3[%c0_1, %c0_2] : memref<1024x128xf32, #tpu.memory_space<vmem>>, vector<1024x128xf32>
    %cst = arith.constant dense<0.000000e+00> : vector<8x128xf32>
    %2 = tpu.matmul %0, %1, %cst {dimension_numbers = #tpu.dot_dimension_numbers<[1], [0], [0], [1], [0, 0, 1, 1], [], []>} : vector<8x1024xf32>, vector<1024x128xf32>, vector<8x128xf32> -> vector<8x128xf32>
    %c0_3 = arith.constant 0 : index
    %c0_4 = arith.constant 0 : index
    %3 = vector.load %arg4[%c0_3, %c0_4] : memref<1x128xf32, #tpu.memory_space<vmem>>, vector<1x128xf32>
    %4 = vector.broadcast %3 : vector<1x128xf32> to vector<8x128xf32>
    %5 = arith.addf %2, %4 : vector<8x128xf32>
    %c0_5 = arith.constant 0 : index
    %6 = memref.load %arg5[%c0_5] : memref<1xf32, #tpu.memory_space<smem>>
    %cst_6 = arith.constant 0.000000e+00 : f32
    %7 = vector.broadcast %cst_6 : f32 to vector<8x128xf32>
    %8 = arith.cmpf oge, %5, %7 : vector<8x128xf32>
    %9 = vector.broadcast %6 : f32 to vector<8x128xf32>
    %10 = arith.mulf %9, %5 : vector<8x128xf32>
    %11 = arith.select %8, %5, %10 : vector<8x128xi1>, vector<8x128xf32>
    %c0_7 = arith.constant 0 : index
    %c0_8 = arith.constant 0 : index
    %12 = vector.load %arg6[%c0_7, %c0_8] : memref<8x128xf32, #tpu.memory_space<vmem>>, vector<8x128xf32>
    tpu.vector_store %arg6[%c0_7, %c0_8], %11 {strides = array<i32>} : memref<8x128xf32, #tpu.memory_space<vmem>>, vector<8x128xf32>,
    return
  }
  func.func @transform_0(%arg0: i32, %arg1: i32) -> (i32, i32) {
    %c0_i32 = arith.constant 0 : i32
    %c0_i32_0 = arith.constant 0 : i32
    return %arg0, %c0_i32 : i32, i32
  }
  func.func @transform_1(%arg0: i32, %arg1: i32) -> (i32, i32) {
    %c0_i32 = arith.constant 0 : i32
    %c0_i32_0 = arith.constant 0 : i32
    return %c0_i32, %arg1 : i32, i32
  }
  func.func @transform_2(%arg0: i32, %arg1: i32) -> (i32, i32) {
    %c0_i32 = arith.constant 0 : i32
    %c0_i32_0 = arith.constant 0 : i32
    return %c0_i32, %arg1 : i32, i32
  }
  func.func @transform_3(%arg0: i32, %arg1: i32) -> i32 {
    %c0_i32 = arith.constant 0 : i32
    %c0_i32_0 = arith.constant 0 : i32
    return %c0_i32 : i32
  }
  func.func @transform_4(%arg0: i32, %arg1: i32) -> (i32, i32) {
    %c0_i32 = arith.constant 0 : i32
    return %arg0, %arg1 : i32, i32
  }
}

module attributes {stable_mosaic.version = 11 : i64} {
  func.func @_gemm_bias_prelu_kernel(%arg0: i32, %arg1: i32, %arg2: memref<8x256xf32, #tpu.memory_space<vmem>>, %arg3: memref<256x256xf32, #tpu.memory_space<vmem>>, %arg4: memref<1x256xf32, #tpu.memory_space<vmem>>, %arg5: memref<1xf32, #tpu.memory_space<smem>>, %arg6: memref<8x256xf32, #tpu.memory_space<vmem>>) attributes {dimension_semantics = [#tpu.dimension_semantics<parallel>, #tpu.dimension_semantics<parallel>], iteration_bounds = array<i64: 1, 1>, scalar_prefetch = 0 : i64, scratch_operands = 0 : i64, tpu.core_type = #tpu.core_type<tc>, window_params = [{transform_indices = @transform_0, window_bounds = array<i64: 8, 256>}, {transform_indices = @transform_1, window_bounds = array<i64: 256, 256>}, {transform_indices = @transform_2, window_bounds = array<i64: 1, 256>}, {transform_indices = @transform_3, window_bounds = array<i64: 1>}, {transform_indices = @transform_4, window_bounds = array<i64: 8, 256>}]} {
    %c0 = arith.constant 0 : index
    %c0_0 = arith.constant 0 : index
    %0 = vector.load %arg2[%c0, %c0_0] : memref<8x256xf32, #tpu.memory_space<vmem>>, vector<8x256xf32>
    %c0_1 = arith.constant 0 : index
    %c0_2 = arith.constant 0 : index
    %1 = vector.load %arg3[%c0_1, %c0_2] : memref<256x256xf32, #tpu.memory_space<vmem>>, vector<256x256xf32>
    %cst = arith.constant dense<0.000000e+00> : vector<8x256xf32>
    %2 = tpu.matmul %0, %1, %cst {dimension_numbers = #tpu.dot_dimension_numbers<[1], [0], [0], [1], [0, 0, 1, 1], [], []>} : vector<8x256xf32>, vector<256x256xf32>, vector<8x256xf32> -> vector<8x256xf32>
    %c0_3 = arith.constant 0 : index
    %c0_4 = arith.constant 0 : index
    %3 = vector.load %arg4[%c0_3, %c0_4] : memref<1x256xf32, #tpu.memory_space<vmem>>, vector<1x256xf32>
    %4 = vector.broadcast %3 : vector<1x256xf32> to vector<8x256xf32>
    %5 = arith.addf %2, %4 : vector<8x256xf32>
    %c0_5 = arith.constant 0 : index
    %6 = memref.load %arg5[%c0_5] : memref<1xf32, #tpu.memory_space<smem>>
    %cst_6 = arith.constant 0.000000e+00 : f32
    %7 = vector.broadcast %cst_6 : f32 to vector<8x256xf32>
    %8 = arith.cmpf oge, %5, %7 : vector<8x256xf32>
    %9 = vector.broadcast %6 : f32 to vector<8x256xf32>
    %10 = arith.mulf %9, %5 : vector<8x256xf32>
    %11 = arith.select %8, %5, %10 : vector<8x256xi1>, vector<8x256xf32>
    %c0_7 = arith.constant 0 : index
    %c0_8 = arith.constant 0 : index
    %12 = vector.load %arg6[%c0_7, %c0_8] : memref<8x256xf32, #tpu.memory_space<vmem>>, vector<8x256xf32>
    tpu.vector_store %arg6[%c0_7, %c0_8], %11 {strides = array<i32>} : memref<8x256xf32, #tpu.memory_space<vmem>>, vector<8x256xf32>,
    return
  }
  func.func @transform_0(%arg0: i32, %arg1: i32) -> (i32, i32) {
    %c0_i32 = arith.constant 0 : i32
    %c0_i32_0 = arith.constant 0 : i32
    return %arg0, %c0_i32 : i32, i32
  }
  func.func @transform_1(%arg0: i32, %arg1: i32) -> (i32, i32) {
    %c0_i32 = arith.constant 0 : i32
    %c0_i32_0 = arith.constant 0 : i32
    return %c0_i32, %arg1 : i32, i32
  }
  func.func @transform_2(%arg0: i32, %arg1: i32) -> (i32, i32) {
    %c0_i32 = arith.constant 0 : i32
    %c0_i32_0 = arith.constant 0 : i32
    return %c0_i32, %arg1 : i32, i32
  }
  func.func @transform_3(%arg0: i32, %arg1: i32) -> i32 {
    %c0_i32 = arith.constant 0 : i32
    %c0_i32_0 = arith.constant 0 : i32
    return %c0_i32 : i32
  }
  func.func @transform_4(%arg0: i32, %arg1: i32) -> (i32, i32) {
    %c0_i32 = arith.constant 0 : i32
    return %arg0, %arg1 : i32, i32
  }
}

module attributes {stable_mosaic.version = 11 : i64} {
  func.func @_gemm_bias_prelu_kernel(%arg0: i32, %arg1: i32, %arg2: memref<64x256xf32, #tpu.memory_space<vmem>>, %arg3: memref<256x512xf32, #tpu.memory_space<vmem>>, %arg4: memref<1x512xf32, #tpu.memory_space<vmem>>, %arg5: memref<1xf32, #tpu.memory_space<smem>>, %arg6: memref<64x512xf32, #tpu.memory_space<vmem>>) attributes {dimension_semantics = [#tpu.dimension_semantics<parallel>, #tpu.dimension_semantics<parallel>], iteration_bounds = array<i64: 1, 1>, scalar_prefetch = 0 : i64, scratch_operands = 0 : i64, tpu.core_type = #tpu.core_type<tc>, window_params = [{transform_indices = @transform_0, window_bounds = array<i64: 64, 256>}, {transform_indices = @transform_1, window_bounds = array<i64: 256, 512>}, {transform_indices = @transform_2, window_bounds = array<i64: 1, 512>}, {transform_indices = @transform_3, window_bounds = array<i64: 1>}, {transform_indices = @transform_4, window_bounds = array<i64: 64, 512>}]} {
    %c0 = arith.constant 0 : index
    %c0_0 = arith.constant 0 : index
    %0 = vector.load %arg2[%c0, %c0_0] : memref<64x256xf32, #tpu.memory_space<vmem>>, vector<64x256xf32>
    %c0_1 = arith.constant 0 : index
    %c0_2 = arith.constant 0 : index
    %1 = vector.load %arg3[%c0_1, %c0_2] : memref<256x512xf32, #tpu.memory_space<vmem>>, vector<256x512xf32>
    %cst = arith.constant dense<0.000000e+00> : vector<64x512xf32>
    %2 = tpu.matmul %0, %1, %cst {dimension_numbers = #tpu.dot_dimension_numbers<[1], [0], [0], [1], [0, 0, 1, 1], [], []>} : vector<64x256xf32>, vector<256x512xf32>, vector<64x512xf32> -> vector<64x512xf32>
    %c0_3 = arith.constant 0 : index
    %c0_4 = arith.constant 0 : index
    %3 = vector.load %arg4[%c0_3, %c0_4] : memref<1x512xf32, #tpu.memory_space<vmem>>, vector<1x512xf32>
    %4 = vector.broadcast %3 : vector<1x512xf32> to vector<64x512xf32>
    %5 = arith.addf %2, %4 : vector<64x512xf32>
    %c0_5 = arith.constant 0 : index
    %6 = memref.load %arg5[%c0_5] : memref<1xf32, #tpu.memory_space<smem>>
    %cst_6 = arith.constant 0.000000e+00 : f32
    %7 = vector.broadcast %cst_6 : f32 to vector<64x512xf32>
    %8 = arith.cmpf oge, %5, %7 : vector<64x512xf32>
    %9 = vector.broadcast %6 : f32 to vector<64x512xf32>
    %10 = arith.mulf %9, %5 : vector<64x512xf32>
    %11 = arith.select %8, %5, %10 : vector<64x512xi1>, vector<64x512xf32>
    %c0_7 = arith.constant 0 : index
    %c0_8 = arith.constant 0 : index
    %12 = vector.load %arg6[%c0_7, %c0_8] : memref<64x512xf32, #tpu.memory_space<vmem>>, vector<64x512xf32>
    tpu.vector_store %arg6[%c0_7, %c0_8], %11 {strides = array<i32>} : memref<64x512xf32, #tpu.memory_space<vmem>>, vector<64x512xf32>,
    return
  }
  func.func @transform_0(%arg0: i32, %arg1: i32) -> (i32, i32) {
    %c0_i32 = arith.constant 0 : i32
    %c0_i32_0 = arith.constant 0 : i32
    return %arg0, %c0_i32 : i32, i32
  }
  func.func @transform_1(%arg0: i32, %arg1: i32) -> (i32, i32) {
    %c0_i32 = arith.constant 0 : i32
    %c0_i32_0 = arith.constant 0 : i32
    return %c0_i32, %arg1 : i32, i32
  }
  func.func @transform_2(%arg0: i32, %arg1: i32) -> (i32, i32) {
    %c0_i32 = arith.constant 0 : i32
    %c0_i32_0 = arith.constant 0 : i32
    return %c0_i32, %arg1 : i32, i32
  }
  func.func @transform_3(%arg0: i32, %arg1: i32) -> i32 {
    %c0_i32 = arith.constant 0 : i32
    %c0_i32_0 = arith.constant 0 : i32
    return %c0_i32 : i32
  }
  func.func @transform_4(%arg0: i32, %arg1: i32) -> (i32, i32) {
    %c0_i32 = arith.constant 0 : i32
    return %arg0, %arg1 : i32, i32
  }
}

module attributes {stable_mosaic.version = 11 : i64} {
  func.func @_gemm_bias_prelu_kernel(%arg0: i32, %arg1: i32, %arg2: memref<312x512xf32, #tpu.memory_space<vmem>>, %arg3: memref<512x128xf32, #tpu.memory_space<vmem>>, %arg4: memref<1x128xf32, #tpu.memory_space<vmem>>, %arg5: memref<1xf32, #tpu.memory_space<smem>>, %arg6: memref<312x128xf32, #tpu.memory_space<vmem>>) attributes {dimension_semantics = [#tpu.dimension_semantics<parallel>, #tpu.dimension_semantics<parallel>], iteration_bounds = array<i64: 1, 1>, scalar_prefetch = 0 : i64, scratch_operands = 0 : i64, tpu.core_type = #tpu.core_type<tc>, window_params = [{transform_indices = @transform_0, window_bounds = array<i64: 312, 512>}, {transform_indices = @transform_1, window_bounds = array<i64: 512, 128>}, {transform_indices = @transform_2, window_bounds = array<i64: 1, 128>}, {transform_indices = @transform_3, window_bounds = array<i64: 1>}, {transform_indices = @transform_4, window_bounds = array<i64: 312, 128>}]} {
    %c0 = arith.constant 0 : index
    %c0_0 = arith.constant 0 : index
    %0 = vector.load %arg2[%c0, %c0_0] : memref<312x512xf32, #tpu.memory_space<vmem>>, vector<312x512xf32>
    %c0_1 = arith.constant 0 : index
    %c0_2 = arith.constant 0 : index
    %1 = vector.load %arg3[%c0_1, %c0_2] : memref<512x128xf32, #tpu.memory_space<vmem>>, vector<512x128xf32>
    %cst = arith.constant dense<0.000000e+00> : vector<312x128xf32>
    %2 = tpu.matmul %0, %1, %cst {dimension_numbers = #tpu.dot_dimension_numbers<[1], [0], [0], [1], [0, 0, 1, 1], [], []>} : vector<312x512xf32>, vector<512x128xf32>, vector<312x128xf32> -> vector<312x128xf32>
    %c0_3 = arith.constant 0 : index
    %c0_4 = arith.constant 0 : index
    %3 = vector.load %arg4[%c0_3, %c0_4] : memref<1x128xf32, #tpu.memory_space<vmem>>, vector<1x128xf32>
    %4 = vector.broadcast %3 : vector<1x128xf32> to vector<312x128xf32>
    %5 = arith.addf %2, %4 : vector<312x128xf32>
    %c0_5 = arith.constant 0 : index
    %6 = memref.load %arg5[%c0_5] : memref<1xf32, #tpu.memory_space<smem>>
    %cst_6 = arith.constant 0.000000e+00 : f32
    %7 = vector.broadcast %cst_6 : f32 to vector<312x128xf32>
    %8 = arith.cmpf oge, %5, %7 : vector<312x128xf32>
    %9 = vector.broadcast %6 : f32 to vector<312x128xf32>
    %10 = arith.mulf %9, %5 : vector<312x128xf32>
    %11 = arith.select %8, %5, %10 : vector<312x128xi1>, vector<312x128xf32>
    %c0_7 = arith.constant 0 : index
    %c0_8 = arith.constant 0 : index
    %12 = vector.load %arg6[%c0_7, %c0_8] : memref<312x128xf32, #tpu.memory_space<vmem>>, vector<312x128xf32>
    tpu.vector_store %arg6[%c0_7, %c0_8], %11 {strides = array<i32>} : memref<312x128xf32, #tpu.memory_space<vmem>>, vector<312x128xf32>,
    return
  }
  func.func @transform_0(%arg0: i32, %arg1: i32) -> (i32, i32) {
    %c0_i32 = arith.constant 0 : i32
    %c0_i32_0 = arith.constant 0 : i32
    return %arg0, %c0_i32 : i32, i32
  }
  func.func @transform_1(%arg0: i32, %arg1: i32) -> (i32, i32) {
    %c0_i32 = arith.constant 0 : i32
    %c0_i32_0 = arith.constant 0 : i32
    return %c0_i32, %arg1 : i32, i32
  }
  func.func @transform_2(%arg0: i32, %arg1: i32) -> (i32, i32) {
    %c0_i32 = arith.constant 0 : i32
    %c0_i32_0 = arith.constant 0 : i32
    return %c0_i32, %arg1 : i32, i32
  }
  func.func @transform_3(%arg0: i32, %arg1: i32) -> i32 {
    %c0_i32 = arith.constant 0 : i32
    %c0_i32_0 = arith.constant 0 : i32
    return %c0_i32 : i32
  }
  func.func @transform_4(%arg0: i32, %arg1: i32) -> (i32, i32) {
    %c0_i32 = arith.constant 0 : i32
    return %arg0, %arg1 : i32, i32
  }
}

</mosaic_0001>

<llo_original>
// kernel: auto_encoder_forward.6
$region0: #{auto_encoder_forward.6}
  #allocation0 [shape = 'u32[]', space=smem, size = 0x4, offset = 0x4, fixed_abs, tag = 'smem constant byte address 0x4 - core index']
  #allocation1 [shape = 'u32[144,128]{1,0:T(1,128)}', space=vmem, size = 0x12000, scoped, tag = 'internal scratch']
  #allocation2 [shape = 'f32[1]{0:T(128)S(6)}', space=smem, size = 0x200, scoped, tag = 'scoped memory for auto_encoder_forward.6']
  %s0 = inlined_call_operand.vmem [shape: f32[248,256], index: 0, kind: input, shape index: {}]
  %s1 = inlined_call_operand.vmem [shape: f32[256,128], index: 1, kind: input, shape index: {}]
  %s2 = inlined_call_operand.vmem [shape: f32[1,128], index: 2, kind: input, shape index: {}]
  %s3 = inlined_call_operand.<no memory space> [shape: f32[1], index: 3, kind: input, shape index: {}]
  %s4 = inlined_call_operand.vmem [shape: f32[248,128], index: 4, kind: output, shape index: {}]
  %s5 = sld [smem:[#allocation0]]
  $region26: #{auto_encoder_forward.6} parent=0
    _
  %s7 = ssub.s32 1, %s5
  %s8 = scalar_select 0, %s7, %s5
  %9 = sst [smem:[#allocation2]] %s3
  // Predicated region
  $region2: #{auto_encoder_forward.6} parent=0 // pred_check
    _
  $region3: #{auto_encoder_forward.6} parent=0 // pred_check_branch
    %11 = sbr.rel (0) target = $region5
  $region4: #{auto_encoder_forward.6} parent=0 // pred_region
    _
  $region5: #{auto_encoder_forward.6} parent=0 // pred_fallthru
    _
  // Predicated region
  $region6: #{auto_encoder_forward.6} parent=0 // pred_check
    _
  $region7: #{auto_encoder_forward.6} parent=0 // pred_check_branch
    %13 = sbr.rel (0) target = $region9
  $region8: #{auto_encoder_forward.6} parent=0 // pred_region
    _
  $region9: #{auto_encoder_forward.6} parent=0 // pred_fallthru
    _
  // Predicated region
  $region10: #{auto_encoder_forward.6} parent=0 // pred_check
    _
  $region11: #{auto_encoder_forward.6} parent=0 // pred_check_branch
    %15 = sbr.rel (0) target = $region13
  $region12: #{auto_encoder_forward.6} parent=0 // pred_region
    _
  $region13: #{auto_encoder_forward.6} parent=0 // pred_fallthru
    _
  // Predicated region
  $region14: #{auto_encoder_forward.6} parent=0 // pred_check
    _
  $region15: #{auto_encoder_forward.6} parent=0 // pred_check_branch
    %17 = sbr.rel (0) target = $region17
  $region16: #{auto_encoder_forward.6} parent=0 // pred_region
    _
  $region17: #{auto_encoder_forward.6} parent=0 // pred_fallthru
    _
  %v18 = vld [vmem:[%s0] sm:$0xff]
  %v19 = vld [vmem:[%s0 + $0x8] sm:$0xff]
  %v20 = vld [vmem:[%s0 + $0x10] sm:$0xff]
  %v21 = vld [vmem:[%s0 + $0x18] sm:$0xff]
  %v22 = vld [vmem:[%s0 + $0x20] sm:$0xff]
  %v23 = vld [vmem:[%s0 + $0x28] sm:$0xff]
  %v24 = vld [vmem:[%s0 + $0x30] sm:$0xff]
  %v25 = vld [vmem:[%s0 + $0x38] sm:$0xff]
  %v26 = vld [vmem:[%s0 + $0x40] sm:$0xff]
  %v27 = vld [vmem:[%s0 + $0x48] sm:$0xff]
  %v28 = vld [vmem:[%s0 + $0x50] sm:$0xff]
  %v29 = vld [vmem:[%s0 + $0x58] sm:$0xff]
  %v30 = vld [vmem:[%s0 + $0x60] sm:$0xff]
  %v31 = vld [vmem:[%s0 + $0x68] sm:$0xff]
  %v32 = vld [vmem:[%s0 + $0x70] sm:$0xff]
  %v33 = vld [vmem:[%s0 + $0x78] sm:$0xff]
  %v34 = vld [vmem:[%s0 + $0x80] sm:$0xff]
  %v35 = vld [vmem:[%s0 + $0x88] sm:$0xff]
  %v36 = vld [vmem:[%s0 + $0x90] sm:$0xff]
  %v37 = vld [vmem:[%s0 + $0x98] sm:$0xff]
  %v38 = vld [vmem:[%s0 + $0xa0] sm:$0xff]
  %v39 = vld [vmem:[%s0 + $0xa8] sm:$0xff]
  %v40 = vld [vmem:[%s0 + $0xb0] sm:$0xff]
  %v41 = vld [vmem:[%s0 + $0xb8] sm:$0xff]
  %v42 = vld [vmem:[%s0 + $0xc0] sm:$0xff]
  %v43 = vld [vmem:[%s0 + $0xc8] sm:$0xff]
  %v44 = vld [vmem:[%s0 + $0xd0] sm:$0xff]
  %v45 = vld [vmem:[%s0 + $0xd8] sm:$0xff]
  %v46 = vld [vmem:[%s0 + $0xe0] sm:$0xff]
  %v47 = vld [vmem:[%s0 + $0xe8] sm:$0xff]
  %v48 = vld [vmem:[%s0 + $0xf0] sm:$0xff]
  %v49 = vld [vmem:[%s0 + $0xf8] sm:$0xff]
  %v50 = vld [vmem:[%s0 + $0x100] sm:$0xff]
  %v51 = vld [vmem:[%s0 + $0x108] sm:$0xff]
  %v52 = vld [vmem:[%s0 + $0x110] sm:$0xff]
  %v53 = vld [vmem:[%s0 + $0x118] sm:$0xff]
  %v54 = vld [vmem:[%s0 + $0x120] sm:$0xff]
  %v55 = vld [vmem:[%s0 + $0x128] sm:$0xff]
  %v56 = vld [vmem:[%s0 + $0x130] sm:$0xff]
  %v57 = vld [vmem:[%s0 + $0x138] sm:$0xff]
  %v58 = vld [vmem:[%s0 + $0x140] sm:$0xff]
  %v59 = vld [vmem:[%s0 + $0x148] sm:$0xff]
  %v60 = vld [vmem:[%s0 + $0x150] sm:$0xff]
  %v61 = vld [vmem:[%s0 + $0x158] sm:$0xff]
  %v62 = vld [vmem:[%s0 + $0x160] sm:$0xff]
  %v63 = vld [vmem:[%s0 + $0x168] sm:$0xff]
  %v64 = vld [vmem:[%s0 + $0x170] sm:$0xff]
  %v65 = vld [vmem:[%s0 + $0x178] sm:$0xff]
  %v66 = vld [vmem:[%s0 + $0x180] sm:$0xff]
  %v67 = vld [vmem:[%s0 + $0x188] sm:$0xff]
  %v68 = vld [vmem:[%s0 + $0x190] sm:$0xff]
  %v69 = vld [vmem:[%s0 + $0x198] sm:$0xff]
  %v70 = vld [vmem:[%s0 + $0x1a0] sm:$0xff]
  %v71 = vld [vmem:[%s0 + $0x1a8] sm:$0xff]
  %v72 = vld [vmem:[%s0 + $0x1b0] sm:$0xff]
  %v73 = vld [vmem:[%s0 + $0x1b8] sm:$0xff]
  %v74 = vld [vmem:[%s0 + $0x1c0] sm:$0xff]
  %v75 = vld [vmem:[%s0 + $0x1c8] sm:$0xff]
  %v76 = vld [vmem:[%s0 + $0x1d0] sm:$0xff]
  %v77 = vld [vmem:[%s0 + $0x1d8] sm:$0xff]
  %v78 = vld [vmem:[%s0 + $0x1e0] sm:$0xff]
  %v79 = vld [vmem:[%s0 + $0x1e8] sm:$0xff]
  %v80 = vld [vmem:[%s1] sm:$0xff]
  %v81 = vld [vmem:[%s1 + $0x8] sm:$0xff]
  %v82 = vld [vmem:[%s1 + $0x10] sm:$0xff]
  %v83 = vld [vmem:[%s1 + $0x18] sm:$0xff]
  %v84 = vld [vmem:[%s1 + $0x20] sm:$0xff]
  %v85 = vld [vmem:[%s1 + $0x28] sm:$0xff]
  %v86 = vld [vmem:[%s1 + $0x30] sm:$0xff]
  %v87 = vld [vmem:[%s1 + $0x38] sm:$0xff]
  %v88 = vld [vmem:[%s1 + $0x40] sm:$0xff]
  %v89 = vld [vmem:[%s1 + $0x48] sm:$0xff]
  %v90 = vld [vmem:[%s1 + $0x50] sm:$0xff]
  %v91 = vld [vmem:[%s1 + $0x58] sm:$0xff]
  %v92 = vld [vmem:[%s1 + $0x60] sm:$0xff]
  %v93 = vld [vmem:[%s1 + $0x68] sm:$0xff]
  %v94 = vld [vmem:[%s1 + $0x70] sm:$0xff]
  %v95 = vld [vmem:[%s1 + $0x78] sm:$0xff]
  %v96 = vld [vmem:[%s1 + $0x80] sm:$0xff]
  %v97 = vld [vmem:[%s1 + $0x88] sm:$0xff]
  %v98 = vld [vmem:[%s1 + $0x90] sm:$0xff]
  %v99 = vld [vmem:[%s1 + $0x98] sm:$0xff]
  %v100 = vld [vmem:[%s1 + $0xa0] sm:$0xff]
  %v101 = vld [vmem:[%s1 + $0xa8] sm:$0xff]
  %v102 = vld [vmem:[%s1 + $0xb0] sm:$0xff]
  %v103 = vld [vmem:[%s1 + $0xb8] sm:$0xff]
  %v104 = vld [vmem:[%s1 + $0xc0] sm:$0xff]
  %v105 = vld [vmem:[%s1 + $0xc8] sm:$0xff]
  %v106 = vld [vmem:[%s1 + $0xd0] sm:$0xff]
  %v107 = vld [vmem:[%s1 + $0xd8] sm:$0xff]
  %v108 = vld [vmem:[%s1 + $0xe0] sm:$0xff]
  %v109 = vld [vmem:[%s1 + $0xe8] sm:$0xff]
  %v110 = vld [vmem:[%s1 + $0xf0] sm:$0xff]
  %v111 = vld [vmem:[%s1 + $0xf8] sm:$0xff]
  %v112 = vld [vmem:[%s2] sm:$0x1]
  %v114 = vlaneseq
  %v115 = vshrl.u32 %v114, 7
  %v116 = vsub.s32 0, %v115
  %v117 = vrot.slane %v112, %v116
  %119 = vmatprep.subr.mxu0 0.0
  %120 = vmatpush1.msra.mxu0 %v80
  %121 = vmatprep.subr.mxu0 0.0
  %122 = vmatpush1.msra.mxu0 %v81
  %123 = vmatprep.subr.mxu0 0.0
  %124 = vmatpush1.msra.mxu0 %v82
  %125 = vmatprep.subr.mxu0 0.0
  %126 = vmatpush1.msra.mxu0 %v83
  %127 = vmatprep.subr.mxu0 0.0
  %128 = vmatpush1.msra.mxu0 %v84
  %129 = vmatprep.subr.mxu0 0.0
  %130 = vmatpush1.msra.mxu0 %v85
  %131 = vmatprep.subr.mxu0 0.0
  %132 = vmatpush1.msra.mxu0 %v86
  %133 = vmatprep.subr.mxu0 0.0
  %134 = vmatpush1.msra.mxu0 %v87
  %135 = vmatprep.subr.mxu0 0.0
  %136 = vmatpush1.msra.mxu0 %v88
  %137 = vmatprep.subr.mxu0 0.0
  %138 = vmatpush1.msra.mxu0 %v89
  %139 = vmatprep.subr.mxu0 0.0
  %140 = vmatpush1.msra.mxu0 %v90
  %141 = vmatprep.subr.mxu0 0.0
  %142 = vmatpush1.msra.mxu0 %v91
  %143 = vmatprep.subr.mxu0 0.0
  %144 = vmatpush1.msra.mxu0 %v92
  %145 = vmatprep.subr.mxu0 0.0
  %146 = vmatpush1.msra.mxu0 %v93
  %147 = vmatprep.subr.mxu0 0.0
  %148 = vmatpush1.msra.mxu0 %v94
  %149 = vmatprep.subr.mxu0 0.0
  %150 = vmatpush1.msra.mxu0 %v95
  %151 = vmatprep.subr.mxu0 0.0
  %152 = vmatpush1.msra.mxu0 %v96
  %153 = vmatprep.subr.mxu0 0.0
  %154 = vmatpush1.msra.mxu0 %v97
  %155 = vmatprep.subr.mxu0 0.0
  %156 = vmatpush1.msra.mxu0 %v98
  %157 = vmatprep.subr.mxu0 0.0
  %158 = vmatpush1.msra.mxu0 %v99
  %159 = vmatprep.subr.mxu0 0.0
  %160 = vmatpush1.msra.mxu0 %v100
  %161 = vmatprep.subr.mxu0 0.0
  %162 = vmatpush1.msra.mxu0 %v101
  %163 = vmatprep.subr.mxu0 0.0
  %164 = vmatpush1.msra.mxu0 %v102
  %165 = vmatprep.subr.mxu0 0.0
  %166 = vmatpush1.msra.mxu0 %v103
  %167 = vmatprep.subr.mxu0 0.0
  %168 = vmatpush1.msra.mxu0 %v104
  %169 = vmatprep.subr.mxu0 0.0
  %170 = vmatpush1.msra.mxu0 %v105
  %171 = vmatprep.subr.mxu0 0.0
  %172 = vmatpush1.msra.mxu0 %v106
  %173 = vmatprep.subr.mxu0 0.0
  %174 = vmatpush1.msra.mxu0 %v107
  %175 = vmatprep.subr.mxu0 0.0
  %176 = vmatpush1.msra.mxu0 %v108
  %177 = vmatprep.subr.mxu0 0.0
  %178 = vmatpush1.msra.mxu0 %v109
  %179 = vmatprep.subr.mxu0 0.0
  %180 = vmatpush1.msra.mxu0 %v110
  %181 = vmatprep.subr.mxu0 0.0
  %182 = vmatpush1.msra.mxu0 %v111
  %183 = vmatprep.mubr.f32.mxu0 %v19
  %184 = vmatmul.mubr.f32.gmra.mrb[0].mxu0 %v18
  %v185 = vpop.f32.mrb[0].mxu0
  %v186 = vadd.f32 %v117, %v185
  %v187 = vpop.f32.mrb[0].mxu0
  %188 = vmatprep.mubr.f32.mxu0 %v21
  %189 = vmatmul.mubr.f32.gmra.mrb[0].mxu0 %v20
  %v190 = vpop.f32.mrb[0].mxu0
  %v191 = vadd.f32 %v117, %v190
  %v192 = vpop.f32.mrb[0].mxu0
  %193 = vmatprep.mubr.f32.mxu0 %v23
  %194 = vmatmul.mubr.f32.gmra.mrb[0].mxu0 %v22
  %v195 = vpop.f32.mrb[0].mxu0
  %v196 = vadd.f32 %v117, %v195
  %v197 = vpop.f32.mrb[0].mxu0
  %198 = vmatprep.mubr.f32.mxu0 %v25
  %199 = vmatmul.mubr.f32.gmra.mrb[0].mxu0 %v24
  %v200 = vpop.f32.mrb[0].mxu0
  %v201 = vadd.f32 %v117, %v200
  %v202 = vpop.f32.mrb[0].mxu0
  %203 = vmatprep.mubr.f32.mxu0 %v27
  %204 = vmatmul.mubr.f32.gmra.mrb[0].mxu0 %v26
  %v205 = vpop.f32.mrb[0].mxu0
  %v206 = vadd.f32 %v117, %v205
  %v207 = vpop.f32.mrb[0].mxu0
  %208 = vmatprep.mubr.f32.mxu0 %v29
  %209 = vmatmul.mubr.f32.gmra.mrb[0].mxu0 %v28
  %v210 = vpop.f32.mrb[0].mxu0
  %v211 = vadd.f32 %v117, %v210
  %v212 = vpop.f32.mrb[0].mxu0
  %213 = vmatprep.mubr.f32.mxu0 %v31
  %214 = vmatmul.mubr.f32.gmra.mrb[0].mxu0 %v30
  %v215 = vpop.f32.mrb[0].mxu0
  %v216 = vadd.f32 %v117, %v215
  %v217 = vpop.f32.mrb[0].mxu0
  %218 = vmatprep.mubr.f32.mxu0 %v33
  %219 = vmatmul.mubr.f32.gmra.mrb[0].mxu0 %v32
  %v220 = vpop.f32.mrb[0].mxu0
  %v221 = vadd.f32 %v117, %v220
  %v222 = vpop.f32.mrb[0].mxu0
  %223 = vmatprep.mubr.f32.mxu0 %v35
  %224 = vmatmul.mubr.f32.gmra.mrb[0].mxu0 %v34
  %v225 = vpop.f32.mrb[0].mxu0
  %v226 = vadd.f32 %v117, %v225
  %v227 = vpop.f32.mrb[0].mxu0
  %228 = vmatprep.mubr.f32.mxu0 %v37
  %229 = vmatmul.mubr.f32.gmra.mrb[0].mxu0 %v36
  %v230 = vpop.f32.mrb[0].mxu0
  %v231 = vadd.f32 %v117, %v230
  %v232 = vpop.f32.mrb[0].mxu0
  %233 = vmatprep.mubr.f32.mxu0 %v39
  %234 = vmatmul.mubr.f32.gmra.mrb[0].mxu0 %v38
  %v235 = vpop.f32.mrb[0].mxu0
  %v236 = vadd.f32 %v117, %v235
  %v237 = vpop.f32.mrb[0].mxu0
  %238 = vmatprep.mubr.f32.mxu0 %v41
  %239 = vmatmul.mubr.f32.gmra.mrb[0].mxu0 %v40
  %v240 = vpop.f32.mrb[0].mxu0
  %v241 = vadd.f32 %v117, %v240
  %v242 = vpop.f32.mrb[0].mxu0
  %243 = vmatprep.mubr.f32.mxu0 %v43
  %244 = vmatmul.mubr.f32.gmra.mrb[0].mxu0 %v42
  %v245 = vpop.f32.mrb[0].mxu0
  %v246 = vadd.f32 %v117, %v245
  %v247 = vpop.f32.mrb[0].mxu0
  %248 = vmatprep.mubr.f32.mxu0 %v45
  %249 = vmatmul.mubr.f32.gmra.mrb[0].mxu0 %v44
  %v250 = vpop.f32.mrb[0].mxu0
  %v251 = vadd.f32 %v117, %v250
  %v252 = vpop.f32.mrb[0].mxu0
  %253 = vmatprep.mubr.f32.mxu0 %v47
  %254 = vmatmul.mubr.f32.gmra.mrb[0].mxu0 %v46
  %v255 = vpop.f32.mrb[0].mxu0
  %v256 = vadd.f32 %v117, %v255
  %v257 = vpop.f32.mrb[0].mxu0
  %258 = vmatprep.mubr.f32.mxu0 %v49
  %259 = vmatmul.mubr.f32.gmra.mrb[0].mxu0 %v48
  %v260 = vpop.f32.mrb[0].mxu0
  %v261 = vadd.f32 %v117, %v260
  %v262 = vpop.f32.mrb[0].mxu0
  %263 = vmatprep.mubr.f32.mxu0 %v51
  %264 = vmatmul.mubr.f32.gmra.mrb[0].mxu0 %v50
  %v265 = vpop.f32.mrb[0].mxu0
  %v266 = vadd.f32 %v117, %v265
  %v267 = vpop.f32.mrb[0].mxu0
  %268 = vmatprep.mubr.f32.mxu0 %v53
  %269 = vmatmul.mubr.f32.gmra.mrb[0].mxu0 %v52
  %v270 = vpop.f32.mrb[0].mxu0
  %v271 = vadd.f32 %v117, %v270
  %v272 = vpop.f32.mrb[0].mxu0
  %273 = vmatprep.mubr.f32.mxu0 %v55
  %274 = vmatmul.mubr.f32.gmra.mrb[0].mxu0 %v54
  %v275 = vpop.f32.mrb[0].mxu0
  %v276 = vadd.f32 %v117, %v275
  %v277 = vpop.f32.mrb[0].mxu0
  %278 = vmatprep.mubr.f32.mxu0 %v57
  %279 = vmatmul.mubr.f32.gmra.mrb[0].mxu0 %v56
  %v280 = vpop.f32.mrb[0].mxu0
  %v281 = vadd.f32 %v117, %v280
  %v282 = vpop.f32.mrb[0].mxu0
  %283 = vmatprep.mubr.f32.mxu0 %v59
  %284 = vmatmul.mubr.f32.gmra.mrb[0].mxu0 %v58
  %v285 = vpop.f32.mrb[0].mxu0
  %v286 = vadd.f32 %v117, %v285
  %v287 = vpop.f32.mrb[0].mxu0
  %288 = vmatprep.mubr.f32.mxu0 %v61
  %289 = vmatmul.mubr.f32.gmra.mrb[0].mxu0 %v60
  %v290 = vpop.f32.mrb[0].mxu0
  %v291 = vadd.f32 %v117, %v290
  %v292 = vpop.f32.mrb[0].mxu0
  %293 = vmatprep.mubr.f32.mxu0 %v63
  %294 = vmatmul.mubr.f32.gmra.mrb[0].mxu0 %v62
  %v295 = vpop.f32.mrb[0].mxu0
  %v296 = vadd.f32 %v117, %v295
  %v297 = vpop.f32.mrb[0].mxu0
  %298 = vmatprep.mubr.f32.mxu0 %v65
  %299 = vmatmul.mubr.f32.gmra.mrb[0].mxu0 %v64
  %v300 = vpop.f32.mrb[0].mxu0
  %v301 = vadd.f32 %v117, %v300
  %v302 = vpop.f32.mrb[0].mxu0
  %303 = vmatprep.mubr.f32.mxu0 %v67
  %304 = vmatmul.mubr.f32.gmra.mrb[0].mxu0 %v66
  %v305 = vpop.f32.mrb[0].mxu0
  %v306 = vadd.f32 %v117, %v305
  %v307 = vpop.f32.mrb[0].mxu0
  %308 = vmatprep.mubr.f32.mxu0 %v69
  %309 = vmatmul.mubr.f32.gmra.mrb[0].mxu0 %v68
  %v310 = vpop.f32.mrb[0].mxu0
  %v311 = vadd.f32 %v117, %v310
  %v312 = vpop.f32.mrb[0].mxu0
  %313 = vmatprep.mubr.f32.mxu0 %v71
  %314 = vmatmul.mubr.f32.gmra.mrb[0].mxu0 %v70
  %v315 = vpop.f32.mrb[0].mxu0
  %v316 = vadd.f32 %v117, %v315
  %v317 = vpop.f32.mrb[0].mxu0
  %318 = vmatprep.mubr.f32.mxu0 %v73
  %319 = vmatmul.mubr.f32.gmra.mrb[0].mxu0 %v72
  %v320 = vpop.f32.mrb[0].mxu0
  %v321 = vadd.f32 %v117, %v320
  %v322 = vpop.f32.mrb[0].mxu0
  %323 = vmatprep.mubr.f32.mxu0 %v75
  %324 = vmatmul.mubr.f32.gmra.mrb[0].mxu0 %v74
  %v325 = vpop.f32.mrb[0].mxu0
  %v326 = vadd.f32 %v117, %v325
  %v327 = vpop.f32.mrb[0].mxu0
  %328 = vmatprep.mubr.f32.mxu0 %v77
  %329 = vmatmul.mubr.f32.gmra.mrb[0].mxu0 %v76
  %v330 = vpop.f32.mrb[0].mxu0
  %v331 = vadd.f32 %v117, %v330
  %v332 = vpop.f32.mrb[0].mxu0
  %333 = vmatprep.mubr.f32.mxu0 %v79
  %334 = vmatmul.mubr.f32.gmra.mrb[0].mxu0 %v78
  %v335 = vpop.f32.mrb[0].mxu0
  %v336 = vadd.f32 %v117, %v335
  %v337 = vpop.f32.mrb[0].mxu0
  %338 = vdwg.mxu0
  %s339 = sld [smem:[#allocation2]]
  %vm340 = vcmp.ge.f32.partialorder %v186, 0.0
  %vm341 = vcmp.ge.f32.partialorder %v191, 0.0
  %vm342 = vcmp.ge.f32.partialorder %v196, 0.0
  %vm343 = vcmp.ge.f32.partialorder %v201, 0.0
  %vm344 = vcmp.ge.f32.partialorder %v206, 0.0
  %vm345 = vcmp.ge.f32.partialorder %v211, 0.0
  %vm346 = vcmp.ge.f32.partialorder %v216, 0.0
  %vm347 = vcmp.ge.f32.partialorder %v221, 0.0
  %vm348 = vcmp.ge.f32.partialorder %v226, 0.0
  %vm349 = vcmp.ge.f32.partialorder %v231, 0.0
  %vm350 = vcmp.ge.f32.partialorder %v236, 0.0
  %vm351 = vcmp.ge.f32.partialorder %v241, 0.0
  %vm352 = vcmp.ge.f32.partialorder %v246, 0.0
  %vm353 = vcmp.ge.f32.partialorder %v251, 0.0
  %vm354 = vcmp.ge.f32.partialorder %v256, 0.0
  %vm355 = vcmp.ge.f32.partialorder %v261, 0.0
  %vm356 = vcmp.ge.f32.partialorder %v266, 0.0
  %vm357 = vcmp.ge.f32.partialorder %v271, 0.0
  %vm358 = vcmp.ge.f32.partialorder %v276, 0.0
  %vm359 = vcmp.ge.f32.partialorder %v281, 0.0
  %vm360 = vcmp.ge.f32.partialorder %v286, 0.0
  %vm361 = vcmp.ge.f32.partialorder %v291, 0.0
  %vm362 = vcmp.ge.f32.partialorder %v296, 0.0
  %vm363 = vcmp.ge.f32.partialorder %v301, 0.0
  %vm364 = vcmp.ge.f32.partialorder %v306, 0.0
  %vm365 = vcmp.ge.f32.partialorder %v311, 0.0
  %vm366 = vcmp.ge.f32.partialorder %v316, 0.0
  %vm367 = vcmp.ge.f32.partialorder %v321, 0.0
  %vm368 = vcmp.ge.f32.partialorder %v326, 0.0
  %vm369 = vcmp.ge.f32.partialorder %v331, 0.0
  %vm370 = vcmp.ge.f32.partialorder %v336, 0.0
  %v371 = vstv %s339
  %v372 = vmul.f32 %v371, %v186
  %v373 = vmul.f32 %v371, %v191
  %v374 = vmul.f32 %v371, %v196
  %v375 = vmul.f32 %v371, %v201
  %v376 = vmul.f32 %v371, %v206
  %v377 = vmul.f32 %v371, %v211
  %v378 = vmul.f32 %v371, %v216
  %v379 = vmul.f32 %v371, %v221
  %v380 = vmul.f32 %v371, %v226
  %v381 = vmul.f32 %v371, %v231
  %v382 = vmul.f32 %v371, %v236
  %v383 = vmul.f32 %v371, %v241
  %v384 = vmul.f32 %v371, %v246
  %v385 = vmul.f32 %v371, %v251
  %v386 = vmul.f32 %v371, %v256
  %v387 = vmul.f32 %v371, %v261
  %v388 = vmul.f32 %v371, %v266
  %v389 = vmul.f32 %v371, %v271
  %v390 = vmul.f32 %v371, %v276
  %v391 = vmul.f32 %v371, %v281
  %v392 = vmul.f32 %v371, %v286
  %v393 = vmul.f32 %v371, %v291
  %v394 = vmul.f32 %v371, %v296
  %v395 = vmul.f32 %v371, %v301
  %v396 = vmul.f32 %v371, %v306
  %v397 = vmul.f32 %v371, %v311
  %v398 = vmul.f32 %v371, %v316
  %v399 = vmul.f32 %v371, %v321
  %v400 = vmul.f32 %v371, %v326
  %v401 = vmul.f32 %v371, %v331
  %v402 = vmul.f32 %v371, %v336
  %v403 = vsel %vm340, %v186, %v372
  %v404 = vsel %vm341, %v191, %v373
  %v405 = vsel %vm342, %v196, %v374
  %v406 = vsel %vm343, %v201, %v375
  %v407 = vsel %vm344, %v206, %v376
  %v408 = vsel %vm345, %v211, %v377
  %v409 = vsel %vm346, %v216, %v378
  %v410 = vsel %vm347, %v221, %v379
  %v411 = vsel %vm348, %v226, %v380
  %v412 = vsel %vm349, %v231, %v381
  %v413 = vsel %vm350, %v236, %v382
  %v414 = vsel %vm351, %v241, %v383
  %v415 = vsel %vm352, %v246, %v384
  %v416 = vsel %vm353, %v251, %v385
  %v417 = vsel %vm354, %v256, %v386
  %v418 = vsel %vm355, %v261, %v387
  %v419 = vsel %vm356, %v266, %v388
  %v420 = vsel %vm357, %v271, %v389
  %v421 = vsel %vm358, %v276, %v390
  %v422 = vsel %vm359, %v281, %v391
  %v423 = vsel %vm360, %v286, %v392
  %v424 = vsel %vm361, %v291, %v393
  %v425 = vsel %vm362, %v296, %v394
  %v426 = vsel %vm363, %v301, %v395
  %v427 = vsel %vm364, %v306, %v396
  %v428 = vsel %vm365, %v311, %v397
  %v429 = vsel %vm366, %v316, %v398
  %v430 = vsel %vm367, %v321, %v399
  %v431 = vsel %vm368, %v326, %v400
  %v432 = vsel %vm369, %v331, %v401
  %v433 = vsel %vm370, %v336, %v402
  %434 = vst [vmem:[%s4] sm:$0xff] %v403
  %435 = vst [vmem:[%s4 + $0x8] sm:$0xff] %v404
  %436 = vst [vmem:[%s4 + $0x10] sm:$0xff] %v405
  %437 = vst [vmem:[%s4 + $0x18] sm:$0xff] %v406
  %438 = vst [vmem:[%s4 + $0x20] sm:$0xff] %v407
  %439 = vst [vmem:[%s4 + $0x28] sm:$0xff] %v408
  %440 = vst [vmem:[%s4 + $0x30] sm:$0xff] %v409
  %441 = vst [vmem:[%s4 + $0x38] sm:$0xff] %v410
  %442 = vst [vmem:[%s4 + $0x40] sm:$0xff] %v411
  %443 = vst [vmem:[%s4 + $0x48] sm:$0xff] %v412
  %444 = vst [vmem:[%s4 + $0x50] sm:$0xff] %v413
  %445 = vst [vmem:[%s4 + $0x58] sm:$0xff] %v414
  %446 = vst [vmem:[%s4 + $0x60] sm:$0xff] %v415
  %447 = vst [vmem:[%s4 + $0x68] sm:$0xff] %v416
  %448 = vst [vmem:[%s4 + $0x70] sm:$0xff] %v417
  %449 = vst [vmem:[%s4 + $0x78] sm:$0xff] %v418
  %450 = vst [vmem:[%s4 + $0x80] sm:$0xff] %v419
  %451 = vst [vmem:[%s4 + $0x88] sm:$0xff] %v420
  %452 = vst [vmem:[%s4 + $0x90] sm:$0xff] %v421
  %453 = vst [vmem:[%s4 + $0x98] sm:$0xff] %v422
  %454 = vst [vmem:[%s4 + $0xa0] sm:$0xff] %v423
  %455 = vst [vmem:[%s4 + $0xa8] sm:$0xff] %v424
  %456 = vst [vmem:[%s4 + $0xb0] sm:$0xff] %v425
  %457 = vst [vmem:[%s4 + $0xb8] sm:$0xff] %v426
  %458 = vst [vmem:[%s4 + $0xc0] sm:$0xff] %v427
  %459 = vst [vmem:[%s4 + $0xc8] sm:$0xff] %v428
  %460 = vst [vmem:[%s4 + $0xd0] sm:$0xff] %v429
  %461 = vst [vmem:[%s4 + $0xd8] sm:$0xff] %v430
  %462 = vst [vmem:[%s4 + $0xe0] sm:$0xff] %v431
  %463 = vst [vmem:[%s4 + $0xe8] sm:$0xff] %v432
  %464 = vst [vmem:[%s4 + $0xf0] sm:$0xff] %v433
  // Predicated region
  $region18: #{auto_encoder_forward.6} parent=0 // pred_check
    _
  $region19: #{auto_encoder_forward.6} parent=0 // pred_check_branch
    %466 = sbr.rel (0) target = $region21
  $region20: #{auto_encoder_forward.6} parent=0 // pred_region
    _
  $region21: #{auto_encoder_forward.6} parent=0 // pred_fallthru
    _
  // Predicated region
  $region22: #{auto_encoder_forward.6} parent=0 // pred_check
    _
  $region23: #{auto_encoder_forward.6} parent=0 // pred_check_branch
    %468 = sbr.rel (0) target = $region25
  $region24: #{auto_encoder_forward.6} parent=0 // pred_region
    _
  $region25: #{auto_encoder_forward.6} parent=0 // pred_fallthru
    _

// kernel: auto_encoder_forward.7
$region0: #{auto_encoder_forward.7}
  #allocation0 [shape = 'u32[]', space=smem, size = 0x4, offset = 0x4, fixed_abs, tag = 'smem constant byte address 0x4 - core index']
  #allocation1 [shape = 'u32[144,128]{1,0:T(1,128)}', space=vmem, size = 0x12000, scoped, tag = 'internal scratch']
  #allocation2 [shape = 'f32[1]{0:T(128)S(6)}', space=smem, size = 0x200, scoped, tag = 'scoped memory for auto_encoder_forward.7']
  %s0 = inlined_call_operand.vmem [shape: f32[32,2048], index: 0, kind: input, shape index: {}]
  %s1 = inlined_call_operand.vmem [shape: f32[2048,128], index: 1, kind: input, shape index: {}]
  %s2 = inlined_call_operand.vmem [shape: f32[1,128], index: 2, kind: input, shape index: {}]
  %s3 = inlined_call_operand.<no memory space> [shape: f32[1], index: 3, kind: input, shape index: {}]
  %s4 = inlined_call_operand.vmem [shape: f32[32,128], index: 4, kind: output, shape index: {}]
  %s5 = sld [smem:[#allocation0]]
  $region26: #{auto_encoder_forward.7} parent=0
    _
  %s7 = ssub.s32 1, %s5
  %s8 = scalar_select 0, %s7, %s5
  %9 = sst [smem:[#allocation2]] %s3
  // Predicated region
  $region2: #{auto_encoder_forward.7} parent=0 // pred_check
    _
  $region3: #{auto_encoder_forward.7} parent=0 // pred_check_branch
    %11 = sbr.rel (0) target = $region5
  $region4: #{auto_encoder_forward.7} parent=0 // pred_region
    _
  $region5: #{auto_encoder_forward.7} parent=0 // pred_fallthru
    _
  // Predicated region
  $region6: #{auto_encoder_forward.7} parent=0 // pred_check
    _
  $region7: #{auto_encoder_forward.7} parent=0 // pred_check_branch
    %13 = sbr.rel (0) target = $region9
  $region8: #{auto_encoder_forward.7} parent=0 // pred_region
    _
  $region9: #{auto_encoder_forward.7} parent=0 // pred_fallthru
    _
  // Predicated region
  $region10: #{auto_encoder_forward.7} parent=0 // pred_check
    _
  $region11: #{auto_encoder_forward.7} parent=0 // pred_check_branch
    %15 = sbr.rel (0) target = $region13
  $region12: #{auto_encoder_forward.7} parent=0 // pred_region
    _
  $region13: #{auto_encoder_forward.7} parent=0 // pred_fallthru
    _
  // Predicated region
  $region14: #{auto_encoder_forward.7} parent=0 // pred_check
    _
  $region15: #{auto_encoder_forward.7} parent=0 // pred_check_branch
    %17 = sbr.rel (0) target = $region17
  $region16: #{auto_encoder_forward.7} parent=0 // pred_region
    _
  $region17: #{auto_encoder_forward.7} parent=0 // pred_fallthru
    _
  %v18 = vld [vmem:[%s0] sm:$0xff]
  %v19 = vld [vmem:[%s0 + $0x8] sm:$0xff]
  %v20 = vld [vmem:[%s0 + $0x10] sm:$0xff]
  %v21 = vld [vmem:[%s0 + $0x18] sm:$0xff]
  %v22 = vld [vmem:[%s0 + $0x20] sm:$0xff]
  %v23 = vld [vmem:[%s0 + $0x28] sm:$0xff]
  %v24 = vld [vmem:[%s0 + $0x30] sm:$0xff]
  %v25 = vld [vmem:[%s0 + $0x38] sm:$0xff]
  %v26 = vld [vmem:[%s0 + $0x40] sm:$0xff]
  %v27 = vld [vmem:[%s0 + $0x48] sm:$0xff]
  %v28 = vld [vmem:[%s0 + $0x50] sm:$0xff]
  %v29 = vld [vmem:[%s0 + $0x58] sm:$0xff]
  %v30 = vld [vmem:[%s0 + $0x60] sm:$0xff]
  %v31 = vld [vmem:[%s0 + $0x68] sm:$0xff]
  %v32 = vld [vmem:[%s0 + $0x70] sm:$0xff]
  %v33 = vld [vmem:[%s0 + $0x78] sm:$0xff]
  %v34 = vld [vmem:[%s0 + $0x80] sm:$0xff]
  %v35 = vld [vmem:[%s0 + $0x88] sm:$0xff]
  %v36 = vld [vmem:[%s0 + $0x90] sm:$0xff]
  %v37 = vld [vmem:[%s0 + $0x98] sm:$0xff]
  %v38 = vld [vmem:[%s0 + $0xa0] sm:$0xff]
  %v39 = vld [vmem:[%s0 + $0xa8] sm:$0xff]
  %v40 = vld [vmem:[%s0 + $0xb0] sm:$0xff]
  %v41 = vld [vmem:[%s0 + $0xb8] sm:$0xff]
  %v42 = vld [vmem:[%s0 + $0xc0] sm:$0xff]
  %v43 = vld [vmem:[%s0 + $0xc8] sm:$0xff]
  %v44 = vld [vmem:[%s0 + $0xd0] sm:$0xff]
  %v45 = vld [vmem:[%s0 + $0xd8] sm:$0xff]
  %v46 = vld [vmem:[%s0 + $0xe0] sm:$0xff]
  %v47 = vld [vmem:[%s0 + $0xe8] sm:$0xff]
  %v48 = vld [vmem:[%s0 + $0xf0] sm:$0xff]
  %v49 = vld [vmem:[%s0 + $0xf8] sm:$0xff]
  %v50 = vld [vmem:[%s0 + $0x100] sm:$0xff]
  %v51 = vld [vmem:[%s0 + $0x108] sm:$0xff]
  %v52 = vld [vmem:[%s0 + $0x110] sm:$0xff]
  %v53 = vld [vmem:[%s0 + $0x118] sm:$0xff]
  %v54 = vld [vmem:[%s0 + $0x120] sm:$0xff]
  %v55 = vld [vmem:[%s0 + $0x128] sm:$0xff]
  %v56 = vld [vmem:[%s0 + $0x130] sm:$0xff]
  %v57 = vld [vmem:[%s0 + $0x138] sm:$0xff]
  %v58 = vld [vmem:[%s0 + $0x140] sm:$0xff]
  %v59 = vld [vmem:[%s0 + $0x148] sm:$0xff]
  %v60 = vld [vmem:[%s0 + $0x150] sm:$0xff]
  %v61 = vld [vmem:[%s0 + $0x158] sm:$0xff]
  %v62 = vld [vmem:[%s0 + $0x160] sm:$0xff]
  %v63 = vld [vmem:[%s0 + $0x168] sm:$0xff]
  %v64 = vld [vmem:[%s0 + $0x170] sm:$0xff]
  %v65 = vld [vmem:[%s0 + $0x178] sm:$0xff]
  %v66 = vld [vmem:[%s0 + $0x180] sm:$0xff]
  %v67 = vld [vmem:[%s0 + $0x188] sm:$0xff]
  %v68 = vld [vmem:[%s0 + $0x190] sm:$0xff]
  %v69 = vld [vmem:[%s0 + $0x198] sm:$0xff]
  %v70 = vld [vmem:[%s0 + $0x1a0] sm:$0xff]
  %v71 = vld [vmem:[%s0 + $0x1a8] sm:$0xff]
  %v72 = vld [vmem:[%s0 + $0x1b0] sm:$0xff]
  %v73 = vld [vmem:[%s0 + $0x1b8] sm:$0xff]
  %v74 = vld [vmem:[%s0 + $0x1c0] sm:$0xff]
  %v75 = vld [vmem:[%s0 + $0x1c8] sm:$0xff]
  %v76 = vld [vmem:[%s0 + $0x1d0] sm:$0xff]
  %v77 = vld [vmem:[%s0 + $0x1d8] sm:$0xff]
  %v78 = vld [vmem:[%s0 + $0x1e0] sm:$0xff]
  %v79 = vld [vmem:[%s0 + $0x1e8] sm:$0xff]
  %v80 = vld [vmem:[%s0 + $0x1f0] sm:$0xff]
  %v81 = vld [vmem:[%s0 + $0x1f8] sm:$0xff]
  %v82 = vld [vmem:[%s1] sm:$0xff]
  %v83 = vld [vmem:[%s1 + $0x8] sm:$0xff]
  %v84 = vld [vmem:[%s1 + $0x10] sm:$0xff]
  %v85 = vld [vmem:[%s1 + $0x18] sm:$0xff]
  %v86 = vld [vmem:[%s1 + $0x20] sm:$0xff]
  %v87 = vld [vmem:[%s1 + $0x28] sm:$0xff]
  %v88 = vld [vmem:[%s1 + $0x30] sm:$0xff]
  %v89 = vld [vmem:[%s1 + $0x38] sm:$0xff]
  %v90 = vld [vmem:[%s1 + $0x40] sm:$0xff]
  %v91 = vld [vmem:[%s1 + $0x48] sm:$0xff]
  %v92 = vld [vmem:[%s1 + $0x50] sm:$0xff]
  %v93 = vld [vmem:[%s1 + $0x58] sm:$0xff]
  %v94 = vld [vmem:[%s1 + $0x60] sm:$0xff]
  %v95 = vld [vmem:[%s1 + $0x68] sm:$0xff]
  %v96 = vld [vmem:[%s1 + $0x70] sm:$0xff]
  %v97 = vld [vmem:[%s1 + $0x78] sm:$0xff]
  %v98 = vld [vmem:[%s1 + $0x80] sm:$0xff]
  %v99 = vld [vmem:[%s1 + $0x88] sm:$0xff]
  %v100 = vld [vmem:[%s1 + $0x90] sm:$0xff]
  %v101 = vld [vmem:[%s1 + $0x98] sm:$0xff]
  %v102 = vld [vmem:[%s1 + $0xa0] sm:$0xff]
  %v103 = vld [vmem:[%s1 + $0xa8] sm:$0xff]
  %v104 = vld [vmem:[%s1 + $0xb0] sm:$0xff]
  %v105 = vld [vmem:[%s1 + $0xb8] sm:$0xff]
  %v106 = vld [vmem:[%s1 + $0xc0] sm:$0xff]
  %v107 = vld [vmem:[%s1 + $0xc8] sm:$0xff]
  %v108 = vld [vmem:[%s1 + $0xd0] sm:$0xff]
  %v109 = vld [vmem:[%s1 + $0xd8] sm:$0xff]
  %v110 = vld [vmem:[%s1 + $0xe0] sm:$0xff]
  %v111 = vld [vmem:[%s1 + $0xe8] sm:$0xff]
  %v112 = vld [vmem:[%s1 + $0xf0] sm:$0xff]
  %v113 = vld [vmem:[%s1 + $0xf8] sm:$0xff]
  %v114 = vld [vmem:[%s1 + $0x100] sm:$0xff]
  %v115 = vld [vmem:[%s1 + $0x108] sm:$0xff]
  %v116 = vld [vmem:[%s1 + $0x110] sm:$0xff]
  %v117 = vld [vmem:[%s1 + $0x118] sm:$0xff]
  %v118 = vld [vmem:[%s1 + $0x120] sm:$0xff]
  %v119 = vld [vmem:[%s1 + $0x128] sm:$0xff]
  %v120 = vld [vmem:[%s1 + $0x130] sm:$0xff]
  %v121 = vld [vmem:[%s1 + $0x138] sm:$0xff]
  %v122 = vld [vmem:[%s1 + $0x140] sm:$0xff]
  %v123 = vld [vmem:[%s1 + $0x148] sm:$0xff]
  %v124 = vld [vmem:[%s1 + $0x150] sm:$0xff]
  %v125 = vld [vmem:[%s1 + $0x158] sm:$0xff]
  %v126 = vld [vmem:[%s1 + $0x160] sm:$0xff]
  %v127 = vld [vmem:[%s1 + $0x168] sm:$0xff]
  %v128 = vld [vmem:[%s1 + $0x170] sm:$0xff]
  %v129 = vld [vmem:[%s1 + $0x178] sm:$0xff]
  %v130 = vld [vmem:[%s1 + $0x180] sm:$0xff]
  %v131 = vld [vmem:[%s1 + $0x188] sm:$0xff]
  %v132 = vld [vmem:[%s1 + $0x190] sm:$0xff]
  %v133 = vld [vmem:[%s1 + $0x198] sm:$0xff]
  %v134 = vld [vmem:[%s1 + $0x1a0] sm:$0xff]
  %v135 = vld [vmem:[%s1 + $0x1a8] sm:$0xff]
  %v136 = vld [vmem:[%s1 + $0x1b0] sm:$0xff]
  %v137 = vld [vmem:[%s1 + $0x1b8] sm:$0xff]
  %v138 = vld [vmem:[%s1 + $0x1c0] sm:$0xff]
  %v139 = vld [vmem:[%s1 + $0x1c8] sm:$0xff]
  %v140 = vld [vmem:[%s1 + $0x1d0] sm:$0xff]
  %v141 = vld [vmem:[%s1 + $0x1d8] sm:$0xff]
  %v142 = vld [vmem:[%s1 + $0x1e0] sm:$0xff]
  %v143 = vld [vmem:[%s1 + $0x1e8] sm:$0xff]
  %v144 = vld [vmem:[%s1 + $0x1f0] sm:$0xff]
  %v145 = vld [vmem:[%s1 + $0x1f8] sm:$0xff]
  %v146 = vld [vmem:[%s1 + $0x200] sm:$0xff]
  %v147 = vld [vmem:[%s1 + $0x208] sm:$0xff]
  %v148 = vld [vmem:[%s1 + $0x210] sm:$0xff]
  %v149 = vld [vmem:[%s1 + $0x218] sm:$0xff]
  %v150 = vld [vmem:[%s1 + $0x220] sm:$0xff]
  %v151 = vld [vmem:[%s1 + $0x228] sm:$0xff]
  %v152 = vld [vmem:[%s1 + $0x230] sm:$0xff]
  %v153 = vld [vmem:[%s1 + $0x238] sm:$0xff]
  %v154 = vld [vmem:[%s1 + $0x240] sm:$0xff]
  %v155 = vld [vmem:[%s1 + $0x248] sm:$0xff]
  %v156 = vld [vmem:[%s1 + $0x250] sm:$0xff]
  %v157 = vld [vmem:[%s1 + $0x258] sm:$0xff]
  %v158 = vld [vmem:[%s1 + $0x260] sm:$0xff]
  %v159 = vld [vmem:[%s1 + $0x268] sm:$0xff]
  %v160 = vld [vmem:[%s1 + $0x270] sm:$0xff]
  %v161 = vld [vmem:[%s1 + $0x278] sm:$0xff]
  %v162 = vld [vmem:[%s1 + $0x280] sm:$0xff]
  %v163 = vld [vmem:[%s1 + $0x288] sm:$0xff]
  %v164 = vld [vmem:[%s1 + $0x290] sm:$0xff]
  %v165 = vld [vmem:[%s1 + $0x298] sm:$0xff]
  %v166 = vld [vmem:[%s1 + $0x2a0] sm:$0xff]
  %v167 = vld [vmem:[%s1 + $0x2a8] sm:$0xff]
  %v168 = vld [vmem:[%s1 + $0x2b0] sm:$0xff]
  %v169 = vld [vmem:[%s1 + $0x2b8] sm:$0xff]
  %v170 = vld [vmem:[%s1 + $0x2c0] sm:$0xff]
  %v171 = vld [vmem:[%s1 + $0x2c8] sm:$0xff]
  %v172 = vld [vmem:[%s1 + $0x2d0] sm:$0xff]
  %v173 = vld [vmem:[%s1 + $0x2d8] sm:$0xff]
  %v174 = vld [vmem:[%s1 + $0x2e0] sm:$0xff]
  %v175 = vld [vmem:[%s1 + $0x2e8] sm:$0xff]
  %v176 = vld [vmem:[%s1 + $0x2f0] sm:$0xff]
  %v177 = vld [vmem:[%s1 + $0x2f8] sm:$0xff]
  %v178 = vld [vmem:[%s1 + $0x300] sm:$0xff]
  %v179 = vld [vmem:[%s1 + $0x308] sm:$0xff]
  %v180 = vld [vmem:[%s1 + $0x310] sm:$0xff]
  %v181 = vld [vmem:[%s1 + $0x318] sm:$0xff]
  %v182 = vld [vmem:[%s1 + $0x320] sm:$0xff]
  %v183 = vld [vmem:[%s1 + $0x328] sm:$0xff]
  %v184 = vld [vmem:[%s1 + $0x330] sm:$0xff]
  %v185 = vld [vmem:[%s1 + $0x338] sm:$0xff]
  %v186 = vld [vmem:[%s1 + $0x340] sm:$0xff]
  %v187 = vld [vmem:[%s1 + $0x348] sm:$0xff]
  %v188 = vld [vmem:[%s1 + $0x350] sm:$0xff]
  %v189 = vld [vmem:[%s1 + $0x358] sm:$0xff]
  %v190 = vld [vmem:[%s1 + $0x360] sm:$0xff]
  %v191 = vld [vmem:[%s1 + $0x368] sm:$0xff]
  %v192 = vld [vmem:[%s1 + $0x370] sm:$0xff]
  %v193 = vld [vmem:[%s1 + $0x378] sm:$0xff]
  %v194 = vld [vmem:[%s1 + $0x380] sm:$0xff]
  %v195 = vld [vmem:[%s1 + $0x388] sm:$0xff]
  %v196 = vld [vmem:[%s1 + $0x390] sm:$0xff]
  %v197 = vld [vmem:[%s1 + $0x398] sm:$0xff]
  %v198 = vld [vmem:[%s1 + $0x3a0] sm:$0xff]
  %v199 = vld [vmem:[%s1 + $0x3a8] sm:$0xff]
  %v200 = vld [vmem:[%s1 + $0x3b0] sm:$0xff]
  %v201 = vld [vmem:[%s1 + $0x3b8] sm:$0xff]
  %v202 = vld [vmem:[%s1 + $0x3c0] sm:$0xff]
  %v203 = vld [vmem:[%s1 + $0x3c8] sm:$0xff]
  %v204 = vld [vmem:[%s1 + $0x3d0] sm:$0xff]
  %v205 = vld [vmem:[%s1 + $0x3d8] sm:$0xff]
  %v206 = vld [vmem:[%s1 + $0x3e0] sm:$0xff]
  %v207 = vld [vmem:[%s1 + $0x3e8] sm:$0xff]
  %v208 = vld [vmem:[%s1 + $0x3f0] sm:$0xff]
  %v209 = vld [vmem:[%s1 + $0x3f8] sm:$0xff]
  %v210 = vld [vmem:[%s1 + $0x400] sm:$0xff]
  %v211 = vld [vmem:[%s1 + $0x408] sm:$0xff]
  %v212 = vld [vmem:[%s1 + $0x410] sm:$0xff]
  %v213 = vld [vmem:[%s1 + $0x418] sm:$0xff]
  %v214 = vld [vmem:[%s1 + $0x420] sm:$0xff]
  %v215 = vld [vmem:[%s1 + $0x428] sm:$0xff]
  %v216 = vld [vmem:[%s1 + $0x430] sm:$0xff]
  %v217 = vld [vmem:[%s1 + $0x438] sm:$0xff]
  %v218 = vld [vmem:[%s1 + $0x440] sm:$0xff]
  %v219 = vld [vmem:[%s1 + $0x448] sm:$0xff]
  %v220 = vld [vmem:[%s1 + $0x450] sm:$0xff]
  %v221 = vld [vmem:[%s1 + $0x458] sm:$0xff]
  %v222 = vld [vmem:[%s1 + $0x460] sm:$0xff]
  %v223 = vld [vmem:[%s1 + $0x468] sm:$0xff]
  %v224 = vld [vmem:[%s1 + $0x470] sm:$0xff]
  %v225 = vld [vmem:[%s1 + $0x478] sm:$0xff]
  %v226 = vld [vmem:[%s1 + $0x480] sm:$0xff]
  %v227 = vld [vmem:[%s1 + $0x488] sm:$0xff]
  %v228 = vld [vmem:[%s1 + $0x490] sm:$0xff]
  %v229 = vld [vmem:[%s1 + $0x498] sm:$0xff]
  %v230 = vld [vmem:[%s1 + $0x4a0] sm:$0xff]
  %v231 = vld [vmem:[%s1 + $0x4a8] sm:$0xff]
  %v232 = vld [vmem:[%s1 + $0x4b0] sm:$0xff]
  %v233 = vld [vmem:[%s1 + $0x4b8] sm:$0xff]
  %v234 = vld [vmem:[%s1 + $0x4c0] sm:$0xff]
  %v235 = vld [vmem:[%s1 + $0x4c8] sm:$0xff]
  %v236 = vld [vmem:[%s1 + $0x4d0] sm:$0xff]
  %v237 = vld [vmem:[%s1 + $0x4d8] sm:$0xff]
  %v238 = vld [vmem:[%s1 + $0x4e0] sm:$0xff]
  %v239 = vld [vmem:[%s1 + $0x4e8] sm:$0xff]
  %v240 = vld [vmem:[%s1 + $0x4f0] sm:$0xff]
  %v241 = vld [vmem:[%s1 + $0x4f8] sm:$0xff]
  %v242 = vld [vmem:[%s1 + $0x500] sm:$0xff]
  %v243 = vld [vmem:[%s1 + $0x508] sm:$0xff]
  %v244 = vld [vmem:[%s1 + $0x510] sm:$0xff]
  %v245 = vld [vmem:[%s1 + $0x518] sm:$0xff]
  %v246 = vld [vmem:[%s1 + $0x520] sm:$0xff]
  %v247 = vld [vmem:[%s1 + $0x528] sm:$0xff]
  %v248 = vld [vmem:[%s1 + $0x530] sm:$0xff]
  %v249 = vld [vmem:[%s1 + $0x538] sm:$0xff]
  %v250 = vld [vmem:[%s1 + $0x540] sm:$0xff]
  %v251 = vld [vmem:[%s1 + $0x548] sm:$0xff]
  %v252 = vld [vmem:[%s1 + $0x550] sm:$0xff]
  %v253 = vld [vmem:[%s1 + $0x558] sm:$0xff]
  %v254 = vld [vmem:[%s1 + $0x560] sm:$0xff]
  %v255 = vld [vmem:[%s1 + $0x568] sm:$0xff]
  %v256 = vld [vmem:[%s1 + $0x570] sm:$0xff]
  %v257 = vld [vmem:[%s1 + $0x578] sm:$0xff]
  %v258 = vld [vmem:[%s1 + $0x580] sm:$0xff]
  %v259 = vld [vmem:[%s1 + $0x588] sm:$0xff]
  %v260 = vld [vmem:[%s1 + $0x590] sm:$0xff]
  %v261 = vld [vmem:[%s1 + $0x598] sm:$0xff]
  %v262 = vld [vmem:[%s1 + $0x5a0] sm:$0xff]
  %v263 = vld [vmem:[%s1 + $0x5a8] sm:$0xff]
  %v264 = vld [vmem:[%s1 + $0x5b0] sm:$0xff]
  %v265 = vld [vmem:[%s1 + $0x5b8] sm:$0xff]
  %v266 = vld [vmem:[%s1 + $0x5c0] sm:$0xff]
  %v267 = vld [vmem:[%s1 + $0x5c8] sm:$0xff]
  %v268 = vld [vmem:[%s1 + $0x5d0] sm:$0xff]
  %v269 = vld [vmem:[%s1 + $0x5d8] sm:$0xff]
  %v270 = vld [vmem:[%s1 + $0x5e0] sm:$0xff]
  %v271 = vld [vmem:[%s1 + $0x5e8] sm:$0xff]
  %v272 = vld [vmem:[%s1 + $0x5f0] sm:$0xff]
  %v273 = vld [vmem:[%s1 + $0x5f8] sm:$0xff]
  %v274 = vld [vmem:[%s1 + $0x600] sm:$0xff]
  %v275 = vld [vmem:[%s1 + $0x608] sm:$0xff]
  %v276 = vld [vmem:[%s1 + $0x610] sm:$0xff]
  %v277 = vld [vmem:[%s1 + $0x618] sm:$0xff]
  %v278 = vld [vmem:[%s1 + $0x620] sm:$0xff]
  %v279 = vld [vmem:[%s1 + $0x628] sm:$0xff]
  %v280 = vld [vmem:[%s1 + $0x630] sm:$0xff]
  %v281 = vld [vmem:[%s1 + $0x638] sm:$0xff]
  %v282 = vld [vmem:[%s1 + $0x640] sm:$0xff]
  %v283 = vld [vmem:[%s1 + $0x648] sm:$0xff]
  %v284 = vld [vmem:[%s1 + $0x650] sm:$0xff]
  %v285 = vld [vmem:[%s1 + $0x658] sm:$0xff]
  %v286 = vld [vmem:[%s1 + $0x660] sm:$0xff]
  %v287 = vld [vmem:[%s1 + $0x668] sm:$0xff]
  %v288 = vld [vmem:[%s1 + $0x670] sm:$0xff]
  %v289 = vld [vmem:[%s1 + $0x678] sm:$0xff]
  %v290 = vld [vmem:[%s1 + $0x680] sm:$0xff]
  %v291 = vld [vmem:[%s1 + $0x688] sm:$0xff]
  %v292 = vld [vmem:[%s1 + $0x690] sm:$0xff]
  %v293 = vld [vmem:[%s1 + $0x698] sm:$0xff]
  %v294 = vld [vmem:[%s1 + $0x6a0] sm:$0xff]
  %v295 = vld [vmem:[%s1 + $0x6a8] sm:$0xff]
  %v296 = vld [vmem:[%s1 + $0x6b0] sm:$0xff]
  %v297 = vld [vmem:[%s1 + $0x6b8] sm:$0xff]
  %v298 = vld [vmem:[%s1 + $0x6c0] sm:$0xff]
  %v299 = vld [vmem:[%s1 + $0x6c8] sm:$0xff]
  %v300 = vld [vmem:[%s1 + $0x6d0] sm:$0xff]
  %v301 = vld [vmem:[%s1 + $0x6d8] sm:$0xff]
  %v302 = vld [vmem:[%s1 + $0x6e0] sm:$0xff]
  %v303 = vld [vmem:[%s1 + $0x6e8] sm:$0xff]
  %v304 = vld [vmem:[%s1 + $0x6f0] sm:$0xff]
  %v305 = vld [vmem:[%s1 + $0x6f8] sm:$0xff]
  %v306 = vld [vmem:[%s1 + $0x700] sm:$0xff]
  %v307 = vld [vmem:[%s1 + $0x708] sm:$0xff]
  %v308 = vld [vmem:[%s1 + $0x710] sm:$0xff]
  %v309 = vld [vmem:[%s1 + $0x718] sm:$0xff]
  %v310 = vld [vmem:[%s1 + $0x720] sm:$0xff]
  %v311 = vld [vmem:[%s1 + $0x728] sm:$0xff]
  %v312 = vld [vmem:[%s1 + $0x730] sm:$0xff]
  %v313 = vld [vmem:[%s1 + $0x738] sm:$0xff]
  %v314 = vld [vmem:[%s1 + $0x740] sm:$0xff]
  %v315 = vld [vmem:[%s1 + $0x748] sm:$0xff]
  %v316 = vld [vmem:[%s1 + $0x750] sm:$0xff]
  %v317 = vld [vmem:[%s1 + $0x758] sm:$0xff]
  %v318 = vld [vmem:[%s1 + $0x760] sm:$0xff]
  %v319 = vld [vmem:[%s1 + $0x768] sm:$0xff]
  %v320 = vld [vmem:[%s1 + $0x770] sm:$0xff]
  %v321 = vld [vmem:[%s1 + $0x778] sm:$0xff]
  %v322 = vld [vmem:[%s1 + $0x780] sm:$0xff]
  %v323 = vld [vmem:[%s1 + $0x788] sm:$0xff]
  %v324 = vld [vmem:[%s1 + $0x790] sm:$0xff]
  %v325 = vld [vmem:[%s1 + $0x798] sm:$0xff]
  %v326 = vld [vmem:[%s1 + $0x7a0] sm:$0xff]
  %v327 = vld [vmem:[%s1 + $0x7a8] sm:$0xff]
  %v328 = vld [vmem:[%s1 + $0x7b0] sm:$0xff]
  %v329 = vld [vmem:[%s1 + $0x7b8] sm:$0xff]
  %v330 = vld [vmem:[%s1 + $0x7c0] sm:$0xff]
  %v331 = vld [vmem:[%s1 + $0x7c8] sm:$0xff]
  %v332 = vld [vmem:[%s1 + $0x7d0] sm:$0xff]
  %v333 = vld [vmem:[%s1 + $0x7d8] sm:$0xff]
  %v334 = vld [vmem:[%s1 + $0x7e0] sm:$0xff]
  %v335 = vld [vmem:[%s1 + $0x7e8] sm:$0xff]
  %v336 = vld [vmem:[%s1 + $0x7f0] sm:$0xff]
  %v337 = vld [vmem:[%s1 + $0x7f8] sm:$0xff]
  %v338 = vld [vmem:[%s2] sm:$0x1]
  %v340 = vlaneseq
  %v341 = vshrl.u32 %v340, 7
  %v342 = vsub.s32 0, %v341
  %v343 = vrot.slane %v338, %v342
  %345 = vmatprep.subr.mxu0 0.0
  %346 = vmatpush1.msra.mxu0 %v82
  %347 = vmatprep.subr.mxu0 0.0
  %348 = vmatpush1.msra.mxu0 %v83
  %349 = vmatprep.subr.mxu0 0.0
  %350 = vmatpush1.msra.mxu0 %v84
  %351 = vmatprep.subr.mxu0 0.0
  %352 = vmatpush1.msra.mxu0 %v85
  %353 = vmatprep.subr.mxu0 0.0
  %354 = vmatpush1.msra.mxu0 %v86
  %355 = vmatprep.subr.mxu0 0.0
  %356 = vmatpush1.msra.mxu0 %v87
  %357 = vmatprep.subr.mxu0 0.0
  %358 = vmatpush1.msra.mxu0 %v88
  %359 = vmatprep.subr.mxu0 0.0
  %360 = vmatpush1.msra.mxu0 %v89
  %361 = vmatprep.subr.mxu0 0.0
  %362 = vmatpush1.msra.mxu0 %v90
  %363 = vmatprep.subr.mxu0 0.0
  %364 = vmatpush1.msra.mxu0 %v91
  %365 = vmatprep.subr.mxu0 0.0
  %366 = vmatpush1.msra.mxu0 %v92
  %367 = vmatprep.subr.mxu0 0.0
  %368 = vmatpush1.msra.mxu0 %v93
  %369 = vmatprep.subr.mxu0 0.0
  %370 = vmatpush1.msra.mxu0 %v94
  %371 = vmatprep.subr.mxu0 0.0
  %372 = vmatpush1.msra.mxu0 %v95
  %373 = vmatprep.subr.mxu0 0.0
  %374 = vmatpush1.msra.mxu0 %v96
  %375 = vmatprep.subr.mxu0 0.0
  %376 = vmatpush1.msra.mxu0 %v97
  %377 = vmatprep.subr.mxu0 0.0
  %378 = vmatpush1.msra.mxu0 %v98
  %379 = vmatprep.subr.mxu0 0.0
  %380 = vmatpush1.msra.mxu0 %v99
  %381 = vmatprep.subr.mxu0 0.0
  %382 = vmatpush1.msra.mxu0 %v100
  %383 = vmatprep.subr.mxu0 0.0
  %384 = vmatpush1.msra.mxu0 %v101
  %385 = vmatprep.subr.mxu0 0.0
  %386 = vmatpush1.msra.mxu0 %v102
  %387 = vmatprep.subr.mxu0 0.0
  %388 = vmatpush1.msra.mxu0 %v103
  %389 = vmatprep.subr.mxu0 0.0
  %390 = vmatpush1.msra.mxu0 %v104
  %391 = vmatprep.subr.mxu0 0.0
  %392 = vmatpush1.msra.mxu0 %v105
  %393 = vmatprep.subr.mxu0 0.0
  %394 = vmatpush1.msra.mxu0 %v106
  %395 = vmatprep.subr.mxu0 0.0
  %396 = vmatpush1.msra.mxu0 %v107
  %397 = vmatprep.subr.mxu0 0.0
  %398 = vmatpush1.msra.mxu0 %v108
  %399 = vmatprep.subr.mxu0 0.0
  %400 = vmatpush1.msra.mxu0 %v109
  %401 = vmatprep.subr.mxu0 0.0
  %402 = vmatpush1.msra.mxu0 %v110
  %403 = vmatprep.subr.mxu0 0.0
  %404 = vmatpush1.msra.mxu0 %v111
  %405 = vmatprep.subr.mxu0 0.0
  %406 = vmatpush1.msra.mxu0 %v112
  %407 = vmatprep.subr.mxu0 0.0
  %408 = vmatpush1.msra.mxu0 %v113
  %409 = vmatprep.mubr.f32.mxu0 %v19
  %410 = vmatmul.mubr.f32.gmra.mrb[0].mxu0 %v18
  %v411 = vpop.f32.mrb[0].mxu0
  %v412 = vadd.f32 %v343, %v411
  %v413 = vpop.f32.mrb[0].mxu0
  %414 = vmatprep.mubr.f32.mxu0 %v35
  %415 = vmatmul.mubr.f32.gmra.mrb[0].mxu0 %v34
  %v416 = vpop.f32.mrb[0].mxu0
  %v417 = vadd.f32 %v343, %v416
  %v418 = vpop.f32.mrb[0].mxu0
  %419 = vmatprep.mubr.f32.mxu0 %v51
  %420 = vmatmul.mubr.f32.gmra.mrb[0].mxu0 %v50
  %v421 = vpop.f32.mrb[0].mxu0
  %v422 = vadd.f32 %v343, %v421
  %v423 = vpop.f32.mrb[0].mxu0
  %424 = vmatprep.mubr.f32.mxu0 %v67
  %425 = vmatmul.mubr.f32.gmra.mrb[0].mxu0 %v66
  %v426 = vpop.f32.mrb[0].mxu0
  %v427 = vadd.f32 %v343, %v426
  %v428 = vpop.f32.mrb[0].mxu0
  %429 = vdwg.mxu0
  %430 = vmatprep.subr.mxu0 0.0
  %431 = vmatpush1.msra.mxu0 %v114
  %432 = vmatprep.subr.mxu0 0.0
  %433 = vmatpush1.msra.mxu0 %v115
  %434 = vmatprep.subr.mxu0 0.0
  %435 = vmatpush1.msra.mxu0 %v116
  %436 = vmatprep.subr.mxu0 0.0
  %437 = vmatpush1.msra.mxu0 %v117
  %438 = vmatprep.subr.mxu0 0.0
  %439 = vmatpush1.msra.mxu0 %v118
  %440 = vmatprep.subr.mxu0 0.0
  %441 = vmatpush1.msra.mxu0 %v119
  %442 = vmatprep.subr.mxu0 0.0
  %443 = vmatpush1.msra.mxu0 %v120
  %444 = vmatprep.subr.mxu0 0.0
  %445 = vmatpush1.msra.mxu0 %v121
  %446 = vmatprep.subr.mxu0 0.0
  %447 = vmatpush1.msra.mxu0 %v122
  %448 = vmatprep.subr.mxu0 0.0
  %449 = vmatpush1.msra.mxu0 %v123
  %450 = vmatprep.subr.mxu0 0.0
  %451 = vmatpush1.msra.mxu0 %v124
  %452 = vmatprep.subr.mxu0 0.0
  %453 = vmatpush1.msra.mxu0 %v125
  %454 = vmatprep.subr.mxu0 0.0
  %455 = vmatpush1.msra.mxu0 %v126
  %456 = vmatprep.subr.mxu0 0.0
  %457 = vmatpush1.msra.mxu0 %v127
  %458 = vmatprep.subr.mxu0 0.0
  %459 = vmatpush1.msra.mxu0 %v128
  %460 = vmatprep.subr.mxu0 0.0
  %461 = vmatpush1.msra.mxu0 %v129
  %462 = vmatprep.subr.mxu0 0.0
  %463 = vmatpush1.msra.mxu0 %v130
  %464 = vmatprep.subr.mxu0 0.0
  %465 = vmatpush1.msra.mxu0 %v131
  %466 = vmatprep.subr.mxu0 0.0
  %467 = vmatpush1.msra.mxu0 %v132
  %468 = vmatprep.subr.mxu0 0.0
  %469 = vmatpush1.msra.mxu0 %v133
  %470 = vmatprep.subr.mxu0 0.0
  %471 = vmatpush1.msra.mxu0 %v134
  %472 = vmatprep.subr.mxu0 0.0
  %473 = vmatpush1.msra.mxu0 %v135
  %474 = vmatprep.subr.mxu0 0.0
  %475 = vmatpush1.msra.mxu0 %v136
  %476 = vmatprep.subr.mxu0 0.0
  %477 = vmatpush1.msra.mxu0 %v137
  %478 = vmatprep.subr.mxu0 0.0
  %479 = vmatpush1.msra.mxu0 %v138
  %480 = vmatprep.subr.mxu0 0.0
  %481 = vmatpush1.msra.mxu0 %v139
  %482 = vmatprep.subr.mxu0 0.0
  %483 = vmatpush1.msra.mxu0 %v140
  %484 = vmatprep.subr.mxu0 0.0
  %485 = vmatpush1.msra.mxu0 %v141
  %486 = vmatprep.subr.mxu0 0.0
  %487 = vmatpush1.msra.mxu0 %v142
  %488 = vmatprep.subr.mxu0 0.0
  %489 = vmatpush1.msra.mxu0 %v143
  %490 = vmatprep.subr.mxu0 0.0
  %491 = vmatpush1.msra.mxu0 %v144
  %492 = vmatprep.subr.mxu0 0.0
  %493 = vmatpush1.msra.mxu0 %v145
  %494 = vmatprep.mubr.f32.mxu0 %v21
  %495 = vmatmul.mubr.f32.gmra.mrb[0].mxu0 %v20
  %v496 = vpop.f32.mrb[0].mxu0
  %v497 = vadd.f32 %v412, %v496
  %v498 = vpop.f32.mrb[0].mxu0
  %499 = vmatprep.mubr.f32.mxu0 %v37
  %500 = vmatmul.mubr.f32.gmra.mrb[0].mxu0 %v36
  %v501 = vpop.f32.mrb[0].mxu0
  %v502 = vadd.f32 %v417, %v501
  %v503 = vpop.f32.mrb[0].mxu0
  %504 = vmatprep.mubr.f32.mxu0 %v53
  %505 = vmatmul.mubr.f32.gmra.mrb[0].mxu0 %v52
  %v506 = vpop.f32.mrb[0].mxu0
  %v507 = vadd.f32 %v422, %v506
  %v508 = vpop.f32.mrb[0].mxu0
  %509 = vmatprep.mubr.f32.mxu0 %v69
  %510 = vmatmul.mubr.f32.gmra.mrb[0].mxu0 %v68
  %v511 = vpop.f32.mrb[0].mxu0
  %v512 = vadd.f32 %v427, %v511
  %v513 = vpop.f32.mrb[0].mxu0
  %514 = vdwg.mxu0
  %515 = vmatprep.subr.mxu0 0.0
  %516 = vmatpush1.msra.mxu0 %v146
  %517 = vmatprep.subr.mxu0 0.0
  %518 = vmatpush1.msra.mxu0 %v147
  %519 = vmatprep.subr.mxu0 0.0
  %520 = vmatpush1.msra.mxu0 %v148
  %521 = vmatprep.subr.mxu0 0.0
  %522 = vmatpush1.msra.mxu0 %v149
  %523 = vmatprep.subr.mxu0 0.0
  %524 = vmatpush1.msra.mxu0 %v150
  %525 = vmatprep.subr.mxu0 0.0
  %526 = vmatpush1.msra.mxu0 %v151
  %527 = vmatprep.subr.mxu0 0.0
  %528 = vmatpush1.msra.mxu0 %v152
  %529 = vmatprep.subr.mxu0 0.0
  %530 = vmatpush1.msra.mxu0 %v153
  %531 = vmatprep.subr.mxu0 0.0
  %532 = vmatpush1.msra.mxu0 %v154
  %533 = vmatprep.subr.mxu0 0.0
  %534 = vmatpush1.msra.mxu0 %v155
  %535 = vmatprep.subr.mxu0 0.0
  %536 = vmatpush1.msra.mxu0 %v156
  %537 = vmatprep.subr.mxu0 0.0
  %538 = vmatpush1.msra.mxu0 %v157
  %539 = vmatprep.subr.mxu0 0.0
  %540 = vmatpush1.msra.mxu0 %v158
  %541 = vmatprep.subr.mxu0 0.0
  %542 = vmatpush1.msra.mxu0 %v159
  %543 = vmatprep.subr.mxu0 0.0
  %544 = vmatpush1.msra.mxu0 %v160
  %545 = vmatprep.subr.mxu0 0.0
  %546 = vmatpush1.msra.mxu0 %v161
  %547 = vmatprep.subr.mxu0 0.0
  %548 = vmatpush1.msra.mxu0 %v162
  %549 = vmatprep.subr.mxu0 0.0
  %550 = vmatpush1.msra.mxu0 %v163
  %551 = vmatprep.subr.mxu0 0.0
  %552 = vmatpush1.msra.mxu0 %v164
  %553 = vmatprep.subr.mxu0 0.0
  %554 = vmatpush1.msra.mxu0 %v165
  %555 = vmatprep.subr.mxu0 0.0
  %556 = vmatpush1.msra.mxu0 %v166
  %557 = vmatprep.subr.mxu0 0.0
  %558 = vmatpush1.msra.mxu0 %v167
  %559 = vmatprep.subr.mxu0 0.0
  %560 = vmatpush1.msra.mxu0 %v168
  %561 = vmatprep.subr.mxu0 0.0
  %562 = vmatpush1.msra.mxu0 %v169
  %563 = vmatprep.subr.mxu0 0.0
  %564 = vmatpush1.msra.mxu0 %v170
  %565 = vmatprep.subr.mxu0 0.0
  %566 = vmatpush1.msra.mxu0 %v171
  %567 = vmatprep.subr.mxu0 0.0
  %568 = vmatpush1.msra.mxu0 %v172
  %569 = vmatprep.subr.mxu0 0.0
  %570 = vmatpush1.msra.mxu0 %v173
  %571 = vmatprep.subr.mxu0 0.0
  %572 = vmatpush1.msra.mxu0 %v174
  %573 = vmatprep.subr.mxu0 0.0
  %574 = vmatpush1.msra.mxu0 %v175
  %575 = vmatprep.subr.mxu0 0.0
  %576 = vmatpush1.msra.mxu0 %v176
  %577 = vmatprep.subr.mxu0 0.0
  %578 = vmatpush1.msra.mxu0 %v177
  %579 = vmatprep.mubr.f32.mxu0 %v23
  %580 = vmatmul.mubr.f32.gmra.mrb[0].mxu0 %v22
  %v581 = vpop.f32.mrb[0].mxu0
  %v582 = vadd.f32 %v497, %v581
  %v583 = vpop.f32.mrb[0].mxu0
  %584 = vmatprep.mubr.f32.mxu0 %v39
  %585 = vmatmul.mubr.f32.gmra.mrb[0].mxu0 %v38
  %v586 = vpop.f32.mrb[0].mxu0
  %v587 = vadd.f32 %v502, %v586
  %v588 = vpop.f32.mrb[0].mxu0
  %589 = vmatprep.mubr.f32.mxu0 %v55
  %590 = vmatmul.mubr.f32.gmra.mrb[0].mxu0 %v54
  %v591 = vpop.f32.mrb[0].mxu0
  %v592 = vadd.f32 %v507, %v591
  %v593 = vpop.f32.mrb[0].mxu0
  %594 = vmatprep.mubr.f32.mxu0 %v71
  %595 = vmatmul.mubr.f32.gmra.mrb[0].mxu0 %v70
  %v596 = vpop.f32.mrb[0].mxu0
  %v597 = vadd.f32 %v512, %v596
  %v598 = vpop.f32.mrb[0].mxu0
  %599 = vdwg.mxu0
  %600 = vmatprep.subr.mxu0 0.0
  %601 = vmatpush1.msra.mxu0 %v178
  %602 = vmatprep.subr.mxu0 0.0
  %603 = vmatpush1.msra.mxu0 %v179
  %604 = vmatprep.subr.mxu0 0.0
  %605 = vmatpush1.msra.mxu0 %v180
  %606 = vmatprep.subr.mxu0 0.0
  %607 = vmatpush1.msra.mxu0 %v181
  %608 = vmatprep.subr.mxu0 0.0
  %609 = vmatpush1.msra.mxu0 %v182
  %610 = vmatprep.subr.mxu0 0.0
  %611 = vmatpush1.msra.mxu0 %v183
  %612 = vmatprep.subr.mxu0 0.0
  %613 = vmatpush1.msra.mxu0 %v184
  %614 = vmatprep.subr.mxu0 0.0
  %615 = vmatpush1.msra.mxu0 %v185
  %616 = vmatprep.subr.mxu0 0.0
  %617 = vmatpush1.msra.mxu0 %v186
  %618 = vmatprep.subr.mxu0 0.0
  %619 = vmatpush1.msra.mxu0 %v187
  %620 = vmatprep.subr.mxu0 0.0
  %621 = vmatpush1.msra.mxu0 %v188
  %622 = vmatprep.subr.mxu0 0.0
  %623 = vmatpush1.msra.mxu0 %v189
  %624 = vmatprep.subr.mxu0 0.0
  %625 = vmatpush1.msra.mxu0 %v190
  %626 = vmatprep.subr.mxu0 0.0
  %627 = vmatpush1.msra.mxu0 %v191
  %628 = vmatprep.subr.mxu0 0.0
  %629 = vmatpush1.msra.mxu0 %v192
  %630 = vmatprep.subr.mxu0 0.0
  %631 = vmatpush1.msra.mxu0 %v193
  %632 = vmatprep.subr.mxu0 0.0
  %633 = vmatpush1.msra.mxu0 %v194
  %634 = vmatprep.subr.mxu0 0.0
  %635 = vmatpush1.msra.mxu0 %v195
  %636 = vmatprep.subr.mxu0 0.0
  %637 = vmatpush1.msra.mxu0 %v196
  %638 = vmatprep.subr.mxu0 0.0
  %639 = vmatpush1.msra.mxu0 %v197
  %640 = vmatprep.subr.mxu0 0.0
  %641 = vmatpush1.msra.mxu0 %v198
  %642 = vmatprep.subr.mxu0 0.0
  %643 = vmatpush1.msra.mxu0 %v199
  %644 = vmatprep.subr.mxu0 0.0
  %645 = vmatpush1.msra.mxu0 %v200
  %646 = vmatprep.subr.mxu0 0.0
  %647 = vmatpush1.msra.mxu0 %v201
  %648 = vmatprep.subr.mxu0 0.0
  %649 = vmatpush1.msra.mxu0 %v202
  %650 = vmatprep.subr.mxu0 0.0
  %651 = vmatpush1.msra.mxu0 %v203
  %652 = vmatprep.subr.mxu0 0.0
  %653 = vmatpush1.msra.mxu0 %v204
  %654 = vmatprep.subr.mxu0 0.0
  %655 = vmatpush1.msra.mxu0 %v205
  %656 = vmatprep.subr.mxu0 0.0
  %657 = vmatpush1.msra.mxu0 %v206
  %658 = vmatprep.subr.mxu0 0.0
  %659 = vmatpush1.msra.mxu0 %v207
  %660 = vmatprep.subr.mxu0 0.0
  %661 = vmatpush1.msra.mxu0 %v208
  %662 = vmatprep.subr.mxu0 0.0
  %663 = vmatpush1.msra.mxu0 %v209
  %664 = vmatprep.mubr.f32.mxu0 %v25
  %665 = vmatmul.mubr.f32.gmra.mrb[0].mxu0 %v24
  %v666 = vpop.f32.mrb[0].mxu0
  %v667 = vadd.f32 %v582, %v666
  %v668 = vpop.f32.mrb[0].mxu0
  %669 = vmatprep.mubr.f32.mxu0 %v41
  %670 = vmatmul.mubr.f32.gmra.mrb[0].mxu0 %v40
  %v671 = vpop.f32.mrb[0].mxu0
  %v672 = vadd.f32 %v587, %v671
  %v673 = vpop.f32.mrb[0].mxu0
  %674 = vmatprep.mubr.f32.mxu0 %v57
  %675 = vmatmul.mubr.f32.gmra.mrb[0].mxu0 %v56
  %v676 = vpop.f32.mrb[0].mxu0
  %v677 = vadd.f32 %v592, %v676
  %v678 = vpop.f32.mrb[0].mxu0
  %679 = vmatprep.mubr.f32.mxu0 %v73
  %680 = vmatmul.mubr.f32.gmra.mrb[0].mxu0 %v72
  %v681 = vpop.f32.mrb[0].mxu0
  %v682 = vadd.f32 %v597, %v681
  %v683 = vpop.f32.mrb[0].mxu0
  %684 = vdwg.mxu0
  %685 = vmatprep.subr.mxu0 0.0
  %686 = vmatpush1.msra.mxu0 %v210
  %687 = vmatprep.subr.mxu0 0.0
  %688 = vmatpush1.msra.mxu0 %v211
  %689 = vmatprep.subr.mxu0 0.0
  %690 = vmatpush1.msra.mxu0 %v212
  %691 = vmatprep.subr.mxu0 0.0
  %692 = vmatpush1.msra.mxu0 %v213
  %693 = vmatprep.subr.mxu0 0.0
  %694 = vmatpush1.msra.mxu0 %v214
  %695 = vmatprep.subr.mxu0 0.0
  %696 = vmatpush1.msra.mxu0 %v215
  %697 = vmatprep.subr.mxu0 0.0
  %698 = vmatpush1.msra.mxu0 %v216
  %699 = vmatprep.subr.mxu0 0.0
  %700 = vmatpush1.msra.mxu0 %v217
  %701 = vmatprep.subr.mxu0 0.0
  %702 = vmatpush1.msra.mxu0 %v218
  %703 = vmatprep.subr.mxu0 0.0
  %704 = vmatpush1.msra.mxu0 %v219
  %705 = vmatprep.subr.mxu0 0.0
  %706 = vmatpush1.msra.mxu0 %v220
  %707 = vmatprep.subr.mxu0 0.0
  %708 = vmatpush1.msra.mxu0 %v221
  %709 = vmatprep.subr.mxu0 0.0
  %710 = vmatpush1.msra.mxu0 %v222
  %711 = vmatprep.subr.mxu0 0.0
  %712 = vmatpush1.msra.mxu0 %v223
  %713 = vmatprep.subr.mxu0 0.0
  %714 = vmatpush1.msra.mxu0 %v224
  %715 = vmatprep.subr.mxu0 0.0
  %716 = vmatpush1.msra.mxu0 %v225
  %717 = vmatprep.subr.mxu0 0.0
  %718 = vmatpush1.msra.mxu0 %v226
  %719 = vmatprep.subr.mxu0 0.0
  %720 = vmatpush1.msra.mxu0 %v227
  %721 = vmatprep.subr.mxu0 0.0
  %722 = vmatpush1.msra.mxu0 %v228
  %723 = vmatprep.subr.mxu0 0.0
  %724 = vmatpush1.msra.mxu0 %v229
  %725 = vmatprep.subr.mxu0 0.0
  %726 = vmatpush1.msra.mxu0 %v230
  %727 = vmatprep.subr.mxu0 0.0
  %728 = vmatpush1.msra.mxu0 %v231
  %729 = vmatprep.subr.mxu0 0.0
  %730 = vmatpush1.msra.mxu0 %v232
  %731 = vmatprep.subr.mxu0 0.0
  %732 = vmatpush1.msra.mxu0 %v233
  %733 = vmatprep.subr.mxu0 0.0
  %734 = vmatpush1.msra.mxu0 %v234
  %735 = vmatprep.subr.mxu0 0.0
  %736 = vmatpush1.msra.mxu0 %v235
  %737 = vmatprep.subr.mxu0 0.0
  %738 = vmatpush1.msra.mxu0 %v236
  %739 = vmatprep.subr.mxu0 0.0
  %740 = vmatpush1.msra.mxu0 %v237
  %741 = vmatprep.subr.mxu0 0.0
  %742 = vmatpush1.msra.mxu0 %v238
  %743 = vmatprep.subr.mxu0 0.0
  %744 = vmatpush1.msra.mxu0 %v239
  %745 = vmatprep.subr.mxu0 0.0
  %746 = vmatpush1.msra.mxu0 %v240
  %747 = vmatprep.subr.mxu0 0.0
  %748 = vmatpush1.msra.mxu0 %v241
  %749 = vmatprep.mubr.f32.mxu0 %v27
  %750 = vmatmul.mubr.f32.gmra.mrb[0].mxu0 %v26
  %v751 = vpop.f32.mrb[0].mxu0
  %v752 = vadd.f32 %v667, %v751
  %v753 = vpop.f32.mrb[0].mxu0
  %754 = vmatprep.mubr.f32.mxu0 %v43
  %755 = vmatmul.mubr.f32.gmra.mrb[0].mxu0 %v42
  %v756 = vpop.f32.mrb[0].mxu0
  %v757 = vadd.f32 %v672, %v756
  %v758 = vpop.f32.mrb[0].mxu0
  %759 = vmatprep.mubr.f32.mxu0 %v59
  %760 = vmatmul.mubr.f32.gmra.mrb[0].mxu0 %v58
  %v761 = vpop.f32.mrb[0].mxu0
  %v762 = vadd.f32 %v677, %v761
  %v763 = vpop.f32.mrb[0].mxu0
  %764 = vmatprep.mubr.f32.mxu0 %v75
  %765 = vmatmul.mubr.f32.gmra.mrb[0].mxu0 %v74
  %v766 = vpop.f32.mrb[0].mxu0
  %v767 = vadd.f32 %v682, %v766
  %v768 = vpop.f32.mrb[0].mxu0
  %769 = vdwg.mxu0
  %770 = vmatprep.subr.mxu0 0.0
  %771 = vmatpush1.msra.mxu0 %v242
  %772 = vmatprep.subr.mxu0 0.0
  %773 = vmatpush1.msra.mxu0 %v243
  %774 = vmatprep.subr.mxu0 0.0
  %775 = vmatpush1.msra.mxu0 %v244
  %776 = vmatprep.subr.mxu0 0.0
  %777 = vmatpush1.msra.mxu0 %v245
  %778 = vmatprep.subr.mxu0 0.0
  %779 = vmatpush1.msra.mxu0 %v246
  %780 = vmatprep.subr.mxu0 0.0
  %781 = vmatpush1.msra.mxu0 %v247
  %782 = vmatprep.subr.mxu0 0.0
  %783 = vmatpush1.msra.mxu0 %v248
  %784 = vmatprep.subr.mxu0 0.0
  %785 = vmatpush1.msra.mxu0 %v249
  %786 = vmatprep.subr.mxu0 0.0
  %787 = vmatpush1.msra.mxu0 %v250
  %788 = vmatprep.subr.mxu0 0.0
  %789 = vmatpush1.msra.mxu0 %v251
  %790 = vmatprep.subr.mxu0 0.0
  %791 = vmatpush1.msra.mxu0 %v252
  %792 = vmatprep.subr.mxu0 0.0
  %793 = vmatpush1.msra.mxu0 %v253
  %794 = vmatprep.subr.mxu0 0.0
  %795 = vmatpush1.msra.mxu0 %v254
  %796 = vmatprep.subr.mxu0 0.0
  %797 = vmatpush1.msra.mxu0 %v255
  %798 = vmatprep.subr.mxu0 0.0
  %799 = vmatpush1.msra.mxu0 %v256
  %800 = vmatprep.subr.mxu0 0.0
  %801 = vmatpush1.msra.mxu0 %v257
  %802 = vmatprep.subr.mxu0 0.0
  %803 = vmatpush1.msra.mxu0 %v258
  %804 = vmatprep.subr.mxu0 0.0
  %805 = vmatpush1.msra.mxu0 %v259
  %806 = vmatprep.subr.mxu0 0.0
  %807 = vmatpush1.msra.mxu0 %v260
  %808 = vmatprep.subr.mxu0 0.0
  %809 = vmatpush1.msra.mxu0 %v261
  %810 = vmatprep.subr.mxu0 0.0
  %811 = vmatpush1.msra.mxu0 %v262
  %812 = vmatprep.subr.mxu0 0.0
  %813 = vmatpush1.msra.mxu0 %v263
  %814 = vmatprep.subr.mxu0 0.0
  %815 = vmatpush1.msra.mxu0 %v264
  %816 = vmatprep.subr.mxu0 0.0
  %817 = vmatpush1.msra.mxu0 %v265
  %818 = vmatprep.subr.mxu0 0.0
  %819 = vmatpush1.msra.mxu0 %v266
  %820 = vmatprep.subr.mxu0 0.0
  %821 = vmatpush1.msra.mxu0 %v267
  %822 = vmatprep.subr.mxu0 0.0
  %823 = vmatpush1.msra.mxu0 %v268
  %824 = vmatprep.subr.mxu0 0.0
  %825 = vmatpush1.msra.mxu0 %v269
  %826 = vmatprep.subr.mxu0 0.0
  %827 = vmatpush1.msra.mxu0 %v270
  %828 = vmatprep.subr.mxu0 0.0
  %829 = vmatpush1.msra.mxu0 %v271
  %830 = vmatprep.subr.mxu0 0.0
  %831 = vmatpush1.msra.mxu0 %v272
  %832 = vmatprep.subr.mxu0 0.0
  %833 = vmatpush1.msra.mxu0 %v273
  %834 = vmatprep.mubr.f32.mxu0 %v29
  %835 = vmatmul.mubr.f32.gmra.mrb[0].mxu0 %v28
  %v836 = vpop.f32.mrb[0].mxu0
  %v837 = vadd.f32 %v752, %v836
  %v838 = vpop.f32.mrb[0].mxu0
  %839 = vmatprep.mubr.f32.mxu0 %v45
  %840 = vmatmul.mubr.f32.gmra.mrb[0].mxu0 %v44
  %v841 = vpop.f32.mrb[0].mxu0
  %v842 = vadd.f32 %v757, %v841
  %v843 = vpop.f32.mrb[0].mxu0
  %844 = vmatprep.mubr.f32.mxu0 %v61
  %845 = vmatmul.mubr.f32.gmra.mrb[0].mxu0 %v60
  %v846 = vpop.f32.mrb[0].mxu0
  %v847 = vadd.f32 %v762, %v846
  %v848 = vpop.f32.mrb[0].mxu0
  %849 = vmatprep.mubr.f32.mxu0 %v77
  %850 = vmatmul.mubr.f32.gmra.mrb[0].mxu0 %v76
  %v851 = vpop.f32.mrb[0].mxu0
  %v852 = vadd.f32 %v767, %v851
  %v853 = vpop.f32.mrb[0].mxu0
  %854 = vdwg.mxu0
  %855 = vmatprep.subr.mxu0 0.0
  %856 = vmatpush1.msra.mxu0 %v274
  %857 = vmatprep.subr.mxu0 0.0
  %858 = vmatpush1.msra.mxu0 %v275
  %859 = vmatprep.subr.mxu0 0.0
  %860 = vmatpush1.msra.mxu0 %v276
  %861 = vmatprep.subr.mxu0 0.0
  %862 = vmatpush1.msra.mxu0 %v277
  %863 = vmatprep.subr.mxu0 0.0
  %864 = vmatpush1.msra.mxu0 %v278
  %865 = vmatprep.subr.mxu0 0.0
  %866 = vmatpush1.msra.mxu0 %v279
  %867 = vmatprep.subr.mxu0 0.0
  %868 = vmatpush1.msra.mxu0 %v280
  %869 = vmatprep.subr.mxu0 0.0
  %870 = vmatpush1.msra.mxu0 %v281
  %871 = vmatprep.subr.mxu0 0.0
  %872 = vmatpush1.msra.mxu0 %v282
  %873 = vmatprep.subr.mxu0 0.0
  %874 = vmatpush1.msra.mxu0 %v283
  %875 = vmatprep.subr.mxu0 0.0
  %876 = vmatpush1.msra.mxu0 %v284
  %877 = vmatprep.subr.mxu0 0.0
  %878 = vmatpush1.msra.mxu0 %v285
  %879 = vmatprep.subr.mxu0 0.0
  %880 = vmatpush1.msra.mxu0 %v286
  %881 = vmatprep.subr.mxu0 0.0
  %882 = vmatpush1.msra.mxu0 %v287
  %883 = vmatprep.subr.mxu0 0.0
  %884 = vmatpush1.msra.mxu0 %v288
  %885 = vmatprep.subr.mxu0 0.0
  %886 = vmatpush1.msra.mxu0 %v289
  %887 = vmatprep.subr.mxu0 0.0
  %888 = vmatpush1.msra.mxu0 %v290
  %889 = vmatprep.subr.mxu0 0.0
  %890 = vmatpush1.msra.mxu0 %v291
  %891 = vmatprep.subr.mxu0 0.0
  %892 = vmatpush1.msra.mxu0 %v292
  %893 = vmatprep.subr.mxu0 0.0
  %894 = vmatpush1.msra.mxu0 %v293
  %895 = vmatprep.subr.mxu0 0.0
  %896 = vmatpush1.msra.mxu0 %v294
  %897 = vmatprep.subr.mxu0 0.0
  %898 = vmatpush1.msra.mxu0 %v295
  %899 = vmatprep.subr.mxu0 0.0
  %900 = vmatpush1.msra.mxu0 %v296
  %901 = vmatprep.subr.mxu0 0.0
  %902 = vmatpush1.msra.mxu0 %v297
  %903 = vmatprep.subr.mxu0 0.0
  %904 = vmatpush1.msra.mxu0 %v298
  %905 = vmatprep.subr.mxu0 0.0
  %906 = vmatpush1.msra.mxu0 %v299
  %907 = vmatprep.subr.mxu0 0.0
  %908 = vmatpush1.msra.mxu0 %v300
  %909 = vmatprep.subr.mxu0 0.0
  %910 = vmatpush1.msra.mxu0 %v301
  %911 = vmatprep.subr.mxu0 0.0
  %912 = vmatpush1.msra.mxu0 %v302
  %913 = vmatprep.subr.mxu0 0.0
  %914 = vmatpush1.msra.mxu0 %v303
  %915 = vmatprep.subr.mxu0 0.0
  %916 = vmatpush1.msra.mxu0 %v304
  %917 = vmatprep.subr.mxu0 0.0
  %918 = vmatpush1.msra.mxu0 %v305
  %919 = vmatprep.mubr.f32.mxu0 %v31
  %920 = vmatmul.mubr.f32.gmra.mrb[0].mxu0 %v30
  %v921 = vpop.f32.mrb[0].mxu0
  %v922 = vadd.f32 %v837, %v921
  %v923 = vpop.f32.mrb[0].mxu0
  %924 = vmatprep.mubr.f32.mxu0 %v47
  %925 = vmatmul.mubr.f32.gmra.mrb[0].mxu0 %v46
  %v926 = vpop.f32.mrb[0].mxu0
  %v927 = vadd.f32 %v842, %v926
  %v928 = vpop.f32.mrb[0].mxu0
  %929 = vmatprep.mubr.f32.mxu0 %v63
  %930 = vmatmul.mubr.f32.gmra.mrb[0].mxu0 %v62
  %v931 = vpop.f32.mrb[0].mxu0
  %v932 = vadd.f32 %v847, %v931
  %v933 = vpop.f32.mrb[0].mxu0
  %934 = vmatprep.mubr.f32.mxu0 %v79
  %935 = vmatmul.mubr.f32.gmra.mrb[0].mxu0 %v78
  %v936 = vpop.f32.mrb[0].mxu0
  %v937 = vadd.f32 %v852, %v936
  %v938 = vpop.f32.mrb[0].mxu0
  %939 = vdwg.mxu0
  %940 = vmatprep.subr.mxu0 0.0
  %941 = vmatpush1.msra.mxu0 %v306
  %942 = vmatprep.subr.mxu0 0.0
  %943 = vmatpush1.msra.mxu0 %v307
  %944 = vmatprep.subr.mxu0 0.0
  %945 = vmatpush1.msra.mxu0 %v308
  %946 = vmatprep.subr.mxu0 0.0
  %947 = vmatpush1.msra.mxu0 %v309
  %948 = vmatprep.subr.mxu0 0.0
  %949 = vmatpush1.msra.mxu0 %v310
  %950 = vmatprep.subr.mxu0 0.0
  %951 = vmatpush1.msra.mxu0 %v311
  %952 = vmatprep.subr.mxu0 0.0
  %953 = vmatpush1.msra.mxu0 %v312
  %954 = vmatprep.subr.mxu0 0.0
  %955 = vmatpush1.msra.mxu0 %v313
  %956 = vmatprep.subr.mxu0 0.0
  %957 = vmatpush1.msra.mxu0 %v314
  %958 = vmatprep.subr.mxu0 0.0
  %959 = vmatpush1.msra.mxu0 %v315
  %960 = vmatprep.subr.mxu0 0.0
  %961 = vmatpush1.msra.mxu0 %v316
  %962 = vmatprep.subr.mxu0 0.0
  %963 = vmatpush1.msra.mxu0 %v317
  %964 = vmatprep.subr.mxu0 0.0
  %965 = vmatpush1.msra.mxu0 %v318
  %966 = vmatprep.subr.mxu0 0.0
  %967 = vmatpush1.msra.mxu0 %v319
  %968 = vmatprep.subr.mxu0 0.0
  %969 = vmatpush1.msra.mxu0 %v320
  %970 = vmatprep.subr.mxu0 0.0
  %971 = vmatpush1.msra.mxu0 %v321
  %972 = vmatprep.subr.mxu0 0.0
  %973 = vmatpush1.msra.mxu0 %v322
  %974 = vmatprep.subr.mxu0 0.0
  %975 = vmatpush1.msra.mxu0 %v323
  %976 = vmatprep.subr.mxu0 0.0
  %977 = vmatpush1.msra.mxu0 %v324
  %978 = vmatprep.subr.mxu0 0.0
  %979 = vmatpush1.msra.mxu0 %v325
  %980 = vmatprep.subr.mxu0 0.0
  %981 = vmatpush1.msra.mxu0 %v326
  %982 = vmatprep.subr.mxu0 0.0
  %983 = vmatpush1.msra.mxu0 %v327
  %984 = vmatprep.subr.mxu0 0.0
  %985 = vmatpush1.msra.mxu0 %v328
  %986 = vmatprep.subr.mxu0 0.0
  %987 = vmatpush1.msra.mxu0 %v329
  %988 = vmatprep.subr.mxu0 0.0
  %989 = vmatpush1.msra.mxu0 %v330
  %990 = vmatprep.subr.mxu0 0.0
  %991 = vmatpush1.msra.mxu0 %v331
  %992 = vmatprep.subr.mxu0 0.0
  %993 = vmatpush1.msra.mxu0 %v332
  %994 = vmatprep.subr.mxu0 0.0
  %995 = vmatpush1.msra.mxu0 %v333
  %996 = vmatprep.subr.mxu0 0.0
  %997 = vmatpush1.msra.mxu0 %v334
  %998 = vmatprep.subr.mxu0 0.0
  %999 = vmatpush1.msra.mxu0 %v335
  %1000 = vmatprep.subr.mxu0 0.0
  %1001 = vmatpush1.msra.mxu0 %v336
  %1002 = vmatprep.subr.mxu0 0.0
  %1003 = vmatpush1.msra.mxu0 %v337
  %1004 = vmatprep.mubr.f32.mxu0 %v33
  %1005 = vmatmul.mubr.f32.gmra.mrb[0].mxu0 %v32
  %v1006 = vpop.f32.mrb[0].mxu0
  %v1007 = vadd.f32 %v922, %v1006
  %v1008 = vpop.f32.mrb[0].mxu0
  %1009 = vmatprep.mubr.f32.mxu0 %v49
  %1010 = vmatmul.mubr.f32.gmra.mrb[0].mxu0 %v48
  %v1011 = vpop.f32.mrb[0].mxu0
  %v1012 = vadd.f32 %v927, %v1011
  %v1013 = vpop.f32.mrb[0].mxu0
  %1014 = vmatprep.mubr.f32.mxu0 %v65
  %1015 = vmatmul.mubr.f32.gmra.mrb[0].mxu0 %v64
  %v1016 = vpop.f32.mrb[0].mxu0
  %v1017 = vadd.f32 %v932, %v1016
  %v1018 = vpop.f32.mrb[0].mxu0
  %1019 = vmatprep.mubr.f32.mxu0 %v81
  %1020 = vmatmul.mubr.f32.gmra.mrb[0].mxu0 %v80
  %v1021 = vpop.f32.mrb[0].mxu0
  %v1022 = vadd.f32 %v937, %v1021
  %v1023 = vpop.f32.mrb[0].mxu0
  %1024 = vdwg.mxu0
  %s1025 = sld [smem:[#allocation2]]
  %vm1026 = vcmp.ge.f32.partialorder %v1007, 0.0
  %vm1027 = vcmp.ge.f32.partialorder %v1012, 0.0
  %vm1028 = vcmp.ge.f32.partialorder %v1017, 0.0
  %vm1029 = vcmp.ge.f32.partialorder %v1022, 0.0
  %v1030 = vstv %s1025
  %v1031 = vmul.f32 %v1030, %v1007
  %v1032 = vmul.f32 %v1030, %v1012
  %v1033 = vmul.f32 %v1030, %v1017
  %v1034 = vmul.f32 %v1030, %v1022
  %v1035 = vsel %vm1026, %v1007, %v1031
  %v1036 = vsel %vm1027, %v1012, %v1032
  %v1037 = vsel %vm1028, %v1017, %v1033
  %v1038 = vsel %vm1029, %v1022, %v1034
  %1039 = vst [vmem:[%s4] sm:$0xff] %v1035
  %1040 = vst [vmem:[%s4 + $0x8] sm:$0xff] %v1036
  %1041 = vst [vmem:[%s4 + $0x10] sm:$0xff] %v1037
  %1042 = vst [vmem:[%s4 + $0x18] sm:$0xff] %v1038
  // Predicated region
  $region18: #{auto_encoder_forward.7} parent=0 // pred_check
    _
  $region19: #{auto_encoder_forward.7} parent=0 // pred_check_branch
    %1044 = sbr.rel (0) target = $region21
  $region20: #{auto_encoder_forward.7} parent=0 // pred_region
    _
  $region21: #{auto_encoder_forward.7} parent=0 // pred_fallthru
    _
  // Predicated region
  $region22: #{auto_encoder_forward.7} parent=0 // pred_check
    _
  $region23: #{auto_encoder_forward.7} parent=0 // pred_check_branch
    %1046 = sbr.rel (0) target = $region25
  $region24: #{auto_encoder_forward.7} parent=0 // pred_region
    _
  $region25: #{auto_encoder_forward.7} parent=0 // pred_fallthru
    _

// kernel: auto_encoder_forward.8
$region0: #{auto_encoder_forward.8}
  #allocation0 [shape = 'u32[]', space=smem, size = 0x4, offset = 0x4, fixed_abs, tag = 'smem constant byte address 0x4 - core index']
  #allocation1 [shape = 'u32[144,128]{1,0:T(1,128)}', space=vmem, size = 0x12000, scoped, tag = 'internal scratch']
  #allocation2 [shape = 'f32[1]{0:T(128)S(6)}', space=smem, size = 0x200, scoped, tag = 'scoped memory for auto_encoder_forward.8']
  %s0 = inlined_call_operand.vmem [shape: f32[8,1024], index: 0, kind: input, shape index: {}]
  %s1 = inlined_call_operand.vmem [shape: f32[1024,128], index: 1, kind: input, shape index: {}]
  %s2 = inlined_call_operand.vmem [shape: f32[1,128], index: 2, kind: input, shape index: {}]
  %s3 = inlined_call_operand.<no memory space> [shape: f32[1], index: 3, kind: input, shape index: {}]
  %s4 = inlined_call_operand.vmem [shape: f32[8,128], index: 4, kind: output, shape index: {}]
  %s5 = sld [smem:[#allocation0]]
  $region26: #{auto_encoder_forward.8} parent=0
    _
  %s7 = ssub.s32 1, %s5
  %s8 = scalar_select 0, %s7, %s5
  %9 = sst [smem:[#allocation2]] %s3
  // Predicated region
  $region2: #{auto_encoder_forward.8} parent=0 // pred_check
    _
  $region3: #{auto_encoder_forward.8} parent=0 // pred_check_branch
    %11 = sbr.rel (0) target = $region5
  $region4: #{auto_encoder_forward.8} parent=0 // pred_region
    _
  $region5: #{auto_encoder_forward.8} parent=0 // pred_fallthru
    _
  // Predicated region
  $region6: #{auto_encoder_forward.8} parent=0 // pred_check
    _
  $region7: #{auto_encoder_forward.8} parent=0 // pred_check_branch
    %13 = sbr.rel (0) target = $region9
  $region8: #{auto_encoder_forward.8} parent=0 // pred_region
    _
  $region9: #{auto_encoder_forward.8} parent=0 // pred_fallthru
    _
  // Predicated region
  $region10: #{auto_encoder_forward.8} parent=0 // pred_check
    _
  $region11: #{auto_encoder_forward.8} parent=0 // pred_check_branch
    %15 = sbr.rel (0) target = $region13
  $region12: #{auto_encoder_forward.8} parent=0 // pred_region
    _
  $region13: #{auto_encoder_forward.8} parent=0 // pred_fallthru
    _
  // Predicated region
  $region14: #{auto_encoder_forward.8} parent=0 // pred_check
    _
  $region15: #{auto_encoder_forward.8} parent=0 // pred_check_branch
    %17 = sbr.rel (0) target = $region17
  $region16: #{auto_encoder_forward.8} parent=0 // pred_region
    _
  $region17: #{auto_encoder_forward.8} parent=0 // pred_fallthru
    _
  %v18 = vld [vmem:[%s0] sm:$0xff]
  %v19 = vld [vmem:[%s0 + $0x8] sm:$0xff]
  %v20 = vld [vmem:[%s0 + $0x10] sm:$0xff]
  %v21 = vld [vmem:[%s0 + $0x18] sm:$0xff]
  %v22 = vld [vmem:[%s0 + $0x20] sm:$0xff]
  %v23 = vld [vmem:[%s0 + $0x28] sm:$0xff]
  %v24 = vld [vmem:[%s0 + $0x30] sm:$0xff]
  %v25 = vld [vmem:[%s0 + $0x38] sm:$0xff]
  %v26 = vld [vmem:[%s1] sm:$0xff]
  %v27 = vld [vmem:[%s1 + $0x8] sm:$0xff]
  %v28 = vld [vmem:[%s1 + $0x10] sm:$0xff]
  %v29 = vld [vmem:[%s1 + $0x18] sm:$0xff]
  %v30 = vld [vmem:[%s1 + $0x20] sm:$0xff]
  %v31 = vld [vmem:[%s1 + $0x28] sm:$0xff]
  %v32 = vld [vmem:[%s1 + $0x30] sm:$0xff]
  %v33 = vld [vmem:[%s1 + $0x38] sm:$0xff]
  %v34 = vld [vmem:[%s1 + $0x40] sm:$0xff]
  %v35 = vld [vmem:[%s1 + $0x48] sm:$0xff]
  %v36 = vld [vmem:[%s1 + $0x50] sm:$0xff]
  %v37 = vld [vmem:[%s1 + $0x58] sm:$0xff]
  %v38 = vld [vmem:[%s1 + $0x60] sm:$0xff]
  %v39 = vld [vmem:[%s1 + $0x68] sm:$0xff]
  %v40 = vld [vmem:[%s1 + $0x70] sm:$0xff]
  %v41 = vld [vmem:[%s1 + $0x78] sm:$0xff]
  %v42 = vld [vmem:[%s1 + $0x80] sm:$0xff]
  %v43 = vld [vmem:[%s1 + $0x88] sm:$0xff]
  %v44 = vld [vmem:[%s1 + $0x90] sm:$0xff]
  %v45 = vld [vmem:[%s1 + $0x98] sm:$0xff]
  %v46 = vld [vmem:[%s1 + $0xa0] sm:$0xff]
  %v47 = vld [vmem:[%s1 + $0xa8] sm:$0xff]
  %v48 = vld [vmem:[%s1 + $0xb0] sm:$0xff]
  %v49 = vld [vmem:[%s1 + $0xb8] sm:$0xff]
  %v50 = vld [vmem:[%s1 + $0xc0] sm:$0xff]
  %v51 = vld [vmem:[%s1 + $0xc8] sm:$0xff]
  %v52 = vld [vmem:[%s1 + $0xd0] sm:$0xff]
  %v53 = vld [vmem:[%s1 + $0xd8] sm:$0xff]
  %v54 = vld [vmem:[%s1 + $0xe0] sm:$0xff]
  %v55 = vld [vmem:[%s1 + $0xe8] sm:$0xff]
  %v56 = vld [vmem:[%s1 + $0xf0] sm:$0xff]
  %v57 = vld [vmem:[%s1 + $0xf8] sm:$0xff]
  %v58 = vld [vmem:[%s1 + $0x100] sm:$0xff]
  %v59 = vld [vmem:[%s1 + $0x108] sm:$0xff]
  %v60 = vld [vmem:[%s1 + $0x110] sm:$0xff]
  %v61 = vld [vmem:[%s1 + $0x118] sm:$0xff]
  %v62 = vld [vmem:[%s1 + $0x120] sm:$0xff]
  %v63 = vld [vmem:[%s1 + $0x128] sm:$0xff]
  %v64 = vld [vmem:[%s1 + $0x130] sm:$0xff]
  %v65 = vld [vmem:[%s1 + $0x138] sm:$0xff]
  %v66 = vld [vmem:[%s1 + $0x140] sm:$0xff]
  %v67 = vld [vmem:[%s1 + $0x148] sm:$0xff]
  %v68 = vld [vmem:[%s1 + $0x150] sm:$0xff]
  %v69 = vld [vmem:[%s1 + $0x158] sm:$0xff]
  %v70 = vld [vmem:[%s1 + $0x160] sm:$0xff]
  %v71 = vld [vmem:[%s1 + $0x168] sm:$0xff]
  %v72 = vld [vmem:[%s1 + $0x170] sm:$0xff]
  %v73 = vld [vmem:[%s1 + $0x178] sm:$0xff]
  %v74 = vld [vmem:[%s1 + $0x180] sm:$0xff]
  %v75 = vld [vmem:[%s1 + $0x188] sm:$0xff]
  %v76 = vld [vmem:[%s1 + $0x190] sm:$0xff]
  %v77 = vld [vmem:[%s1 + $0x198] sm:$0xff]
  %v78 = vld [vmem:[%s1 + $0x1a0] sm:$0xff]
  %v79 = vld [vmem:[%s1 + $0x1a8] sm:$0xff]
  %v80 = vld [vmem:[%s1 + $0x1b0] sm:$0xff]
  %v81 = vld [vmem:[%s1 + $0x1b8] sm:$0xff]
  %v82 = vld [vmem:[%s1 + $0x1c0] sm:$0xff]
  %v83 = vld [vmem:[%s1 + $0x1c8] sm:$0xff]
  %v84 = vld [vmem:[%s1 + $0x1d0] sm:$0xff]
  %v85 = vld [vmem:[%s1 + $0x1d8] sm:$0xff]
  %v86 = vld [vmem:[%s1 + $0x1e0] sm:$0xff]
  %v87 = vld [vmem:[%s1 + $0x1e8] sm:$0xff]
  %v88 = vld [vmem:[%s1 + $0x1f0] sm:$0xff]
  %v89 = vld [vmem:[%s1 + $0x1f8] sm:$0xff]
  %v90 = vld [vmem:[%s1 + $0x200] sm:$0xff]
  %v91 = vld [vmem:[%s1 + $0x208] sm:$0xff]
  %v92 = vld [vmem:[%s1 + $0x210] sm:$0xff]
  %v93 = vld [vmem:[%s1 + $0x218] sm:$0xff]
  %v94 = vld [vmem:[%s1 + $0x220] sm:$0xff]
  %v95 = vld [vmem:[%s1 + $0x228] sm:$0xff]
  %v96 = vld [vmem:[%s1 + $0x230] sm:$0xff]
  %v97 = vld [vmem:[%s1 + $0x238] sm:$0xff]
  %v98 = vld [vmem:[%s1 + $0x240] sm:$0xff]
  %v99 = vld [vmem:[%s1 + $0x248] sm:$0xff]
  %v100 = vld [vmem:[%s1 + $0x250] sm:$0xff]
  %v101 = vld [vmem:[%s1 + $0x258] sm:$0xff]
  %v102 = vld [vmem:[%s1 + $0x260] sm:$0xff]
  %v103 = vld [vmem:[%s1 + $0x268] sm:$0xff]
  %v104 = vld [vmem:[%s1 + $0x270] sm:$0xff]
  %v105 = vld [vmem:[%s1 + $0x278] sm:$0xff]
  %v106 = vld [vmem:[%s1 + $0x280] sm:$0xff]
  %v107 = vld [vmem:[%s1 + $0x288] sm:$0xff]
  %v108 = vld [vmem:[%s1 + $0x290] sm:$0xff]
  %v109 = vld [vmem:[%s1 + $0x298] sm:$0xff]
  %v110 = vld [vmem:[%s1 + $0x2a0] sm:$0xff]
  %v111 = vld [vmem:[%s1 + $0x2a8] sm:$0xff]
  %v112 = vld [vmem:[%s1 + $0x2b0] sm:$0xff]
  %v113 = vld [vmem:[%s1 + $0x2b8] sm:$0xff]
  %v114 = vld [vmem:[%s1 + $0x2c0] sm:$0xff]
  %v115 = vld [vmem:[%s1 + $0x2c8] sm:$0xff]
  %v116 = vld [vmem:[%s1 + $0x2d0] sm:$0xff]
  %v117 = vld [vmem:[%s1 + $0x2d8] sm:$0xff]
  %v118 = vld [vmem:[%s1 + $0x2e0] sm:$0xff]
  %v119 = vld [vmem:[%s1 + $0x2e8] sm:$0xff]
  %v120 = vld [vmem:[%s1 + $0x2f0] sm:$0xff]
  %v121 = vld [vmem:[%s1 + $0x2f8] sm:$0xff]
  %v122 = vld [vmem:[%s1 + $0x300] sm:$0xff]
  %v123 = vld [vmem:[%s1 + $0x308] sm:$0xff]
  %v124 = vld [vmem:[%s1 + $0x310] sm:$0xff]
  %v125 = vld [vmem:[%s1 + $0x318] sm:$0xff]
  %v126 = vld [vmem:[%s1 + $0x320] sm:$0xff]
  %v127 = vld [vmem:[%s1 + $0x328] sm:$0xff]
  %v128 = vld [vmem:[%s1 + $0x330] sm:$0xff]
  %v129 = vld [vmem:[%s1 + $0x338] sm:$0xff]
  %v130 = vld [vmem:[%s1 + $0x340] sm:$0xff]
  %v131 = vld [vmem:[%s1 + $0x348] sm:$0xff]
  %v132 = vld [vmem:[%s1 + $0x350] sm:$0xff]
  %v133 = vld [vmem:[%s1 + $0x358] sm:$0xff]
  %v134 = vld [vmem:[%s1 + $0x360] sm:$0xff]
  %v135 = vld [vmem:[%s1 + $0x368] sm:$0xff]
  %v136 = vld [vmem:[%s1 + $0x370] sm:$0xff]
  %v137 = vld [vmem:[%s1 + $0x378] sm:$0xff]
  %v138 = vld [vmem:[%s1 + $0x380] sm:$0xff]
  %v139 = vld [vmem:[%s1 + $0x388] sm:$0xff]
  %v140 = vld [vmem:[%s1 + $0x390] sm:$0xff]
  %v141 = vld [vmem:[%s1 + $0x398] sm:$0xff]
  %v142 = vld [vmem:[%s1 + $0x3a0] sm:$0xff]
  %v143 = vld [vmem:[%s1 + $0x3a8] sm:$0xff]
  %v144 = vld [vmem:[%s1 + $0x3b0] sm:$0xff]
  %v145 = vld [vmem:[%s1 + $0x3b8] sm:$0xff]
  %v146 = vld [vmem:[%s1 + $0x3c0] sm:$0xff]
  %v147 = vld [vmem:[%s1 + $0x3c8] sm:$0xff]
  %v148 = vld [vmem:[%s1 + $0x3d0] sm:$0xff]
  %v149 = vld [vmem:[%s1 + $0x3d8] sm:$0xff]
  %v150 = vld [vmem:[%s1 + $0x3e0] sm:$0xff]
  %v151 = vld [vmem:[%s1 + $0x3e8] sm:$0xff]
  %v152 = vld [vmem:[%s1 + $0x3f0] sm:$0xff]
  %v153 = vld [vmem:[%s1 + $0x3f8] sm:$0xff]
  %v154 = vld [vmem:[%s2] sm:$0x1]
  %v156 = vlaneseq
  %v157 = vshrl.u32 %v156, 7
  %v158 = vsub.s32 0, %v157
  %v159 = vrot.slane %v154, %v158
  %161 = vmatprep.subr.mxu0 0.0
  %162 = vmatpush1.msra.mxu0 %v26
  %163 = vmatprep.subr.mxu0 0.0
  %164 = vmatpush1.msra.mxu0 %v27
  %165 = vmatprep.subr.mxu0 0.0
  %166 = vmatpush1.msra.mxu0 %v28
  %167 = vmatprep.subr.mxu0 0.0
  %168 = vmatpush1.msra.mxu0 %v29
  %169 = vmatprep.subr.mxu0 0.0
  %170 = vmatpush1.msra.mxu0 %v30
  %171 = vmatprep.subr.mxu0 0.0
  %172 = vmatpush1.msra.mxu0 %v31
  %173 = vmatprep.subr.mxu0 0.0
  %174 = vmatpush1.msra.mxu0 %v32
  %175 = vmatprep.subr.mxu0 0.0
  %176 = vmatpush1.msra.mxu0 %v33
  %177 = vmatprep.subr.mxu0 0.0
  %178 = vmatpush1.msra.mxu0 %v34
  %179 = vmatprep.subr.mxu0 0.0
  %180 = vmatpush1.msra.mxu0 %v35
  %181 = vmatprep.subr.mxu0 0.0
  %182 = vmatpush1.msra.mxu0 %v36
  %183 = vmatprep.subr.mxu0 0.0
  %184 = vmatpush1.msra.mxu0 %v37
  %185 = vmatprep.subr.mxu0 0.0
  %186 = vmatpush1.msra.mxu0 %v38
  %187 = vmatprep.subr.mxu0 0.0
  %188 = vmatpush1.msra.mxu0 %v39
  %189 = vmatprep.subr.mxu0 0.0
  %190 = vmatpush1.msra.mxu0 %v40
  %191 = vmatprep.subr.mxu0 0.0
  %192 = vmatpush1.msra.mxu0 %v41
  %193 = vmatprep.subr.mxu0 0.0
  %194 = vmatpush1.msra.mxu0 %v42
  %195 = vmatprep.subr.mxu0 0.0
  %196 = vmatpush1.msra.mxu0 %v43
  %197 = vmatprep.subr.mxu0 0.0
  %198 = vmatpush1.msra.mxu0 %v44
  %199 = vmatprep.subr.mxu0 0.0
  %200 = vmatpush1.msra.mxu0 %v45
  %201 = vmatprep.subr.mxu0 0.0
  %202 = vmatpush1.msra.mxu0 %v46
  %203 = vmatprep.subr.mxu0 0.0
  %204 = vmatpush1.msra.mxu0 %v47
  %205 = vmatprep.subr.mxu0 0.0
  %206 = vmatpush1.msra.mxu0 %v48
  %207 = vmatprep.subr.mxu0 0.0
  %208 = vmatpush1.msra.mxu0 %v49
  %209 = vmatprep.subr.mxu0 0.0
  %210 = vmatpush1.msra.mxu0 %v50
  %211 = vmatprep.subr.mxu0 0.0
  %212 = vmatpush1.msra.mxu0 %v51
  %213 = vmatprep.subr.mxu0 0.0
  %214 = vmatpush1.msra.mxu0 %v52
  %215 = vmatprep.subr.mxu0 0.0
  %216 = vmatpush1.msra.mxu0 %v53
  %217 = vmatprep.subr.mxu0 0.0
  %218 = vmatpush1.msra.mxu0 %v54
  %219 = vmatprep.subr.mxu0 0.0
  %220 = vmatpush1.msra.mxu0 %v55
  %221 = vmatprep.subr.mxu0 0.0
  %222 = vmatpush1.msra.mxu0 %v56
  %223 = vmatprep.subr.mxu0 0.0
  %224 = vmatpush1.msra.mxu0 %v57
  %225 = vmatprep.mubr.f32.mxu0 %v19
  %226 = vmatmul.mubr.f32.gmra.mrb[0].mxu0 %v18
  %v227 = vpop.f32.mrb[0].mxu0
  %v228 = vadd.f32 %v159, %v227
  %v229 = vpop.f32.mrb[0].mxu0
  %230 = vdwg.mxu0
  %231 = vmatprep.subr.mxu0 0.0
  %232 = vmatpush1.msra.mxu0 %v58
  %233 = vmatprep.subr.mxu0 0.0
  %234 = vmatpush1.msra.mxu0 %v59
  %235 = vmatprep.subr.mxu0 0.0
  %236 = vmatpush1.msra.mxu0 %v60
  %237 = vmatprep.subr.mxu0 0.0
  %238 = vmatpush1.msra.mxu0 %v61
  %239 = vmatprep.subr.mxu0 0.0
  %240 = vmatpush1.msra.mxu0 %v62
  %241 = vmatprep.subr.mxu0 0.0
  %242 = vmatpush1.msra.mxu0 %v63
  %243 = vmatprep.subr.mxu0 0.0
  %244 = vmatpush1.msra.mxu0 %v64
  %245 = vmatprep.subr.mxu0 0.0
  %246 = vmatpush1.msra.mxu0 %v65
  %247 = vmatprep.subr.mxu0 0.0
  %248 = vmatpush1.msra.mxu0 %v66
  %249 = vmatprep.subr.mxu0 0.0
  %250 = vmatpush1.msra.mxu0 %v67
  %251 = vmatprep.subr.mxu0 0.0
  %252 = vmatpush1.msra.mxu0 %v68
  %253 = vmatprep.subr.mxu0 0.0
  %254 = vmatpush1.msra.mxu0 %v69
  %255 = vmatprep.subr.mxu0 0.0
  %256 = vmatpush1.msra.mxu0 %v70
  %257 = vmatprep.subr.mxu0 0.0
  %258 = vmatpush1.msra.mxu0 %v71
  %259 = vmatprep.subr.mxu0 0.0
  %260 = vmatpush1.msra.mxu0 %v72
  %261 = vmatprep.subr.mxu0 0.0
  %262 = vmatpush1.msra.mxu0 %v73
  %263 = vmatprep.subr.mxu0 0.0
  %264 = vmatpush1.msra.mxu0 %v74
  %265 = vmatprep.subr.mxu0 0.0
  %266 = vmatpush1.msra.mxu0 %v75
  %267 = vmatprep.subr.mxu0 0.0
  %268 = vmatpush1.msra.mxu0 %v76
  %269 = vmatprep.subr.mxu0 0.0
  %270 = vmatpush1.msra.mxu0 %v77
  %271 = vmatprep.subr.mxu0 0.0
  %272 = vmatpush1.msra.mxu0 %v78
  %273 = vmatprep.subr.mxu0 0.0
  %274 = vmatpush1.msra.mxu0 %v79
  %275 = vmatprep.subr.mxu0 0.0
  %276 = vmatpush1.msra.mxu0 %v80
  %277 = vmatprep.subr.mxu0 0.0
  %278 = vmatpush1.msra.mxu0 %v81
  %279 = vmatprep.subr.mxu0 0.0
  %280 = vmatpush1.msra.mxu0 %v82
  %281 = vmatprep.subr.mxu0 0.0
  %282 = vmatpush1.msra.mxu0 %v83
  %283 = vmatprep.subr.mxu0 0.0
  %284 = vmatpush1.msra.mxu0 %v84
  %285 = vmatprep.subr.mxu0 0.0
  %286 = vmatpush1.msra.mxu0 %v85
  %287 = vmatprep.subr.mxu0 0.0
  %288 = vmatpush1.msra.mxu0 %v86
  %289 = vmatprep.subr.mxu0 0.0
  %290 = vmatpush1.msra.mxu0 %v87
  %291 = vmatprep.subr.mxu0 0.0
  %292 = vmatpush1.msra.mxu0 %v88
  %293 = vmatprep.subr.mxu0 0.0
  %294 = vmatpush1.msra.mxu0 %v89
  %295 = vmatprep.mubr.f32.mxu0 %v21
  %296 = vmatmul.mubr.f32.gmra.mrb[0].mxu0 %v20
  %v297 = vpop.f32.mrb[0].mxu0
  %v298 = vadd.f32 %v228, %v297
  %v299 = vpop.f32.mrb[0].mxu0
  %300 = vdwg.mxu0
  %301 = vmatprep.subr.mxu0 0.0
  %302 = vmatpush1.msra.mxu0 %v90
  %303 = vmatprep.subr.mxu0 0.0
  %304 = vmatpush1.msra.mxu0 %v91
  %305 = vmatprep.subr.mxu0 0.0
  %306 = vmatpush1.msra.mxu0 %v92
  %307 = vmatprep.subr.mxu0 0.0
  %308 = vmatpush1.msra.mxu0 %v93
  %309 = vmatprep.subr.mxu0 0.0
  %310 = vmatpush1.msra.mxu0 %v94
  %311 = vmatprep.subr.mxu0 0.0
  %312 = vmatpush1.msra.mxu0 %v95
  %313 = vmatprep.subr.mxu0 0.0
  %314 = vmatpush1.msra.mxu0 %v96
  %315 = vmatprep.subr.mxu0 0.0
  %316 = vmatpush1.msra.mxu0 %v97
  %317 = vmatprep.subr.mxu0 0.0
  %318 = vmatpush1.msra.mxu0 %v98
  %319 = vmatprep.subr.mxu0 0.0
  %320 = vmatpush1.msra.mxu0 %v99
  %321 = vmatprep.subr.mxu0 0.0
  %322 = vmatpush1.msra.mxu0 %v100
  %323 = vmatprep.subr.mxu0 0.0
  %324 = vmatpush1.msra.mxu0 %v101
  %325 = vmatprep.subr.mxu0 0.0
  %326 = vmatpush1.msra.mxu0 %v102
  %327 = vmatprep.subr.mxu0 0.0
  %328 = vmatpush1.msra.mxu0 %v103
  %329 = vmatprep.subr.mxu0 0.0
  %330 = vmatpush1.msra.mxu0 %v104
  %331 = vmatprep.subr.mxu0 0.0
  %332 = vmatpush1.msra.mxu0 %v105
  %333 = vmatprep.subr.mxu0 0.0
  %334 = vmatpush1.msra.mxu0 %v106
  %335 = vmatprep.subr.mxu0 0.0
  %336 = vmatpush1.msra.mxu0 %v107
  %337 = vmatprep.subr.mxu0 0.0
  %338 = vmatpush1.msra.mxu0 %v108
  %339 = vmatprep.subr.mxu0 0.0
  %340 = vmatpush1.msra.mxu0 %v109
  %341 = vmatprep.subr.mxu0 0.0
  %342 = vmatpush1.msra.mxu0 %v110
  %343 = vmatprep.subr.mxu0 0.0
  %344 = vmatpush1.msra.mxu0 %v111
  %345 = vmatprep.subr.mxu0 0.0
  %346 = vmatpush1.msra.mxu0 %v112
  %347 = vmatprep.subr.mxu0 0.0
  %348 = vmatpush1.msra.mxu0 %v113
  %349 = vmatprep.subr.mxu0 0.0
  %350 = vmatpush1.msra.mxu0 %v114
  %351 = vmatprep.subr.mxu0 0.0
  %352 = vmatpush1.msra.mxu0 %v115
  %353 = vmatprep.subr.mxu0 0.0
  %354 = vmatpush1.msra.mxu0 %v116
  %355 = vmatprep.subr.mxu0 0.0
  %356 = vmatpush1.msra.mxu0 %v117
  %357 = vmatprep.subr.mxu0 0.0
  %358 = vmatpush1.msra.mxu0 %v118
  %359 = vmatprep.subr.mxu0 0.0
  %360 = vmatpush1.msra.mxu0 %v119
  %361 = vmatprep.subr.mxu0 0.0
  %362 = vmatpush1.msra.mxu0 %v120
  %363 = vmatprep.subr.mxu0 0.0
  %364 = vmatpush1.msra.mxu0 %v121
  %365 = vmatprep.mubr.f32.mxu0 %v23
  %366 = vmatmul.mubr.f32.gmra.mrb[0].mxu0 %v22
  %v367 = vpop.f32.mrb[0].mxu0
  %v368 = vadd.f32 %v298, %v367
  %v369 = vpop.f32.mrb[0].mxu0
  %370 = vdwg.mxu0
  %371 = vmatprep.subr.mxu0 0.0
  %372 = vmatpush1.msra.mxu0 %v122
  %373 = vmatprep.subr.mxu0 0.0
  %374 = vmatpush1.msra.mxu0 %v123
  %375 = vmatprep.subr.mxu0 0.0
  %376 = vmatpush1.msra.mxu0 %v124
  %377 = vmatprep.subr.mxu0 0.0
  %378 = vmatpush1.msra.mxu0 %v125
  %379 = vmatprep.subr.mxu0 0.0
  %380 = vmatpush1.msra.mxu0 %v126
  %381 = vmatprep.subr.mxu0 0.0
  %382 = vmatpush1.msra.mxu0 %v127
  %383 = vmatprep.subr.mxu0 0.0
  %384 = vmatpush1.msra.mxu0 %v128
  %385 = vmatprep.subr.mxu0 0.0
  %386 = vmatpush1.msra.mxu0 %v129
  %387 = vmatprep.subr.mxu0 0.0
  %388 = vmatpush1.msra.mxu0 %v130
  %389 = vmatprep.subr.mxu0 0.0
  %390 = vmatpush1.msra.mxu0 %v131
  %391 = vmatprep.subr.mxu0 0.0
  %392 = vmatpush1.msra.mxu0 %v132
  %393 = vmatprep.subr.mxu0 0.0
  %394 = vmatpush1.msra.mxu0 %v133
  %395 = vmatprep.subr.mxu0 0.0
  %396 = vmatpush1.msra.mxu0 %v134
  %397 = vmatprep.subr.mxu0 0.0
  %398 = vmatpush1.msra.mxu0 %v135
  %399 = vmatprep.subr.mxu0 0.0
  %400 = vmatpush1.msra.mxu0 %v136
  %401 = vmatprep.subr.mxu0 0.0
  %402 = vmatpush1.msra.mxu0 %v137
  %403 = vmatprep.subr.mxu0 0.0
  %404 = vmatpush1.msra.mxu0 %v138
  %405 = vmatprep.subr.mxu0 0.0
  %406 = vmatpush1.msra.mxu0 %v139
  %407 = vmatprep.subr.mxu0 0.0
  %408 = vmatpush1.msra.mxu0 %v140
  %409 = vmatprep.subr.mxu0 0.0
  %410 = vmatpush1.msra.mxu0 %v141
  %411 = vmatprep.subr.mxu0 0.0
  %412 = vmatpush1.msra.mxu0 %v142
  %413 = vmatprep.subr.mxu0 0.0
  %414 = vmatpush1.msra.mxu0 %v143
  %415 = vmatprep.subr.mxu0 0.0
  %416 = vmatpush1.msra.mxu0 %v144
  %417 = vmatprep.subr.mxu0 0.0
  %418 = vmatpush1.msra.mxu0 %v145
  %419 = vmatprep.subr.mxu0 0.0
  %420 = vmatpush1.msra.mxu0 %v146
  %421 = vmatprep.subr.mxu0 0.0
  %422 = vmatpush1.msra.mxu0 %v147
  %423 = vmatprep.subr.mxu0 0.0
  %424 = vmatpush1.msra.mxu0 %v148
  %425 = vmatprep.subr.mxu0 0.0
  %426 = vmatpush1.msra.mxu0 %v149
  %427 = vmatprep.subr.mxu0 0.0
  %428 = vmatpush1.msra.mxu0 %v150
  %429 = vmatprep.subr.mxu0 0.0
  %430 = vmatpush1.msra.mxu0 %v151
  %431 = vmatprep.subr.mxu0 0.0
  %432 = vmatpush1.msra.mxu0 %v152
  %433 = vmatprep.subr.mxu0 0.0
  %434 = vmatpush1.msra.mxu0 %v153
  %435 = vmatprep.mubr.f32.mxu0 %v25
  %436 = vmatmul.mubr.f32.gmra.mrb[0].mxu0 %v24
  %v437 = vpop.f32.mrb[0].mxu0
  %v438 = vadd.f32 %v368, %v437
  %v439 = vpop.f32.mrb[0].mxu0
  %440 = vdwg.mxu0
  %s441 = sld [smem:[#allocation2]]
  %vm442 = vcmp.ge.f32.partialorder %v438, 0.0
  %v443 = vstv %s441
  %v444 = vmul.f32 %v443, %v438
  %v445 = vsel %vm442, %v438, %v444
  %446 = vst [vmem:[%s4] sm:$0xff] %v445
  // Predicated region
  $region18: #{auto_encoder_forward.8} parent=0 // pred_check
    _
  $region19: #{auto_encoder_forward.8} parent=0 // pred_check_branch
    %448 = sbr.rel (0) target = $region21
  $region20: #{auto_encoder_forward.8} parent=0 // pred_region
    _
  $region21: #{auto_encoder_forward.8} parent=0 // pred_fallthru
    _
  // Predicated region
  $region22: #{auto_encoder_forward.8} parent=0 // pred_check
    _
  $region23: #{auto_encoder_forward.8} parent=0 // pred_check_branch
    %450 = sbr.rel (0) target = $region25
  $region24: #{auto_encoder_forward.8} parent=0 // pred_region
    _
  $region25: #{auto_encoder_forward.8} parent=0 // pred_fallthru
    _

// kernel: tile.18
$region0: #{tile.18}
  #allocation0 [shape = 's32[1]{0}', space=sflag, size = 0x4, scoped, tag = 'scoped memory for tile.18']
  %s0 = inlined_call_operand.vmem [shape: f32[64], index: 0, kind: input, shape index: {}]
  %s1 = inlined_call_operand.vmem [shape: f32[4,64], index: 1, kind: output, shape index: {}]
  // Predicated region
  $region2: #{tile.18} parent=0 // pred_check
    _
  $region3: #{tile.18} parent=0 // pred_check_branch
    %3 = sbr.rel (0) target = $region5
  $region4: #{tile.18} parent=0 // pred_region
    _
  $region5: #{tile.18} parent=0 // pred_fallthru
    _
  %v4 = vld [vmem:[%s0] ss:$0 sm:$0xff]
  %5 = vst [vmem:[%s1] sm:$0xf] %v4

// kernel: auto_encoder_forward.9
$region0: #{auto_encoder_forward.9}
  #allocation0 [shape = 'u32[]', space=smem, size = 0x4, offset = 0x4, fixed_abs, tag = 'smem constant byte address 0x4 - core index']
  #allocation1 [shape = 'u32[144,128]{1,0:T(1,128)}', space=vmem, size = 0x12000, scoped, tag = 'internal scratch']
  #allocation2 [shape = 'f32[1]{0:T(128)S(6)}', space=smem, size = 0x200, scoped, tag = 'scoped memory for auto_encoder_forward.9']
  %s0 = inlined_call_operand.vmem [shape: f32[8,256], index: 0, kind: input, shape index: {}]
  %s1 = inlined_call_operand.vmem [shape: f32[256,256], index: 1, kind: input, shape index: {}]
  %s2 = inlined_call_operand.vmem [shape: f32[1,256], index: 2, kind: input, shape index: {}]
  %s3 = inlined_call_operand.<no memory space> [shape: f32[1], index: 3, kind: input, shape index: {}]
  %s4 = inlined_call_operand.vmem [shape: f32[8,256], index: 4, kind: output, shape index: {}]
  %s5 = sld [smem:[#allocation0]]
  $region26: #{auto_encoder_forward.9} parent=0
    _
  %s7 = ssub.s32 1, %s5
  %s8 = scalar_select 0, %s7, %s5
  %9 = sst [smem:[#allocation2]] %s3
  // Predicated region
  $region2: #{auto_encoder_forward.9} parent=0 // pred_check
    _
  $region3: #{auto_encoder_forward.9} parent=0 // pred_check_branch
    %11 = sbr.rel (0) target = $region5
  $region4: #{auto_encoder_forward.9} parent=0 // pred_region
    _
  $region5: #{auto_encoder_forward.9} parent=0 // pred_fallthru
    _
  // Predicated region
  $region6: #{auto_encoder_forward.9} parent=0 // pred_check
    _
  $region7: #{auto_encoder_forward.9} parent=0 // pred_check_branch
    %13 = sbr.rel (0) target = $region9
  $region8: #{auto_encoder_forward.9} parent=0 // pred_region
    _
  $region9: #{auto_encoder_forward.9} parent=0 // pred_fallthru
    _
  // Predicated region
  $region10: #{auto_encoder_forward.9} parent=0 // pred_check
    _
  $region11: #{auto_encoder_forward.9} parent=0 // pred_check_branch
    %15 = sbr.rel (0) target = $region13
  $region12: #{auto_encoder_forward.9} parent=0 // pred_region
    _
  $region13: #{auto_encoder_forward.9} parent=0 // pred_fallthru
    _
  // Predicated region
  $region14: #{auto_encoder_forward.9} parent=0 // pred_check
    _
  $region15: #{auto_encoder_forward.9} parent=0 // pred_check_branch
    %17 = sbr.rel (0) target = $region17
  $region16: #{auto_encoder_forward.9} parent=0 // pred_region
    _
  $region17: #{auto_encoder_forward.9} parent=0 // pred_fallthru
    _
  %v18 = vld [vmem:[%s0] sm:$0xff]
  %v19 = vld [vmem:[%s0 + $0x8] sm:$0xff]
  %v20 = vld [vmem:[%s1] sm:$0xff]
  %v21 = vld [vmem:[%s1 + $0x8] sm:$0xff]
  %v22 = vld [vmem:[%s1 + $0x10] sm:$0xff]
  %v23 = vld [vmem:[%s1 + $0x18] sm:$0xff]
  %v24 = vld [vmem:[%s1 + $0x20] sm:$0xff]
  %v25 = vld [vmem:[%s1 + $0x28] sm:$0xff]
  %v26 = vld [vmem:[%s1 + $0x30] sm:$0xff]
  %v27 = vld [vmem:[%s1 + $0x38] sm:$0xff]
  %v28 = vld [vmem:[%s1 + $0x40] sm:$0xff]
  %v29 = vld [vmem:[%s1 + $0x48] sm:$0xff]
  %v30 = vld [vmem:[%s1 + $0x50] sm:$0xff]
  %v31 = vld [vmem:[%s1 + $0x58] sm:$0xff]
  %v32 = vld [vmem:[%s1 + $0x60] sm:$0xff]
  %v33 = vld [vmem:[%s1 + $0x68] sm:$0xff]
  %v34 = vld [vmem:[%s1 + $0x70] sm:$0xff]
  %v35 = vld [vmem:[%s1 + $0x78] sm:$0xff]
  %v36 = vld [vmem:[%s1 + $0x80] sm:$0xff]
  %v37 = vld [vmem:[%s1 + $0x88] sm:$0xff]
  %v38 = vld [vmem:[%s1 + $0x90] sm:$0xff]
  %v39 = vld [vmem:[%s1 + $0x98] sm:$0xff]
  %v40 = vld [vmem:[%s1 + $0xa0] sm:$0xff]
  %v41 = vld [vmem:[%s1 + $0xa8] sm:$0xff]
  %v42 = vld [vmem:[%s1 + $0xb0] sm:$0xff]
  %v43 = vld [vmem:[%s1 + $0xb8] sm:$0xff]
  %v44 = vld [vmem:[%s1 + $0xc0] sm:$0xff]
  %v45 = vld [vmem:[%s1 + $0xc8] sm:$0xff]
  %v46 = vld [vmem:[%s1 + $0xd0] sm:$0xff]
  %v47 = vld [vmem:[%s1 + $0xd8] sm:$0xff]
  %v48 = vld [vmem:[%s1 + $0xe0] sm:$0xff]
  %v49 = vld [vmem:[%s1 + $0xe8] sm:$0xff]
  %v50 = vld [vmem:[%s1 + $0xf0] sm:$0xff]
  %v51 = vld [vmem:[%s1 + $0xf8] sm:$0xff]
  %v52 = vld [vmem:[%s1 + $0x100] sm:$0xff]
  %v53 = vld [vmem:[%s1 + $0x108] sm:$0xff]
  %v54 = vld [vmem:[%s1 + $0x110] sm:$0xff]
  %v55 = vld [vmem:[%s1 + $0x118] sm:$0xff]
  %v56 = vld [vmem:[%s1 + $0x120] sm:$0xff]
  %v57 = vld [vmem:[%s1 + $0x128] sm:$0xff]
  %v58 = vld [vmem:[%s1 + $0x130] sm:$0xff]
  %v59 = vld [vmem:[%s1 + $0x138] sm:$0xff]
  %v60 = vld [vmem:[%s1 + $0x140] sm:$0xff]
  %v61 = vld [vmem:[%s1 + $0x148] sm:$0xff]
  %v62 = vld [vmem:[%s1 + $0x150] sm:$0xff]
  %v63 = vld [vmem:[%s1 + $0x158] sm:$0xff]
  %v64 = vld [vmem:[%s1 + $0x160] sm:$0xff]
  %v65 = vld [vmem:[%s1 + $0x168] sm:$0xff]
  %v66 = vld [vmem:[%s1 + $0x170] sm:$0xff]
  %v67 = vld [vmem:[%s1 + $0x178] sm:$0xff]
  %v68 = vld [vmem:[%s1 + $0x180] sm:$0xff]
  %v69 = vld [vmem:[%s1 + $0x188] sm:$0xff]
  %v70 = vld [vmem:[%s1 + $0x190] sm:$0xff]
  %v71 = vld [vmem:[%s1 + $0x198] sm:$0xff]
  %v72 = vld [vmem:[%s1 + $0x1a0] sm:$0xff]
  %v73 = vld [vmem:[%s1 + $0x1a8] sm:$0xff]
  %v74 = vld [vmem:[%s1 + $0x1b0] sm:$0xff]
  %v75 = vld [vmem:[%s1 + $0x1b8] sm:$0xff]
  %v76 = vld [vmem:[%s1 + $0x1c0] sm:$0xff]
  %v77 = vld [vmem:[%s1 + $0x1c8] sm:$0xff]
  %v78 = vld [vmem:[%s1 + $0x1d0] sm:$0xff]
  %v79 = vld [vmem:[%s1 + $0x1d8] sm:$0xff]
  %v80 = vld [vmem:[%s1 + $0x1e0] sm:$0xff]
  %v81 = vld [vmem:[%s1 + $0x1e8] sm:$0xff]
  %v82 = vld [vmem:[%s1 + $0x1f0] sm:$0xff]
  %v83 = vld [vmem:[%s1 + $0x1f8] sm:$0xff]
  %v84 = vld [vmem:[%s2] sm:$0x3]
  %v86 = vlaneseq
  %v87 = vshrl.u32 %v86, 7
  %v88 = vsub.s32 0, %v87
  %v89 = vrot.slane %v84, %v88
  %v90 = vlaneseq
  %v91 = vshrl.u32 %v90, 7
  %v92 = vsub.s32 1, %v91
  %v93 = vrot.slane %v84, %v92
  %96 = vmatprep.subr.mxu0 %v21
  %97 = vmatpush1.msra.mxu0 %v20
  %98 = vmatprep.subr.mxu0 %v23
  %99 = vmatpush1.msra.mxu0 %v22
  %100 = vmatprep.subr.mxu0 %v25
  %101 = vmatpush1.msra.mxu0 %v24
  %102 = vmatprep.subr.mxu0 %v27
  %103 = vmatpush1.msra.mxu0 %v26
  %104 = vmatprep.subr.mxu0 %v29
  %105 = vmatpush1.msra.mxu0 %v28
  %106 = vmatprep.subr.mxu0 %v31
  %107 = vmatpush1.msra.mxu0 %v30
  %108 = vmatprep.subr.mxu0 %v33
  %109 = vmatpush1.msra.mxu0 %v32
  %110 = vmatprep.subr.mxu0 %v35
  %111 = vmatpush1.msra.mxu0 %v34
  %112 = vmatprep.subr.mxu0 %v37
  %113 = vmatpush1.msra.mxu0 %v36
  %114 = vmatprep.subr.mxu0 %v39
  %115 = vmatpush1.msra.mxu0 %v38
  %116 = vmatprep.subr.mxu0 %v41
  %117 = vmatpush1.msra.mxu0 %v40
  %118 = vmatprep.subr.mxu0 %v43
  %119 = vmatpush1.msra.mxu0 %v42
  %120 = vmatprep.subr.mxu0 %v45
  %121 = vmatpush1.msra.mxu0 %v44
  %122 = vmatprep.subr.mxu0 %v47
  %123 = vmatpush1.msra.mxu0 %v46
  %124 = vmatprep.subr.mxu0 %v49
  %125 = vmatpush1.msra.mxu0 %v48
  %126 = vmatprep.subr.mxu0 %v51
  %127 = vmatpush1.msra.mxu0 %v50
  %128 = vmatprep.subr.mxu0 %v53
  %129 = vmatpush1.msra.mxu0 %v52
  %130 = vmatprep.subr.mxu0 %v55
  %131 = vmatpush1.msra.mxu0 %v54
  %132 = vmatprep.subr.mxu0 %v57
  %133 = vmatpush1.msra.mxu0 %v56
  %134 = vmatprep.subr.mxu0 %v59
  %135 = vmatpush1.msra.mxu0 %v58
  %136 = vmatprep.subr.mxu0 %v61
  %137 = vmatpush1.msra.mxu0 %v60
  %138 = vmatprep.subr.mxu0 %v63
  %139 = vmatpush1.msra.mxu0 %v62
  %140 = vmatprep.subr.mxu0 %v65
  %141 = vmatpush1.msra.mxu0 %v64
  %142 = vmatprep.subr.mxu0 %v67
  %143 = vmatpush1.msra.mxu0 %v66
  %144 = vmatprep.subr.mxu0 %v69
  %145 = vmatpush1.msra.mxu0 %v68
  %146 = vmatprep.subr.mxu0 %v71
  %147 = vmatpush1.msra.mxu0 %v70
  %148 = vmatprep.subr.mxu0 %v73
  %149 = vmatpush1.msra.mxu0 %v72
  %150 = vmatprep.subr.mxu0 %v75
  %151 = vmatpush1.msra.mxu0 %v74
  %152 = vmatprep.subr.mxu0 %v77
  %153 = vmatpush1.msra.mxu0 %v76
  %154 = vmatprep.subr.mxu0 %v79
  %155 = vmatpush1.msra.mxu0 %v78
  %156 = vmatprep.subr.mxu0 %v81
  %157 = vmatpush1.msra.mxu0 %v80
  %158 = vmatprep.subr.mxu0 %v83
  %159 = vmatpush1.msra.mxu0 %v82
  %160 = vmatprep.mubr.f32.mxu0 %v19
  %161 = vmatmul.mubr.f32.gmra.mrb[0].mxu0 %v18
  %v162 = vpop.f32.mrb[0].mxu0
  %v163 = vadd.f32 %v89, %v162
  %v164 = vpop.f32.mrb[0].mxu0
  %v165 = vadd.f32 %v93, %v164
  %166 = vdwg.mxu0
  %s167 = sld [smem:[#allocation2]]
  %vm168 = vcmp.ge.f32.partialorder %v163, 0.0
  %vm169 = vcmp.ge.f32.partialorder %v165, 0.0
  %v170 = vstv %s167
  %v171 = vmul.f32 %v170, %v163
  %v172 = vmul.f32 %v170, %v165
  %v173 = vsel %vm168, %v163, %v171
  %v174 = vsel %vm169, %v165, %v172
  %175 = vst [vmem:[%s4] sm:$0xff] %v173
  %176 = vst [vmem:[%s4 + $0x8] sm:$0xff] %v174
  // Predicated region
  $region18: #{auto_encoder_forward.9} parent=0 // pred_check
    _
  $region19: #{auto_encoder_forward.9} parent=0 // pred_check_branch
    %178 = sbr.rel (0) target = $region21
  $region20: #{auto_encoder_forward.9} parent=0 // pred_region
    _
  $region21: #{auto_encoder_forward.9} parent=0 // pred_fallthru
    _
  // Predicated region
  $region22: #{auto_encoder_forward.9} parent=0 // pred_check
    _
  $region23: #{auto_encoder_forward.9} parent=0 // pred_check_branch
    %180 = sbr.rel (0) target = $region25
  $region24: #{auto_encoder_forward.9} parent=0 // pred_region
    _
  $region25: #{auto_encoder_forward.9} parent=0 // pred_fallthru
    _

// kernel: tile.23
$region0: #{tile.23}
  #allocation0 [shape = 's32[1]{0}', space=sflag, size = 0x4, scoped, tag = 'scoped memory for tile.23']
  %s0 = inlined_call_operand.vmem [shape: f32[128], index: 0, kind: input, shape index: {}]
  %s1 = inlined_call_operand.vmem [shape: f32[4,128], index: 1, kind: output, shape index: {}]
  // Predicated region
  $region2: #{tile.23} parent=0 // pred_check
    _
  $region3: #{tile.23} parent=0 // pred_check_branch
    %3 = sbr.rel (0) target = $region5
  $region4: #{tile.23} parent=0 // pred_region
    _
  $region5: #{tile.23} parent=0 // pred_fallthru
    _
  %v4 = vld [vmem:[%s0] ss:$0 sm:$0xff]
  %5 = vst [vmem:[%s1] sm:$0xf] %v4

// kernel: auto_encoder_forward.10
$region0: #{auto_encoder_forward.10}
  #allocation0 [shape = 'u32[]', space=smem, size = 0x4, offset = 0x4, fixed_abs, tag = 'smem constant byte address 0x4 - core index']
  #allocation1 [shape = 'u32[144,128]{1,0:T(1,128)}', space=vmem, size = 0x12000, scoped, tag = 'internal scratch']
  #allocation2 [shape = 'f32[1]{0:T(128)S(6)}', space=smem, size = 0x200, scoped, tag = 'scoped memory for auto_encoder_forward.10']
  %s0 = inlined_call_operand.vmem [shape: f32[64,256], index: 0, kind: input, shape index: {}]
  %s1 = inlined_call_operand.vmem [shape: f32[256,512], index: 1, kind: input, shape index: {}]
  %s2 = inlined_call_operand.vmem [shape: f32[1,512], index: 2, kind: input, shape index: {}]
  %s3 = inlined_call_operand.<no memory space> [shape: f32[1], index: 3, kind: input, shape index: {}]
  %s4 = inlined_call_operand.vmem [shape: f32[64,512], index: 4, kind: output, shape index: {}]
  %s5 = sld [smem:[#allocation0]]
  $region26: #{auto_encoder_forward.10} parent=0
    _
  %s7 = ssub.s32 1, %s5
  %s8 = scalar_select 0, %s7, %s5
  %9 = sst [smem:[#allocation2]] %s3
  // Predicated region
  $region2: #{auto_encoder_forward.10} parent=0 // pred_check
    _
  $region3: #{auto_encoder_forward.10} parent=0 // pred_check_branch
    %11 = sbr.rel (0) target = $region5
  $region4: #{auto_encoder_forward.10} parent=0 // pred_region
    _
  $region5: #{auto_encoder_forward.10} parent=0 // pred_fallthru
    _
  // Predicated region
  $region6: #{auto_encoder_forward.10} parent=0 // pred_check
    _
  $region7: #{auto_encoder_forward.10} parent=0 // pred_check_branch
    %13 = sbr.rel (0) target = $region9
  $region8: #{auto_encoder_forward.10} parent=0 // pred_region
    _
  $region9: #{auto_encoder_forward.10} parent=0 // pred_fallthru
    _
  // Predicated region
  $region10: #{auto_encoder_forward.10} parent=0 // pred_check
    _
  $region11: #{auto_encoder_forward.10} parent=0 // pred_check_branch
    %15 = sbr.rel (0) target = $region13
  $region12: #{auto_encoder_forward.10} parent=0 // pred_region
    _
  $region13: #{auto_encoder_forward.10} parent=0 // pred_fallthru
    _
  // Predicated region
  $region14: #{auto_encoder_forward.10} parent=0 // pred_check
    _
  $region15: #{auto_encoder_forward.10} parent=0 // pred_check_branch
    %17 = sbr.rel (0) target = $region17
  $region16: #{auto_encoder_forward.10} parent=0 // pred_region
    _
  $region17: #{auto_encoder_forward.10} parent=0 // pred_fallthru
    _
  %v18 = vld [vmem:[%s0] sm:$0xff]
  %v19 = vld [vmem:[%s0 + $0x8] sm:$0xff]
  %v20 = vld [vmem:[%s0 + $0x10] sm:$0xff]
  %v21 = vld [vmem:[%s0 + $0x18] sm:$0xff]
  %v22 = vld [vmem:[%s0 + $0x20] sm:$0xff]
  %v23 = vld [vmem:[%s0 + $0x28] sm:$0xff]
  %v24 = vld [vmem:[%s0 + $0x30] sm:$0xff]
  %v25 = vld [vmem:[%s0 + $0x38] sm:$0xff]
  %v26 = vld [vmem:[%s0 + $0x40] sm:$0xff]
  %v27 = vld [vmem:[%s0 + $0x48] sm:$0xff]
  %v28 = vld [vmem:[%s0 + $0x50] sm:$0xff]
  %v29 = vld [vmem:[%s0 + $0x58] sm:$0xff]
  %v30 = vld [vmem:[%s0 + $0x60] sm:$0xff]
  %v31 = vld [vmem:[%s0 + $0x68] sm:$0xff]
  %v32 = vld [vmem:[%s0 + $0x70] sm:$0xff]
  %v33 = vld [vmem:[%s0 + $0x78] sm:$0xff]
  %v34 = vld [vmem:[%s1] sm:$0xff]
  %v35 = vld [vmem:[%s1 + $0x8] sm:$0xff]
  %v36 = vld [vmem:[%s1 + $0x10] sm:$0xff]
  %v37 = vld [vmem:[%s1 + $0x18] sm:$0xff]
  %v38 = vld [vmem:[%s1 + $0x20] sm:$0xff]
  %v39 = vld [vmem:[%s1 + $0x28] sm:$0xff]
  %v40 = vld [vmem:[%s1 + $0x30] sm:$0xff]
  %v41 = vld [vmem:[%s1 + $0x38] sm:$0xff]
  %v42 = vld [vmem:[%s1 + $0x40] sm:$0xff]
  %v43 = vld [vmem:[%s1 + $0x48] sm:$0xff]
  %v44 = vld [vmem:[%s1 + $0x50] sm:$0xff]
  %v45 = vld [vmem:[%s1 + $0x58] sm:$0xff]
  %v46 = vld [vmem:[%s1 + $0x60] sm:$0xff]
  %v47 = vld [vmem:[%s1 + $0x68] sm:$0xff]
  %v48 = vld [vmem:[%s1 + $0x70] sm:$0xff]
  %v49 = vld [vmem:[%s1 + $0x78] sm:$0xff]
  %v50 = vld [vmem:[%s1 + $0x80] sm:$0xff]
  %v51 = vld [vmem:[%s1 + $0x88] sm:$0xff]
  %v52 = vld [vmem:[%s1 + $0x90] sm:$0xff]
  %v53 = vld [vmem:[%s1 + $0x98] sm:$0xff]
  %v54 = vld [vmem:[%s1 + $0xa0] sm:$0xff]
  %v55 = vld [vmem:[%s1 + $0xa8] sm:$0xff]
  %v56 = vld [vmem:[%s1 + $0xb0] sm:$0xff]
  %v57 = vld [vmem:[%s1 + $0xb8] sm:$0xff]
  %v58 = vld [vmem:[%s1 + $0xc0] sm:$0xff]
  %v59 = vld [vmem:[%s1 + $0xc8] sm:$0xff]
  %v60 = vld [vmem:[%s1 + $0xd0] sm:$0xff]
  %v61 = vld [vmem:[%s1 + $0xd8] sm:$0xff]
  %v62 = vld [vmem:[%s1 + $0xe0] sm:$0xff]
  %v63 = vld [vmem:[%s1 + $0xe8] sm:$0xff]
  %v64 = vld [vmem:[%s1 + $0xf0] sm:$0xff]
  %v65 = vld [vmem:[%s1 + $0xf8] sm:$0xff]
  %v66 = vld [vmem:[%s1 + $0x100] sm:$0xff]
  %v67 = vld [vmem:[%s1 + $0x108] sm:$0xff]
  %v68 = vld [vmem:[%s1 + $0x110] sm:$0xff]
  %v69 = vld [vmem:[%s1 + $0x118] sm:$0xff]
  %v70 = vld [vmem:[%s1 + $0x120] sm:$0xff]
  %v71 = vld [vmem:[%s1 + $0x128] sm:$0xff]
  %v72 = vld [vmem:[%s1 + $0x130] sm:$0xff]
  %v73 = vld [vmem:[%s1 + $0x138] sm:$0xff]
  %v74 = vld [vmem:[%s1 + $0x140] sm:$0xff]
  %v75 = vld [vmem:[%s1 + $0x148] sm:$0xff]
  %v76 = vld [vmem:[%s1 + $0x150] sm:$0xff]
  %v77 = vld [vmem:[%s1 + $0x158] sm:$0xff]
  %v78 = vld [vmem:[%s1 + $0x160] sm:$0xff]
  %v79 = vld [vmem:[%s1 + $0x168] sm:$0xff]
  %v80 = vld [vmem:[%s1 + $0x170] sm:$0xff]
  %v81 = vld [vmem:[%s1 + $0x178] sm:$0xff]
  %v82 = vld [vmem:[%s1 + $0x180] sm:$0xff]
  %v83 = vld [vmem:[%s1 + $0x188] sm:$0xff]
  %v84 = vld [vmem:[%s1 + $0x190] sm:$0xff]
  %v85 = vld [vmem:[%s1 + $0x198] sm:$0xff]
  %v86 = vld [vmem:[%s1 + $0x1a0] sm:$0xff]
  %v87 = vld [vmem:[%s1 + $0x1a8] sm:$0xff]
  %v88 = vld [vmem:[%s1 + $0x1b0] sm:$0xff]
  %v89 = vld [vmem:[%s1 + $0x1b8] sm:$0xff]
  %v90 = vld [vmem:[%s1 + $0x1c0] sm:$0xff]
  %v91 = vld [vmem:[%s1 + $0x1c8] sm:$0xff]
  %v92 = vld [vmem:[%s1 + $0x1d0] sm:$0xff]
  %v93 = vld [vmem:[%s1 + $0x1d8] sm:$0xff]
  %v94 = vld [vmem:[%s1 + $0x1e0] sm:$0xff]
  %v95 = vld [vmem:[%s1 + $0x1e8] sm:$0xff]
  %v96 = vld [vmem:[%s1 + $0x1f0] sm:$0xff]
  %v97 = vld [vmem:[%s1 + $0x1f8] sm:$0xff]
  %v98 = vld [vmem:[%s1 + $0x200] sm:$0xff]
  %v99 = vld [vmem:[%s1 + $0x208] sm:$0xff]
  %v100 = vld [vmem:[%s1 + $0x210] sm:$0xff]
  %v101 = vld [vmem:[%s1 + $0x218] sm:$0xff]
  %v102 = vld [vmem:[%s1 + $0x220] sm:$0xff]
  %v103 = vld [vmem:[%s1 + $0x228] sm:$0xff]
  %v104 = vld [vmem:[%s1 + $0x230] sm:$0xff]
  %v105 = vld [vmem:[%s1 + $0x238] sm:$0xff]
  %v106 = vld [vmem:[%s1 + $0x240] sm:$0xff]
  %v107 = vld [vmem:[%s1 + $0x248] sm:$0xff]
  %v108 = vld [vmem:[%s1 + $0x250] sm:$0xff]
  %v109 = vld [vmem:[%s1 + $0x258] sm:$0xff]
  %v110 = vld [vmem:[%s1 + $0x260] sm:$0xff]
  %v111 = vld [vmem:[%s1 + $0x268] sm:$0xff]
  %v112 = vld [vmem:[%s1 + $0x270] sm:$0xff]
  %v113 = vld [vmem:[%s1 + $0x278] sm:$0xff]
  %v114 = vld [vmem:[%s1 + $0x280] sm:$0xff]
  %v115 = vld [vmem:[%s1 + $0x288] sm:$0xff]
  %v116 = vld [vmem:[%s1 + $0x290] sm:$0xff]
  %v117 = vld [vmem:[%s1 + $0x298] sm:$0xff]
  %v118 = vld [vmem:[%s1 + $0x2a0] sm:$0xff]
  %v119 = vld [vmem:[%s1 + $0x2a8] sm:$0xff]
  %v120 = vld [vmem:[%s1 + $0x2b0] sm:$0xff]
  %v121 = vld [vmem:[%s1 + $0x2b8] sm:$0xff]
  %v122 = vld [vmem:[%s1 + $0x2c0] sm:$0xff]
  %v123 = vld [vmem:[%s1 + $0x2c8] sm:$0xff]
  %v124 = vld [vmem:[%s1 + $0x2d0] sm:$0xff]
  %v125 = vld [vmem:[%s1 + $0x2d8] sm:$0xff]
  %v126 = vld [vmem:[%s1 + $0x2e0] sm:$0xff]
  %v127 = vld [vmem:[%s1 + $0x2e8] sm:$0xff]
  %v128 = vld [vmem:[%s1 + $0x2f0] sm:$0xff]
  %v129 = vld [vmem:[%s1 + $0x2f8] sm:$0xff]
  %v130 = vld [vmem:[%s1 + $0x300] sm:$0xff]
  %v131 = vld [vmem:[%s1 + $0x308] sm:$0xff]
  %v132 = vld [vmem:[%s1 + $0x310] sm:$0xff]
  %v133 = vld [vmem:[%s1 + $0x318] sm:$0xff]
  %v134 = vld [vmem:[%s1 + $0x320] sm:$0xff]
  %v135 = vld [vmem:[%s1 + $0x328] sm:$0xff]
  %v136 = vld [vmem:[%s1 + $0x330] sm:$0xff]
  %v137 = vld [vmem:[%s1 + $0x338] sm:$0xff]
  %v138 = vld [vmem:[%s1 + $0x340] sm:$0xff]
  %v139 = vld [vmem:[%s1 + $0x348] sm:$0xff]
  %v140 = vld [vmem:[%s1 + $0x350] sm:$0xff]
  %v141 = vld [vmem:[%s1 + $0x358] sm:$0xff]
  %v142 = vld [vmem:[%s1 + $0x360] sm:$0xff]
  %v143 = vld [vmem:[%s1 + $0x368] sm:$0xff]
  %v144 = vld [vmem:[%s1 + $0x370] sm:$0xff]
  %v145 = vld [vmem:[%s1 + $0x378] sm:$0xff]
  %v146 = vld [vmem:[%s1 + $0x380] sm:$0xff]
  %v147 = vld [vmem:[%s1 + $0x388] sm:$0xff]
  %v148 = vld [vmem:[%s1 + $0x390] sm:$0xff]
  %v149 = vld [vmem:[%s1 + $0x398] sm:$0xff]
  %v150 = vld [vmem:[%s1 + $0x3a0] sm:$0xff]
  %v151 = vld [vmem:[%s1 + $0x3a8] sm:$0xff]
  %v152 = vld [vmem:[%s1 + $0x3b0] sm:$0xff]
  %v153 = vld [vmem:[%s1 + $0x3b8] sm:$0xff]
  %v154 = vld [vmem:[%s1 + $0x3c0] sm:$0xff]
  %v155 = vld [vmem:[%s1 + $0x3c8] sm:$0xff]
  %v156 = vld [vmem:[%s1 + $0x3d0] sm:$0xff]
  %v157 = vld [vmem:[%s1 + $0x3d8] sm:$0xff]
  %v158 = vld [vmem:[%s1 + $0x3e0] sm:$0xff]
  %v159 = vld [vmem:[%s1 + $0x3e8] sm:$0xff]
  %v160 = vld [vmem:[%s1 + $0x3f0] sm:$0xff]
  %v161 = vld [vmem:[%s1 + $0x3f8] sm:$0xff]
  %v162 = vld [vmem:[%s2] sm:$0xf]
  %v164 = vlaneseq
  %v165 = vshrl.u32 %v164, 7
  %v166 = vsub.s32 0, %v165
  %v167 = vrot.slane %v162, %v166
  %v168 = vlaneseq
  %v169 = vshrl.u32 %v168, 7
  %v170 = vsub.s32 1, %v169
  %v171 = vrot.slane %v162, %v170
  %v172 = vlaneseq
  %v173 = vshrl.u32 %v172, 7
  %v174 = vsub.s32 2, %v173
  %v175 = vrot.slane %v162, %v174
  %v176 = vlaneseq
  %v177 = vshrl.u32 %v176, 7
  %v178 = vsub.s32 3, %v177
  %v179 = vrot.slane %v162, %v178
  %184 = vmatprep.subr.mxu0 %v35
  %185 = vmatpush1.msra.mxu0 %v34
  %186 = vmatprep.subr.mxu0 %v39
  %187 = vmatpush1.msra.mxu0 %v38
  %188 = vmatprep.subr.mxu0 %v43
  %189 = vmatpush1.msra.mxu0 %v42
  %190 = vmatprep.subr.mxu0 %v47
  %191 = vmatpush1.msra.mxu0 %v46
  %192 = vmatprep.subr.mxu0 %v51
  %193 = vmatpush1.msra.mxu0 %v50
  %194 = vmatprep.subr.mxu0 %v55
  %195 = vmatpush1.msra.mxu0 %v54
  %196 = vmatprep.subr.mxu0 %v59
  %197 = vmatpush1.msra.mxu0 %v58
  %198 = vmatprep.subr.mxu0 %v63
  %199 = vmatpush1.msra.mxu0 %v62
  %200 = vmatprep.subr.mxu0 %v67
  %201 = vmatpush1.msra.mxu0 %v66
  %202 = vmatprep.subr.mxu0 %v71
  %203 = vmatpush1.msra.mxu0 %v70
  %204 = vmatprep.subr.mxu0 %v75
  %205 = vmatpush1.msra.mxu0 %v74
  %206 = vmatprep.subr.mxu0 %v79
  %207 = vmatpush1.msra.mxu0 %v78
  %208 = vmatprep.subr.mxu0 %v83
  %209 = vmatpush1.msra.mxu0 %v82
  %210 = vmatprep.subr.mxu0 %v87
  %211 = vmatpush1.msra.mxu0 %v86
  %212 = vmatprep.subr.mxu0 %v91
  %213 = vmatpush1.msra.mxu0 %v90
  %214 = vmatprep.subr.mxu0 %v95
  %215 = vmatpush1.msra.mxu0 %v94
  %216 = vmatprep.subr.mxu0 %v99
  %217 = vmatpush1.msra.mxu0 %v98
  %218 = vmatprep.subr.mxu0 %v103
  %219 = vmatpush1.msra.mxu0 %v102
  %220 = vmatprep.subr.mxu0 %v107
  %221 = vmatpush1.msra.mxu0 %v106
  %222 = vmatprep.subr.mxu0 %v111
  %223 = vmatpush1.msra.mxu0 %v110
  %224 = vmatprep.subr.mxu0 %v115
  %225 = vmatpush1.msra.mxu0 %v114
  %226 = vmatprep.subr.mxu0 %v119
  %227 = vmatpush1.msra.mxu0 %v118
  %228 = vmatprep.subr.mxu0 %v123
  %229 = vmatpush1.msra.mxu0 %v122
  %230 = vmatprep.subr.mxu0 %v127
  %231 = vmatpush1.msra.mxu0 %v126
  %232 = vmatprep.subr.mxu0 %v131
  %233 = vmatpush1.msra.mxu0 %v130
  %234 = vmatprep.subr.mxu0 %v135
  %235 = vmatpush1.msra.mxu0 %v134
  %236 = vmatprep.subr.mxu0 %v139
  %237 = vmatpush1.msra.mxu0 %v138
  %238 = vmatprep.subr.mxu0 %v143
  %239 = vmatpush1.msra.mxu0 %v142
  %240 = vmatprep.subr.mxu0 %v147
  %241 = vmatpush1.msra.mxu0 %v146
  %242 = vmatprep.subr.mxu0 %v151
  %243 = vmatpush1.msra.mxu0 %v150
  %244 = vmatprep.subr.mxu0 %v155
  %245 = vmatpush1.msra.mxu0 %v154
  %246 = vmatprep.subr.mxu0 %v159
  %247 = vmatpush1.msra.mxu0 %v158
  %248 = vmatprep.mubr.f32.mxu0 %v19
  %249 = vmatmul.mubr.f32.gmra.mrb[0].mxu0 %v18
  %v250 = vpop.f32.mrb[0].mxu0
  %v251 = vadd.f32 %v167, %v250
  %v252 = vpop.f32.mrb[0].mxu0
  %v253 = vadd.f32 %v171, %v252
  %254 = vmatprep.mubr.f32.mxu0 %v21
  %255 = vmatmul.mubr.f32.gmra.mrb[0].mxu0 %v20
  %v256 = vpop.f32.mrb[0].mxu0
  %v257 = vadd.f32 %v167, %v256
  %v258 = vpop.f32.mrb[0].mxu0
  %v259 = vadd.f32 %v171, %v258
  %260 = vmatprep.mubr.f32.mxu0 %v23
  %261 = vmatmul.mubr.f32.gmra.mrb[0].mxu0 %v22
  %v262 = vpop.f32.mrb[0].mxu0
  %v263 = vadd.f32 %v167, %v262
  %v264 = vpop.f32.mrb[0].mxu0
  %v265 = vadd.f32 %v171, %v264
  %266 = vmatprep.mubr.f32.mxu0 %v25
  %267 = vmatmul.mubr.f32.gmra.mrb[0].mxu0 %v24
  %v268 = vpop.f32.mrb[0].mxu0
  %v269 = vadd.f32 %v167, %v268
  %v270 = vpop.f32.mrb[0].mxu0
  %v271 = vadd.f32 %v171, %v270
  %272 = vmatprep.mubr.f32.mxu0 %v27
  %273 = vmatmul.mubr.f32.gmra.mrb[0].mxu0 %v26
  %v274 = vpop.f32.mrb[0].mxu0
  %v275 = vadd.f32 %v167, %v274
  %v276 = vpop.f32.mrb[0].mxu0
  %v277 = vadd.f32 %v171, %v276
  %278 = vmatprep.mubr.f32.mxu0 %v29
  %279 = vmatmul.mubr.f32.gmra.mrb[0].mxu0 %v28
  %v280 = vpop.f32.mrb[0].mxu0
  %v281 = vadd.f32 %v167, %v280
  %v282 = vpop.f32.mrb[0].mxu0
  %v283 = vadd.f32 %v171, %v282
  %284 = vmatprep.mubr.f32.mxu0 %v31
  %285 = vmatmul.mubr.f32.gmra.mrb[0].mxu0 %v30
  %v286 = vpop.f32.mrb[0].mxu0
  %v287 = vadd.f32 %v167, %v286
  %v288 = vpop.f32.mrb[0].mxu0
  %v289 = vadd.f32 %v171, %v288
  %290 = vmatprep.mubr.f32.mxu0 %v33
  %291 = vmatmul.mubr.f32.gmra.mrb[0].mxu0 %v32
  %v292 = vpop.f32.mrb[0].mxu0
  %v293 = vadd.f32 %v167, %v292
  %v294 = vpop.f32.mrb[0].mxu0
  %v295 = vadd.f32 %v171, %v294
  %296 = vdwg.mxu0
  %297 = vmatprep.subr.mxu0 %v37
  %298 = vmatpush1.msra.mxu0 %v36
  %299 = vmatprep.subr.mxu0 %v41
  %300 = vmatpush1.msra.mxu0 %v40
  %301 = vmatprep.subr.mxu0 %v45
  %302 = vmatpush1.msra.mxu0 %v44
  %303 = vmatprep.subr.mxu0 %v49
  %304 = vmatpush1.msra.mxu0 %v48
  %305 = vmatprep.subr.mxu0 %v53
  %306 = vmatpush1.msra.mxu0 %v52
  %307 = vmatprep.subr.mxu0 %v57
  %308 = vmatpush1.msra.mxu0 %v56
  %309 = vmatprep.subr.mxu0 %v61
  %310 = vmatpush1.msra.mxu0 %v60
  %311 = vmatprep.subr.mxu0 %v65
  %312 = vmatpush1.msra.mxu0 %v64
  %313 = vmatprep.subr.mxu0 %v69
  %314 = vmatpush1.msra.mxu0 %v68
  %315 = vmatprep.subr.mxu0 %v73
  %316 = vmatpush1.msra.mxu0 %v72
  %317 = vmatprep.subr.mxu0 %v77
  %318 = vmatpush1.msra.mxu0 %v76
  %319 = vmatprep.subr.mxu0 %v81
  %320 = vmatpush1.msra.mxu0 %v80
  %321 = vmatprep.subr.mxu0 %v85
  %322 = vmatpush1.msra.mxu0 %v84
  %323 = vmatprep.subr.mxu0 %v89
  %324 = vmatpush1.msra.mxu0 %v88
  %325 = vmatprep.subr.mxu0 %v93
  %326 = vmatpush1.msra.mxu0 %v92
  %327 = vmatprep.subr.mxu0 %v97
  %328 = vmatpush1.msra.mxu0 %v96
  %329 = vmatprep.subr.mxu0 %v101
  %330 = vmatpush1.msra.mxu0 %v100
  %331 = vmatprep.subr.mxu0 %v105
  %332 = vmatpush1.msra.mxu0 %v104
  %333 = vmatprep.subr.mxu0 %v109
  %334 = vmatpush1.msra.mxu0 %v108
  %335 = vmatprep.subr.mxu0 %v113
  %336 = vmatpush1.msra.mxu0 %v112
  %337 = vmatprep.subr.mxu0 %v117
  %338 = vmatpush1.msra.mxu0 %v116
  %339 = vmatprep.subr.mxu0 %v121
  %340 = vmatpush1.msra.mxu0 %v120
  %341 = vmatprep.subr.mxu0 %v125
  %342 = vmatpush1.msra.mxu0 %v124
  %343 = vmatprep.subr.mxu0 %v129
  %344 = vmatpush1.msra.mxu0 %v128
  %345 = vmatprep.subr.mxu0 %v133
  %346 = vmatpush1.msra.mxu0 %v132
  %347 = vmatprep.subr.mxu0 %v137
  %348 = vmatpush1.msra.mxu0 %v136
  %349 = vmatprep.subr.mxu0 %v141
  %350 = vmatpush1.msra.mxu0 %v140
  %351 = vmatprep.subr.mxu0 %v145
  %352 = vmatpush1.msra.mxu0 %v144
  %353 = vmatprep.subr.mxu0 %v149
  %354 = vmatpush1.msra.mxu0 %v148
  %355 = vmatprep.subr.mxu0 %v153
  %356 = vmatpush1.msra.mxu0 %v152
  %357 = vmatprep.subr.mxu0 %v157
  %358 = vmatpush1.msra.mxu0 %v156
  %359 = vmatprep.subr.mxu0 %v161
  %360 = vmatpush1.msra.mxu0 %v160
  %361 = vmatprep.mubr.f32.mxu0 %v19
  %362 = vmatmul.mubr.f32.gmra.mrb[0].mxu0 %v18
  %v363 = vpop.f32.mrb[0].mxu0
  %v364 = vadd.f32 %v175, %v363
  %v365 = vpop.f32.mrb[0].mxu0
  %v366 = vadd.f32 %v179, %v365
  %367 = vmatprep.mubr.f32.mxu0 %v21
  %368 = vmatmul.mubr.f32.gmra.mrb[0].mxu0 %v20
  %v369 = vpop.f32.mrb[0].mxu0
  %v370 = vadd.f32 %v175, %v369
  %v371 = vpop.f32.mrb[0].mxu0
  %v372 = vadd.f32 %v179, %v371
  %373 = vmatprep.mubr.f32.mxu0 %v23
  %374 = vmatmul.mubr.f32.gmra.mrb[0].mxu0 %v22
  %v375 = vpop.f32.mrb[0].mxu0
  %v376 = vadd.f32 %v175, %v375
  %v377 = vpop.f32.mrb[0].mxu0
  %v378 = vadd.f32 %v179, %v377
  %379 = vmatprep.mubr.f32.mxu0 %v25
  %380 = vmatmul.mubr.f32.gmra.mrb[0].mxu0 %v24
  %v381 = vpop.f32.mrb[0].mxu0
  %v382 = vadd.f32 %v175, %v381
  %v383 = vpop.f32.mrb[0].mxu0
  %v384 = vadd.f32 %v179, %v383
  %385 = vmatprep.mubr.f32.mxu0 %v27
  %386 = vmatmul.mubr.f32.gmra.mrb[0].mxu0 %v26
  %v387 = vpop.f32.mrb[0].mxu0
  %v388 = vadd.f32 %v175, %v387
  %v389 = vpop.f32.mrb[0].mxu0
  %v390 = vadd.f32 %v179, %v389
  %391 = vmatprep.mubr.f32.mxu0 %v29
  %392 = vmatmul.mubr.f32.gmra.mrb[0].mxu0 %v28
  %v393 = vpop.f32.mrb[0].mxu0
  %v394 = vadd.f32 %v175, %v393
  %v395 = vpop.f32.mrb[0].mxu0
  %v396 = vadd.f32 %v179, %v395
  %397 = vmatprep.mubr.f32.mxu0 %v31
  %398 = vmatmul.mubr.f32.gmra.mrb[0].mxu0 %v30
  %v399 = vpop.f32.mrb[0].mxu0
  %v400 = vadd.f32 %v175, %v399
  %v401 = vpop.f32.mrb[0].mxu0
  %v402 = vadd.f32 %v179, %v401
  %403 = vmatprep.mubr.f32.mxu0 %v33
  %404 = vmatmul.mubr.f32.gmra.mrb[0].mxu0 %v32
  %v405 = vpop.f32.mrb[0].mxu0
  %v406 = vadd.f32 %v175, %v405
  %v407 = vpop.f32.mrb[0].mxu0
  %v408 = vadd.f32 %v179, %v407
  %409 = vdwg.mxu0
  %s410 = sld [smem:[#allocation2]]
  %vm411 = vcmp.ge.f32.partialorder %v251, 0.0
  %vm412 = vcmp.ge.f32.partialorder %v253, 0.0
  %vm413 = vcmp.ge.f32.partialorder %v364, 0.0
  %vm414 = vcmp.ge.f32.partialorder %v366, 0.0
  %vm415 = vcmp.ge.f32.partialorder %v257, 0.0
  %vm416 = vcmp.ge.f32.partialorder %v259, 0.0
  %vm417 = vcmp.ge.f32.partialorder %v370, 0.0
  %vm418 = vcmp.ge.f32.partialorder %v372, 0.0
  %vm419 = vcmp.ge.f32.partialorder %v263, 0.0
  %vm420 = vcmp.ge.f32.partialorder %v265, 0.0
  %vm421 = vcmp.ge.f32.partialorder %v376, 0.0
  %vm422 = vcmp.ge.f32.partialorder %v378, 0.0
  %vm423 = vcmp.ge.f32.partialorder %v269, 0.0
  %vm424 = vcmp.ge.f32.partialorder %v271, 0.0
  %vm425 = vcmp.ge.f32.partialorder %v382, 0.0
  %vm426 = vcmp.ge.f32.partialorder %v384, 0.0
  %vm427 = vcmp.ge.f32.partialorder %v275, 0.0
  %vm428 = vcmp.ge.f32.partialorder %v277, 0.0
  %vm429 = vcmp.ge.f32.partialorder %v388, 0.0
  %vm430 = vcmp.ge.f32.partialorder %v390, 0.0
  %vm431 = vcmp.ge.f32.partialorder %v281, 0.0
  %vm432 = vcmp.ge.f32.partialorder %v283, 0.0
  %vm433 = vcmp.ge.f32.partialorder %v394, 0.0
  %vm434 = vcmp.ge.f32.partialorder %v396, 0.0
  %vm435 = vcmp.ge.f32.partialorder %v287, 0.0
  %vm436 = vcmp.ge.f32.partialorder %v289, 0.0
  %vm437 = vcmp.ge.f32.partialorder %v400, 0.0
  %vm438 = vcmp.ge.f32.partialorder %v402, 0.0
  %vm439 = vcmp.ge.f32.partialorder %v293, 0.0
  %vm440 = vcmp.ge.f32.partialorder %v295, 0.0
  %vm441 = vcmp.ge.f32.partialorder %v406, 0.0
  %vm442 = vcmp.ge.f32.partialorder %v408, 0.0
  %v443 = vstv %s410
  %v444 = vmul.f32 %v443, %v251
  %v445 = vmul.f32 %v443, %v253
  %v446 = vmul.f32 %v443, %v364
  %v447 = vmul.f32 %v443, %v366
  %v448 = vmul.f32 %v443, %v257
  %v449 = vmul.f32 %v443, %v259
  %v450 = vmul.f32 %v443, %v370
  %v451 = vmul.f32 %v443, %v372
  %v452 = vmul.f32 %v443, %v263
  %v453 = vmul.f32 %v443, %v265
  %v454 = vmul.f32 %v443, %v376
  %v455 = vmul.f32 %v443, %v378
  %v456 = vmul.f32 %v443, %v269
  %v457 = vmul.f32 %v443, %v271
  %v458 = vmul.f32 %v443, %v382
  %v459 = vmul.f32 %v443, %v384
  %v460 = vmul.f32 %v443, %v275
  %v461 = vmul.f32 %v443, %v277
  %v462 = vmul.f32 %v443, %v388
  %v463 = vmul.f32 %v443, %v390
  %v464 = vmul.f32 %v443, %v281
  %v465 = vmul.f32 %v443, %v283
  %v466 = vmul.f32 %v443, %v394
  %v467 = vmul.f32 %v443, %v396
  %v468 = vmul.f32 %v443, %v287
  %v469 = vmul.f32 %v443, %v289
  %v470 = vmul.f32 %v443, %v400
  %v471 = vmul.f32 %v443, %v402
  %v472 = vmul.f32 %v443, %v293
  %v473 = vmul.f32 %v443, %v295
  %v474 = vmul.f32 %v443, %v406
  %v475 = vmul.f32 %v443, %v408
  %v476 = vsel %vm411, %v251, %v444
  %v477 = vsel %vm412, %v253, %v445
  %v478 = vsel %vm413, %v364, %v446
  %v479 = vsel %vm414, %v366, %v447
  %v480 = vsel %vm415, %v257, %v448
  %v481 = vsel %vm416, %v259, %v449
  %v482 = vsel %vm417, %v370, %v450
  %v483 = vsel %vm418, %v372, %v451
  %v484 = vsel %vm419, %v263, %v452
  %v485 = vsel %vm420, %v265, %v453
  %v486 = vsel %vm421, %v376, %v454
  %v487 = vsel %vm422, %v378, %v455
  %v488 = vsel %vm423, %v269, %v456
  %v489 = vsel %vm424, %v271, %v457
  %v490 = vsel %vm425, %v382, %v458
  %v491 = vsel %vm426, %v384, %v459
  %v492 = vsel %vm427, %v275, %v460
  %v493 = vsel %vm428, %v277, %v461
  %v494 = vsel %vm429, %v388, %v462
  %v495 = vsel %vm430, %v390, %v463
  %v496 = vsel %vm431, %v281, %v464
  %v497 = vsel %vm432, %v283, %v465
  %v498 = vsel %vm433, %v394, %v466
  %v499 = vsel %vm434, %v396, %v467
  %v500 = vsel %vm435, %v287, %v468
  %v501 = vsel %vm436, %v289, %v469
  %v502 = vsel %vm437, %v400, %v470
  %v503 = vsel %vm438, %v402, %v471
  %v504 = vsel %vm439, %v293, %v472
  %v505 = vsel %vm440, %v295, %v473
  %v506 = vsel %vm441, %v406, %v474
  %v507 = vsel %vm442, %v408, %v475
  %508 = vst [vmem:[%s4] sm:$0xff] %v476
  %509 = vst [vmem:[%s4 + $0x8] sm:$0xff] %v477
  %510 = vst [vmem:[%s4 + $0x10] sm:$0xff] %v478
  %511 = vst [vmem:[%s4 + $0x18] sm:$0xff] %v479
  %512 = vst [vmem:[%s4 + $0x20] sm:$0xff] %v480
  %513 = vst [vmem:[%s4 + $0x28] sm:$0xff] %v481
  %514 = vst [vmem:[%s4 + $0x30] sm:$0xff] %v482
  %515 = vst [vmem:[%s4 + $0x38] sm:$0xff] %v483
  %516 = vst [vmem:[%s4 + $0x40] sm:$0xff] %v484
  %517 = vst [vmem:[%s4 + $0x48] sm:$0xff] %v485
  %518 = vst [vmem:[%s4 + $0x50] sm:$0xff] %v486
  %519 = vst [vmem:[%s4 + $0x58] sm:$0xff] %v487
  %520 = vst [vmem:[%s4 + $0x60] sm:$0xff] %v488
  %521 = vst [vmem:[%s4 + $0x68] sm:$0xff] %v489
  %522 = vst [vmem:[%s4 + $0x70] sm:$0xff] %v490
  %523 = vst [vmem:[%s4 + $0x78] sm:$0xff] %v491
  %524 = vst [vmem:[%s4 + $0x80] sm:$0xff] %v492
  %525 = vst [vmem:[%s4 + $0x88] sm:$0xff] %v493
  %526 = vst [vmem:[%s4 + $0x90] sm:$0xff] %v494
  %527 = vst [vmem:[%s4 + $0x98] sm:$0xff] %v495
  %528 = vst [vmem:[%s4 + $0xa0] sm:$0xff] %v496
  %529 = vst [vmem:[%s4 + $0xa8] sm:$0xff] %v497
  %530 = vst [vmem:[%s4 + $0xb0] sm:$0xff] %v498
  %531 = vst [vmem:[%s4 + $0xb8] sm:$0xff] %v499
  %532 = vst [vmem:[%s4 + $0xc0] sm:$0xff] %v500
  %533 = vst [vmem:[%s4 + $0xc8] sm:$0xff] %v501
  %534 = vst [vmem:[%s4 + $0xd0] sm:$0xff] %v502
  %535 = vst [vmem:[%s4 + $0xd8] sm:$0xff] %v503
  %536 = vst [vmem:[%s4 + $0xe0] sm:$0xff] %v504
  %537 = vst [vmem:[%s4 + $0xe8] sm:$0xff] %v505
  %538 = vst [vmem:[%s4 + $0xf0] sm:$0xff] %v506
  %539 = vst [vmem:[%s4 + $0xf8] sm:$0xff] %v507
  // Predicated region
  $region18: #{auto_encoder_forward.10} parent=0 // pred_check
    _
  $region19: #{auto_encoder_forward.10} parent=0 // pred_check_branch
    %541 = sbr.rel (0) target = $region21
  $region20: #{auto_encoder_forward.10} parent=0 // pred_region
    _
  $region21: #{auto_encoder_forward.10} parent=0 // pred_fallthru
    _
  // Predicated region
  $region22: #{auto_encoder_forward.10} parent=0 // pred_check
    _
  $region23: #{auto_encoder_forward.10} parent=0 // pred_check_branch
    %543 = sbr.rel (0) target = $region25
  $region24: #{auto_encoder_forward.10} parent=0 // pred_region
    _
  $region25: #{auto_encoder_forward.10} parent=0 // pred_fallthru
    _

// kernel: tile.28
$region0: #{tile.28}
  #allocation0 [shape = 's32[1]{0}', space=sflag, size = 0x4, scoped, tag = 'scoped memory for tile.28']
  %s0 = inlined_call_operand.vmem [shape: f32[3], index: 0, kind: input, shape index: {}]
  %s1 = inlined_call_operand.vmem [shape: f32[16,3], index: 1, kind: output, shape index: {}]
  // Predicated region
  $region2: #{tile.28} parent=0 // pred_check
    _
  $region3: #{tile.28} parent=0 // pred_check_branch
    %3 = sbr.rel (0) target = $region5
  $region4: #{tile.28} parent=0 // pred_region
    _
  $region5: #{tile.28} parent=0 // pred_fallthru
    _
  %v4 = vld [vmem:[%s0] ss:$0 sm:$0xff]
  %5 = vst [vmem:[%s1] sm:$0xff] %v4
  %s6 = scalar_lea.vmem %s1, 8
  %7 = vst [vmem:[%s6] sm:$0xff] %v4

// kernel: tile.29
$region0: #{tile.29}
  %s0 = inlined_call_operand.vmem [shape: f32[16,3], index: 0, kind: input, shape index: {}]
  %s1 = inlined_call_operand.vmem [shape: f32[48], index: 1, kind: output, shape index: {}]
  $region1: #{tile.29} parent=0
    #allocation0 [shape = 'u8[4096]{0}', space=vmem, size = 0x1000, scoped, tag = 'scoped mem for output reshape']
    %v2 = vld [vmem:[%s0] sm:$0x1]
    %vm3 = vcmask 23552
    %4 = vst.msk [vmem:[#allocation0] sm:$0x1] %vm3, %v2
    %s5 = scalar_lea.vmem %s0, 15
    %v6 = vld [vmem:[%s5] sm:$0x1]
    %7 = vrot.lane.b32.xlu0 %v6, 45
    %v8 = vpop.permute.xlu0 %7
    %vm9 = vcmask 392552
    %10 = vst.msk [vmem:[#allocation0] sm:$0x1] %vm9, %v8
    %s11 = scalar_lea.vmem %s0, 14
    %v12 = vld [vmem:[%s11] sm:$0x1]
    %13 = vrot.lane.b32.xlu0 %v12, 42
    %v14 = vpop.permute.xlu0 %13
    %vm15 = vcmask 367952
    %16 = vst.msk [vmem:[#allocation0] sm:$0x1] %vm15, %v14
    %s17 = scalar_lea.vmem %s0, 13
    %v18 = vld [vmem:[%s17] sm:$0x1]
    %19 = vrot.lane.b32.xlu0 %v18, 39
    %v20 = vpop.permute.xlu0 %19
    %vm21 = vcmask 343352
    %22 = vst.msk [vmem:[#allocation0] sm:$0x1] %vm21, %v20
    %s23 = scalar_lea.vmem %s0, 12
    %v24 = vld [vmem:[%s23] sm:$0x1]
    %25 = vrot.lane.b32.xlu0 %v24, 36
    %v26 = vpop.permute.xlu0 %25
    %vm27 = vcmask 318752
    %28 = vst.msk [vmem:[#allocation0] sm:$0x1] %vm27, %v26
    %s29 = scalar_lea.vmem %s0, 11
    %v30 = vld [vmem:[%s29] sm:$0x1]
    %31 = vrot.lane.b32.xlu0 %v30, 33
    %v32 = vpop.permute.xlu0 %31
    %vm33 = vcmask 294152
    %34 = vst.msk [vmem:[#allocation0] sm:$0x1] %vm33, %v32
    %s35 = scalar_lea.vmem %s0, 10
    %v36 = vld [vmem:[%s35] sm:$0x1]
    %37 = vrot.lane.b32.xlu0 %v36, 30
    %v38 = vpop.permute.xlu0 %37
    %vm39 = vcmask 269552
    %40 = vst.msk [vmem:[#allocation0] sm:$0x1] %vm39, %v38
    %s41 = scalar_lea.vmem %s0, 9
    %v42 = vld [vmem:[%s41] sm:$0x1]
    %43 = vrot.lane.b32.xlu0 %v42, 27
    %v44 = vpop.permute.xlu0 %43
    %vm45 = vcmask 244952
    %46 = vst.msk [vmem:[#allocation0] sm:$0x1] %vm45, %v44
    %s47 = scalar_lea.vmem %s0, 8
    %v48 = vld [vmem:[%s47] sm:$0x1]
    %49 = vrot.lane.b32.xlu0 %v48, 24
    %v50 = vpop.permute.xlu0 %49
    %vm51 = vcmask 220352
    %52 = vst.msk [vmem:[#allocation0] sm:$0x1] %vm51, %v50
    %s53 = scalar_lea.vmem %s0, 7
    %v54 = vld [vmem:[%s53] sm:$0x1]
    %55 = vrot.lane.b32.xlu0 %v54, 21
    %v56 = vpop.permute.xlu0 %55
    %vm57 = vcmask 195752
    %58 = vst.msk [vmem:[#allocation0] sm:$0x1] %vm57, %v56
    %s59 = scalar_lea.vmem %s0, 6
    %v60 = vld [vmem:[%s59] sm:$0x1]
    %61 = vrot.lane.b32.xlu0 %v60, 18
    %v62 = vpop.permute.xlu0 %61
    %vm63 = vcmask 171152
    %64 = vst.msk [vmem:[#allocation0] sm:$0x1] %vm63, %v62
    %s65 = scalar_lea.vmem %s0, 5
    %v66 = vld [vmem:[%s65] sm:$0x1]
    %67 = vrot.lane.b32.xlu0 %v66, 15
    %v68 = vpop.permute.xlu0 %67
    %vm69 = vcmask 146552
    %70 = vst.msk [vmem:[#allocation0] sm:$0x1] %vm69, %v68
    %s71 = scalar_lea.vmem %s0, 4
    %v72 = vld [vmem:[%s71] sm:$0x1]
    %73 = vrot.lane.b32.xlu0 %v72, 12
    %v74 = vpop.permute.xlu0 %73
    %vm75 = vcmask 121952
    %76 = vst.msk [vmem:[#allocation0] sm:$0x1] %vm75, %v74
    %s77 = scalar_lea.vmem %s0, 3
    %v78 = vld [vmem:[%s77] sm:$0x1]
    %79 = vrot.lane.b32.xlu0 %v78, 9
    %v80 = vpop.permute.xlu0 %79
    %vm81 = vcmask 97352
    %82 = vst.msk [vmem:[#allocation0] sm:$0x1] %vm81, %v80
    %s83 = scalar_lea.vmem %s0, 2
    %v84 = vld [vmem:[%s83] sm:$0x1]
    %85 = vrot.lane.b32.xlu0 %v84, 6
    %v86 = vpop.permute.xlu0 %85
    %vm87 = vcmask 72752
    %88 = vst.msk [vmem:[#allocation0] sm:$0x1] %vm87, %v86
    %s89 = scalar_lea.vmem %s0, 1
    %v90 = vld [vmem:[%s89] sm:$0x1]
    %91 = vrot.lane.b32.xlu0 %v90, 3
    %v92 = vpop.permute.xlu0 %91
    %vm93 = vcmask 48152
    %94 = vst.msk [vmem:[#allocation0] sm:$0x1] %vm93, %v92
    %s96 = sshllo.u32 0, 1
    %v98 = vld [vmem:[#allocation0] sm:%s96]
    %s99 = sshllo.u32 0, 1
    %100 = vst [vmem:[%s1] sm:%s99] %v98

// kernel: auto_encoder_forward.11
$region0: #{auto_encoder_forward.11}
  #allocation0 [shape = 'u32[]', space=smem, size = 0x4, offset = 0x4, fixed_abs, tag = 'smem constant byte address 0x4 - core index']
  #allocation1 [shape = 'u32[144,128]{1,0:T(1,128)}', space=vmem, size = 0x12000, scoped, tag = 'internal scratch']
  #allocation2 [shape = 'f32[1]{0:T(128)S(6)}', space=smem, size = 0x200, scoped, tag = 'scoped memory for auto_encoder_forward.11']
  %s0 = inlined_call_operand.vmem [shape: f32[312,512], index: 0, kind: input, shape index: {}]
  %s1 = inlined_call_operand.vmem [shape: f32[512,128], index: 1, kind: input, shape index: {}]
  %s2 = inlined_call_operand.vmem [shape: f32[1,128], index: 2, kind: input, shape index: {}]
  %s3 = inlined_call_operand.<no memory space> [shape: f32[1], index: 3, kind: input, shape index: {}]
  %s4 = inlined_call_operand.vmem [shape: f32[312,128], index: 4, kind: output, shape index: {}]
  %s5 = sld [smem:[#allocation0]]
  $region26: #{auto_encoder_forward.11} parent=0
    _
  %s7 = ssub.s32 1, %s5
  %s8 = scalar_select 0, %s7, %s5
  %9 = sst [smem:[#allocation2]] %s3
  // Predicated region
  $region2: #{auto_encoder_forward.11} parent=0 // pred_check
    _
  $region3: #{auto_encoder_forward.11} parent=0 // pred_check_branch
    %11 = sbr.rel (0) target = $region5
  $region4: #{auto_encoder_forward.11} parent=0 // pred_region
    _
  $region5: #{auto_encoder_forward.11} parent=0 // pred_fallthru
    _
  // Predicated region
  $region6: #{auto_encoder_forward.11} parent=0 // pred_check
    _
  $region7: #{auto_encoder_forward.11} parent=0 // pred_check_branch
    %13 = sbr.rel (0) target = $region9
  $region8: #{auto_encoder_forward.11} parent=0 // pred_region
    _
  $region9: #{auto_encoder_forward.11} parent=0 // pred_fallthru
    _
  // Predicated region
  $region10: #{auto_encoder_forward.11} parent=0 // pred_check
    _
  $region11: #{auto_encoder_forward.11} parent=0 // pred_check_branch
    %15 = sbr.rel (0) target = $region13
  $region12: #{auto_encoder_forward.11} parent=0 // pred_region
    _
  $region13: #{auto_encoder_forward.11} parent=0 // pred_fallthru
    _
  // Predicated region
  $region14: #{auto_encoder_forward.11} parent=0 // pred_check
    _
  $region15: #{auto_encoder_forward.11} parent=0 // pred_check_branch
    %17 = sbr.rel (0) target = $region17
  $region16: #{auto_encoder_forward.11} parent=0 // pred_region
    _
  $region17: #{auto_encoder_forward.11} parent=0 // pred_fallthru
    _
  %v18 = vld [vmem:[%s0] sm:$0xff]
  %v19 = vld [vmem:[%s0 + $0x8] sm:$0xff]
  %v20 = vld [vmem:[%s0 + $0x10] sm:$0xff]
  %v21 = vld [vmem:[%s0 + $0x18] sm:$0xff]
  %v22 = vld [vmem:[%s0 + $0x20] sm:$0xff]
  %v23 = vld [vmem:[%s0 + $0x28] sm:$0xff]
  %v24 = vld [vmem:[%s0 + $0x30] sm:$0xff]
  %v25 = vld [vmem:[%s0 + $0x38] sm:$0xff]
  %v26 = vld [vmem:[%s0 + $0x40] sm:$0xff]
  %v27 = vld [vmem:[%s0 + $0x48] sm:$0xff]
  %v28 = vld [vmem:[%s0 + $0x50] sm:$0xff]
  %v29 = vld [vmem:[%s0 + $0x58] sm:$0xff]
  %v30 = vld [vmem:[%s0 + $0x60] sm:$0xff]
  %v31 = vld [vmem:[%s0 + $0x68] sm:$0xff]
  %v32 = vld [vmem:[%s0 + $0x70] sm:$0xff]
  %v33 = vld [vmem:[%s0 + $0x78] sm:$0xff]
  %v34 = vld [vmem:[%s0 + $0x80] sm:$0xff]
  %v35 = vld [vmem:[%s0 + $0x88] sm:$0xff]
  %v36 = vld [vmem:[%s0 + $0x90] sm:$0xff]
  %v37 = vld [vmem:[%s0 + $0x98] sm:$0xff]
  %v38 = vld [vmem:[%s0 + $0xa0] sm:$0xff]
  %v39 = vld [vmem:[%s0 + $0xa8] sm:$0xff]
  %v40 = vld [vmem:[%s0 + $0xb0] sm:$0xff]
  %v41 = vld [vmem:[%s0 + $0xb8] sm:$0xff]
  %v42 = vld [vmem:[%s0 + $0xc0] sm:$0xff]
  %v43 = vld [vmem:[%s0 + $0xc8] sm:$0xff]
  %v44 = vld [vmem:[%s0 + $0xd0] sm:$0xff]
  %v45 = vld [vmem:[%s0 + $0xd8] sm:$0xff]
  %v46 = vld [vmem:[%s0 + $0xe0] sm:$0xff]
  %v47 = vld [vmem:[%s0 + $0xe8] sm:$0xff]
  %v48 = vld [vmem:[%s0 + $0xf0] sm:$0xff]
  %v49 = vld [vmem:[%s0 + $0xf8] sm:$0xff]
  %v50 = vld [vmem:[%s0 + $0x100] sm:$0xff]
  %v51 = vld [vmem:[%s0 + $0x108] sm:$0xff]
  %v52 = vld [vmem:[%s0 + $0x110] sm:$0xff]
  %v53 = vld [vmem:[%s0 + $0x118] sm:$0xff]
  %v54 = vld [vmem:[%s0 + $0x120] sm:$0xff]
  %v55 = vld [vmem:[%s0 + $0x128] sm:$0xff]
  %v56 = vld [vmem:[%s0 + $0x130] sm:$0xff]
  %v57 = vld [vmem:[%s0 + $0x138] sm:$0xff]
  %v58 = vld [vmem:[%s0 + $0x140] sm:$0xff]
  %v59 = vld [vmem:[%s0 + $0x148] sm:$0xff]
  %v60 = vld [vmem:[%s0 + $0x150] sm:$0xff]
  %v61 = vld [vmem:[%s0 + $0x158] sm:$0xff]
  %v62 = vld [vmem:[%s0 + $0x160] sm:$0xff]
  %v63 = vld [vmem:[%s0 + $0x168] sm:$0xff]
  %v64 = vld [vmem:[%s0 + $0x170] sm:$0xff]
  %v65 = vld [vmem:[%s0 + $0x178] sm:$0xff]
  %v66 = vld [vmem:[%s0 + $0x180] sm:$0xff]
  %v67 = vld [vmem:[%s0 + $0x188] sm:$0xff]
  %v68 = vld [vmem:[%s0 + $0x190] sm:$0xff]
  %v69 = vld [vmem:[%s0 + $0x198] sm:$0xff]
  %v70 = vld [vmem:[%s0 + $0x1a0] sm:$0xff]
  %v71 = vld [vmem:[%s0 + $0x1a8] sm:$0xff]
  %v72 = vld [vmem:[%s0 + $0x1b0] sm:$0xff]
  %v73 = vld [vmem:[%s0 + $0x1b8] sm:$0xff]
  %v74 = vld [vmem:[%s0 + $0x1c0] sm:$0xff]
  %v75 = vld [vmem:[%s0 + $0x1c8] sm:$0xff]
  %v76 = vld [vmem:[%s0 + $0x1d0] sm:$0xff]
  %v77 = vld [vmem:[%s0 + $0x1d8] sm:$0xff]
  %v78 = vld [vmem:[%s0 + $0x1e0] sm:$0xff]
  %v79 = vld [vmem:[%s0 + $0x1e8] sm:$0xff]
  %v80 = vld [vmem:[%s0 + $0x1f0] sm:$0xff]
  %v81 = vld [vmem:[%s0 + $0x1f8] sm:$0xff]
  %v82 = vld [vmem:[%s0 + $0x200] sm:$0xff]
  %v83 = vld [vmem:[%s0 + $0x208] sm:$0xff]
  %v84 = vld [vmem:[%s0 + $0x210] sm:$0xff]
  %v85 = vld [vmem:[%s0 + $0x218] sm:$0xff]
  %v86 = vld [vmem:[%s0 + $0x220] sm:$0xff]
  %v87 = vld [vmem:[%s0 + $0x228] sm:$0xff]
  %v88 = vld [vmem:[%s0 + $0x230] sm:$0xff]
  %v89 = vld [vmem:[%s0 + $0x238] sm:$0xff]
  %v90 = vld [vmem:[%s0 + $0x240] sm:$0xff]
  %v91 = vld [vmem:[%s0 + $0x248] sm:$0xff]
  %v92 = vld [vmem:[%s0 + $0x250] sm:$0xff]
  %v93 = vld [vmem:[%s0 + $0x258] sm:$0xff]
  %v94 = vld [vmem:[%s0 + $0x260] sm:$0xff]
  %v95 = vld [vmem:[%s0 + $0x268] sm:$0xff]
  %v96 = vld [vmem:[%s0 + $0x270] sm:$0xff]
  %v97 = vld [vmem:[%s0 + $0x278] sm:$0xff]
  %v98 = vld [vmem:[%s0 + $0x280] sm:$0xff]
  %v99 = vld [vmem:[%s0 + $0x288] sm:$0xff]
  %v100 = vld [vmem:[%s0 + $0x290] sm:$0xff]
  %v101 = vld [vmem:[%s0 + $0x298] sm:$0xff]
  %v102 = vld [vmem:[%s0 + $0x2a0] sm:$0xff]
  %v103 = vld [vmem:[%s0 + $0x2a8] sm:$0xff]
  %v104 = vld [vmem:[%s0 + $0x2b0] sm:$0xff]
  %v105 = vld [vmem:[%s0 + $0x2b8] sm:$0xff]
  %v106 = vld [vmem:[%s0 + $0x2c0] sm:$0xff]
  %v107 = vld [vmem:[%s0 + $0x2c8] sm:$0xff]
  %v108 = vld [vmem:[%s0 + $0x2d0] sm:$0xff]
  %v109 = vld [vmem:[%s0 + $0x2d8] sm:$0xff]
  %v110 = vld [vmem:[%s0 + $0x2e0] sm:$0xff]
  %v111 = vld [vmem:[%s0 + $0x2e8] sm:$0xff]
  %v112 = vld [vmem:[%s0 + $0x2f0] sm:$0xff]
  %v113 = vld [vmem:[%s0 + $0x2f8] sm:$0xff]
  %v114 = vld [vmem:[%s0 + $0x300] sm:$0xff]
  %v115 = vld [vmem:[%s0 + $0x308] sm:$0xff]
  %v116 = vld [vmem:[%s0 + $0x310] sm:$0xff]
  %v117 = vld [vmem:[%s0 + $0x318] sm:$0xff]
  %v118 = vld [vmem:[%s0 + $0x320] sm:$0xff]
  %v119 = vld [vmem:[%s0 + $0x328] sm:$0xff]
  %v120 = vld [vmem:[%s0 + $0x330] sm:$0xff]
  %v121 = vld [vmem:[%s0 + $0x338] sm:$0xff]
  %v122 = vld [vmem:[%s0 + $0x340] sm:$0xff]
  %v123 = vld [vmem:[%s0 + $0x348] sm:$0xff]
  %v124 = vld [vmem:[%s0 + $0x350] sm:$0xff]
  %v125 = vld [vmem:[%s0 + $0x358] sm:$0xff]
  %v126 = vld [vmem:[%s0 + $0x360] sm:$0xff]
  %v127 = vld [vmem:[%s0 + $0x368] sm:$0xff]
  %v128 = vld [vmem:[%s0 + $0x370] sm:$0xff]
  %v129 = vld [vmem:[%s0 + $0x378] sm:$0xff]
  %v130 = vld [vmem:[%s0 + $0x380] sm:$0xff]
  %v131 = vld [vmem:[%s0 + $0x388] sm:$0xff]
  %v132 = vld [vmem:[%s0 + $0x390] sm:$0xff]
  %v133 = vld [vmem:[%s0 + $0x398] sm:$0xff]
  %v134 = vld [vmem:[%s0 + $0x3a0] sm:$0xff]
  %v135 = vld [vmem:[%s0 + $0x3a8] sm:$0xff]
  %v136 = vld [vmem:[%s0 + $0x3b0] sm:$0xff]
  %v137 = vld [vmem:[%s0 + $0x3b8] sm:$0xff]
  %v138 = vld [vmem:[%s0 + $0x3c0] sm:$0xff]
  %v139 = vld [vmem:[%s0 + $0x3c8] sm:$0xff]
  %v140 = vld [vmem:[%s0 + $0x3d0] sm:$0xff]
  %v141 = vld [vmem:[%s0 + $0x3d8] sm:$0xff]
  %v142 = vld [vmem:[%s0 + $0x3e0] sm:$0xff]
  %v143 = vld [vmem:[%s0 + $0x3e8] sm:$0xff]
  %v144 = vld [vmem:[%s0 + $0x3f0] sm:$0xff]
  %v145 = vld [vmem:[%s0 + $0x3f8] sm:$0xff]
  %v146 = vld [vmem:[%s0 + $0x400] sm:$0xff]
  %v147 = vld [vmem:[%s0 + $0x408] sm:$0xff]
  %v148 = vld [vmem:[%s0 + $0x410] sm:$0xff]
  %v149 = vld [vmem:[%s0 + $0x418] sm:$0xff]
  %v150 = vld [vmem:[%s0 + $0x420] sm:$0xff]
  %v151 = vld [vmem:[%s0 + $0x428] sm:$0xff]
  %v152 = vld [vmem:[%s0 + $0x430] sm:$0xff]
  %v153 = vld [vmem:[%s0 + $0x438] sm:$0xff]
  %v154 = vld [vmem:[%s0 + $0x440] sm:$0xff]
  %v155 = vld [vmem:[%s0 + $0x448] sm:$0xff]
  %v156 = vld [vmem:[%s0 + $0x450] sm:$0xff]
  %v157 = vld [vmem:[%s0 + $0x458] sm:$0xff]
  %v158 = vld [vmem:[%s0 + $0x460] sm:$0xff]
  %v159 = vld [vmem:[%s0 + $0x468] sm:$0xff]
  %v160 = vld [vmem:[%s0 + $0x470] sm:$0xff]
  %v161 = vld [vmem:[%s0 + $0x478] sm:$0xff]
  %v162 = vld [vmem:[%s0 + $0x480] sm:$0xff]
  %v163 = vld [vmem:[%s0 + $0x488] sm:$0xff]
  %v164 = vld [vmem:[%s0 + $0x490] sm:$0xff]
  %v165 = vld [vmem:[%s0 + $0x498] sm:$0xff]
  %v166 = vld [vmem:[%s0 + $0x4a0] sm:$0xff]
  %v167 = vld [vmem:[%s0 + $0x4a8] sm:$0xff]
  %v168 = vld [vmem:[%s0 + $0x4b0] sm:$0xff]
  %v169 = vld [vmem:[%s0 + $0x4b8] sm:$0xff]
  %v170 = vld [vmem:[%s0 + $0x4c0] sm:$0xff]
  %v171 = vld [vmem:[%s0 + $0x4c8] sm:$0xff]
  %v172 = vld [vmem:[%s0 + $0x4d0] sm:$0xff]
  %v173 = vld [vmem:[%s0 + $0x4d8] sm:$0xff]
  %v174 = vld [vmem:[%s1] sm:$0xff]
  %v175 = vld [vmem:[%s1 + $0x8] sm:$0xff]
  %v176 = vld [vmem:[%s1 + $0x10] sm:$0xff]
  %v177 = vld [vmem:[%s1 + $0x18] sm:$0xff]
  %v178 = vld [vmem:[%s1 + $0x20] sm:$0xff]
  %v179 = vld [vmem:[%s1 + $0x28] sm:$0xff]
  %v180 = vld [vmem:[%s1 + $0x30] sm:$0xff]
  %v181 = vld [vmem:[%s1 + $0x38] sm:$0xff]
  %v182 = vld [vmem:[%s1 + $0x40] sm:$0xff]
  %v183 = vld [vmem:[%s1 + $0x48] sm:$0xff]
  %v184 = vld [vmem:[%s1 + $0x50] sm:$0xff]
  %v185 = vld [vmem:[%s1 + $0x58] sm:$0xff]
  %v186 = vld [vmem:[%s1 + $0x60] sm:$0xff]
  %v187 = vld [vmem:[%s1 + $0x68] sm:$0xff]
  %v188 = vld [vmem:[%s1 + $0x70] sm:$0xff]
  %v189 = vld [vmem:[%s1 + $0x78] sm:$0xff]
  %v190 = vld [vmem:[%s1 + $0x80] sm:$0xff]
  %v191 = vld [vmem:[%s1 + $0x88] sm:$0xff]
  %v192 = vld [vmem:[%s1 + $0x90] sm:$0xff]
  %v193 = vld [vmem:[%s1 + $0x98] sm:$0xff]
  %v194 = vld [vmem:[%s1 + $0xa0] sm:$0xff]
  %v195 = vld [vmem:[%s1 + $0xa8] sm:$0xff]
  %v196 = vld [vmem:[%s1 + $0xb0] sm:$0xff]
  %v197 = vld [vmem:[%s1 + $0xb8] sm:$0xff]
  %v198 = vld [vmem:[%s1 + $0xc0] sm:$0xff]
  %v199 = vld [vmem:[%s1 + $0xc8] sm:$0xff]
  %v200 = vld [vmem:[%s1 + $0xd0] sm:$0xff]
  %v201 = vld [vmem:[%s1 + $0xd8] sm:$0xff]
  %v202 = vld [vmem:[%s1 + $0xe0] sm:$0xff]
  %v203 = vld [vmem:[%s1 + $0xe8] sm:$0xff]
  %v204 = vld [vmem:[%s1 + $0xf0] sm:$0xff]
  %v205 = vld [vmem:[%s1 + $0xf8] sm:$0xff]
  %v206 = vld [vmem:[%s1 + $0x100] sm:$0xff]
  %v207 = vld [vmem:[%s1 + $0x108] sm:$0xff]
  %v208 = vld [vmem:[%s1 + $0x110] sm:$0xff]
  %v209 = vld [vmem:[%s1 + $0x118] sm:$0xff]
  %v210 = vld [vmem:[%s1 + $0x120] sm:$0xff]
  %v211 = vld [vmem:[%s1 + $0x128] sm:$0xff]
  %v212 = vld [vmem:[%s1 + $0x130] sm:$0xff]
  %v213 = vld [vmem:[%s1 + $0x138] sm:$0xff]
  %v214 = vld [vmem:[%s1 + $0x140] sm:$0xff]
  %v215 = vld [vmem:[%s1 + $0x148] sm:$0xff]
  %v216 = vld [vmem:[%s1 + $0x150] sm:$0xff]
  %v217 = vld [vmem:[%s1 + $0x158] sm:$0xff]
  %v218 = vld [vmem:[%s1 + $0x160] sm:$0xff]
  %v219 = vld [vmem:[%s1 + $0x168] sm:$0xff]
  %v220 = vld [vmem:[%s1 + $0x170] sm:$0xff]
  %v221 = vld [vmem:[%s1 + $0x178] sm:$0xff]
  %v222 = vld [vmem:[%s1 + $0x180] sm:$0xff]
  %v223 = vld [vmem:[%s1 + $0x188] sm:$0xff]
  %v224 = vld [vmem:[%s1 + $0x190] sm:$0xff]
  %v225 = vld [vmem:[%s1 + $0x198] sm:$0xff]
  %v226 = vld [vmem:[%s1 + $0x1a0] sm:$0xff]
  %v227 = vld [vmem:[%s1 + $0x1a8] sm:$0xff]
  %v228 = vld [vmem:[%s1 + $0x1b0] sm:$0xff]
  %v229 = vld [vmem:[%s1 + $0x1b8] sm:$0xff]
  %v230 = vld [vmem:[%s1 + $0x1c0] sm:$0xff]
  %v231 = vld [vmem:[%s1 + $0x1c8] sm:$0xff]
  %v232 = vld [vmem:[%s1 + $0x1d0] sm:$0xff]
  %v233 = vld [vmem:[%s1 + $0x1d8] sm:$0xff]
  %v234 = vld [vmem:[%s1 + $0x1e0] sm:$0xff]
  %v235 = vld [vmem:[%s1 + $0x1e8] sm:$0xff]
  %v236 = vld [vmem:[%s1 + $0x1f0] sm:$0xff]
  %v237 = vld [vmem:[%s1 + $0x1f8] sm:$0xff]
  %v238 = vld [vmem:[%s2] sm:$0x1]
  %v240 = vlaneseq
  %v241 = vshrl.u32 %v240, 7
  %v242 = vsub.s32 0, %v241
  %v243 = vrot.slane %v238, %v242
  %245 = vmatprep.subr.mxu0 0.0
  %246 = vmatpush1.msra.mxu0 %v174
  %247 = vmatprep.subr.mxu0 0.0
  %248 = vmatpush1.msra.mxu0 %v175
  %249 = vmatprep.subr.mxu0 0.0
  %250 = vmatpush1.msra.mxu0 %v176
  %251 = vmatprep.subr.mxu0 0.0
  %252 = vmatpush1.msra.mxu0 %v177
  %253 = vmatprep.subr.mxu0 0.0
  %254 = vmatpush1.msra.mxu0 %v178
  %255 = vmatprep.subr.mxu0 0.0
  %256 = vmatpush1.msra.mxu0 %v179
  %257 = vmatprep.subr.mxu0 0.0
  %258 = vmatpush1.msra.mxu0 %v180
  %259 = vmatprep.subr.mxu0 0.0
  %260 = vmatpush1.msra.mxu0 %v181
  %261 = vmatprep.subr.mxu0 0.0
  %262 = vmatpush1.msra.mxu0 %v182
  %263 = vmatprep.subr.mxu0 0.0
  %264 = vmatpush1.msra.mxu0 %v183
  %265 = vmatprep.subr.mxu0 0.0
  %266 = vmatpush1.msra.mxu0 %v184
  %267 = vmatprep.subr.mxu0 0.0
  %268 = vmatpush1.msra.mxu0 %v185
  %269 = vmatprep.subr.mxu0 0.0
  %270 = vmatpush1.msra.mxu0 %v186
  %271 = vmatprep.subr.mxu0 0.0
  %272 = vmatpush1.msra.mxu0 %v187
  %273 = vmatprep.subr.mxu0 0.0
  %274 = vmatpush1.msra.mxu0 %v188
  %275 = vmatprep.subr.mxu0 0.0
  %276 = vmatpush1.msra.mxu0 %v189
  %277 = vmatprep.subr.mxu0 0.0
  %278 = vmatpush1.msra.mxu0 %v190
  %279 = vmatprep.subr.mxu0 0.0
  %280 = vmatpush1.msra.mxu0 %v191
  %281 = vmatprep.subr.mxu0 0.0
  %282 = vmatpush1.msra.mxu0 %v192
  %283 = vmatprep.subr.mxu0 0.0
  %284 = vmatpush1.msra.mxu0 %v193
  %285 = vmatprep.subr.mxu0 0.0
  %286 = vmatpush1.msra.mxu0 %v194
  %287 = vmatprep.subr.mxu0 0.0
  %288 = vmatpush1.msra.mxu0 %v195
  %289 = vmatprep.subr.mxu0 0.0
  %290 = vmatpush1.msra.mxu0 %v196
  %291 = vmatprep.subr.mxu0 0.0
  %292 = vmatpush1.msra.mxu0 %v197
  %293 = vmatprep.subr.mxu0 0.0
  %294 = vmatpush1.msra.mxu0 %v198
  %295 = vmatprep.subr.mxu0 0.0
  %296 = vmatpush1.msra.mxu0 %v199
  %297 = vmatprep.subr.mxu0 0.0
  %298 = vmatpush1.msra.mxu0 %v200
  %299 = vmatprep.subr.mxu0 0.0
  %300 = vmatpush1.msra.mxu0 %v201
  %301 = vmatprep.subr.mxu0 0.0
  %302 = vmatpush1.msra.mxu0 %v202
  %303 = vmatprep.subr.mxu0 0.0
  %304 = vmatpush1.msra.mxu0 %v203
  %305 = vmatprep.subr.mxu0 0.0
  %306 = vmatpush1.msra.mxu0 %v204
  %307 = vmatprep.subr.mxu0 0.0
  %308 = vmatpush1.msra.mxu0 %v205
  %309 = vmatprep.mubr.f32.mxu0 %v19
  %310 = vmatmul.mubr.f32.gmra.mrb[0].mxu0 %v18
  %v311 = vpop.f32.mrb[0].mxu0
  %v312 = vadd.f32 %v243, %v311
  %v313 = vpop.f32.mrb[0].mxu0
  %314 = vmatprep.mubr.f32.mxu0 %v23
  %315 = vmatmul.mubr.f32.gmra.mrb[0].mxu0 %v22
  %v316 = vpop.f32.mrb[0].mxu0
  %v317 = vadd.f32 %v243, %v316
  %v318 = vpop.f32.mrb[0].mxu0
  %319 = vmatprep.mubr.f32.mxu0 %v27
  %320 = vmatmul.mubr.f32.gmra.mrb[0].mxu0 %v26
  %v321 = vpop.f32.mrb[0].mxu0
  %v322 = vadd.f32 %v243, %v321
  %v323 = vpop.f32.mrb[0].mxu0
  %324 = vmatprep.mubr.f32.mxu0 %v31
  %325 = vmatmul.mubr.f32.gmra.mrb[0].mxu0 %v30
  %v326 = vpop.f32.mrb[0].mxu0
  %v327 = vadd.f32 %v243, %v326
  %v328 = vpop.f32.mrb[0].mxu0
  %329 = vmatprep.mubr.f32.mxu0 %v35
  %330 = vmatmul.mubr.f32.gmra.mrb[0].mxu0 %v34
  %v331 = vpop.f32.mrb[0].mxu0
  %v332 = vadd.f32 %v243, %v331
  %v333 = vpop.f32.mrb[0].mxu0
  %334 = vmatprep.mubr.f32.mxu0 %v39
  %335 = vmatmul.mubr.f32.gmra.mrb[0].mxu0 %v38
  %v336 = vpop.f32.mrb[0].mxu0
  %v337 = vadd.f32 %v243, %v336
  %v338 = vpop.f32.mrb[0].mxu0
  %339 = vmatprep.mubr.f32.mxu0 %v43
  %340 = vmatmul.mubr.f32.gmra.mrb[0].mxu0 %v42
  %v341 = vpop.f32.mrb[0].mxu0
  %v342 = vadd.f32 %v243, %v341
  %v343 = vpop.f32.mrb[0].mxu0
  %344 = vmatprep.mubr.f32.mxu0 %v47
  %345 = vmatmul.mubr.f32.gmra.mrb[0].mxu0 %v46
  %v346 = vpop.f32.mrb[0].mxu0
  %v347 = vadd.f32 %v243, %v346
  %v348 = vpop.f32.mrb[0].mxu0
  %349 = vmatprep.mubr.f32.mxu0 %v51
  %350 = vmatmul.mubr.f32.gmra.mrb[0].mxu0 %v50
  %v351 = vpop.f32.mrb[0].mxu0
  %v352 = vadd.f32 %v243, %v351
  %v353 = vpop.f32.mrb[0].mxu0
  %354 = vmatprep.mubr.f32.mxu0 %v55
  %355 = vmatmul.mubr.f32.gmra.mrb[0].mxu0 %v54
  %v356 = vpop.f32.mrb[0].mxu0
  %v357 = vadd.f32 %v243, %v356
  %v358 = vpop.f32.mrb[0].mxu0
  %359 = vmatprep.mubr.f32.mxu0 %v59
  %360 = vmatmul.mubr.f32.gmra.mrb[0].mxu0 %v58
  %v361 = vpop.f32.mrb[0].mxu0
  %v362 = vadd.f32 %v243, %v361
  %v363 = vpop.f32.mrb[0].mxu0
  %364 = vmatprep.mubr.f32.mxu0 %v63
  %365 = vmatmul.mubr.f32.gmra.mrb[0].mxu0 %v62
  %v366 = vpop.f32.mrb[0].mxu0
  %v367 = vadd.f32 %v243, %v366
  %v368 = vpop.f32.mrb[0].mxu0
  %369 = vmatprep.mubr.f32.mxu0 %v67
  %370 = vmatmul.mubr.f32.gmra.mrb[0].mxu0 %v66
  %v371 = vpop.f32.mrb[0].mxu0
  %v372 = vadd.f32 %v243, %v371
  %v373 = vpop.f32.mrb[0].mxu0
  %374 = vmatprep.mubr.f32.mxu0 %v71
  %375 = vmatmul.mubr.f32.gmra.mrb[0].mxu0 %v70
  %v376 = vpop.f32.mrb[0].mxu0
  %v377 = vadd.f32 %v243, %v376
  %v378 = vpop.f32.mrb[0].mxu0
  %379 = vmatprep.mubr.f32.mxu0 %v75
  %380 = vmatmul.mubr.f32.gmra.mrb[0].mxu0 %v74
  %v381 = vpop.f32.mrb[0].mxu0
  %v382 = vadd.f32 %v243, %v381
  %v383 = vpop.f32.mrb[0].mxu0
  %384 = vmatprep.mubr.f32.mxu0 %v79
  %385 = vmatmul.mubr.f32.gmra.mrb[0].mxu0 %v78
  %v386 = vpop.f32.mrb[0].mxu0
  %v387 = vadd.f32 %v243, %v386
  %v388 = vpop.f32.mrb[0].mxu0
  %389 = vmatprep.mubr.f32.mxu0 %v83
  %390 = vmatmul.mubr.f32.gmra.mrb[0].mxu0 %v82
  %v391 = vpop.f32.mrb[0].mxu0
  %v392 = vadd.f32 %v243, %v391
  %v393 = vpop.f32.mrb[0].mxu0
  %394 = vmatprep.mubr.f32.mxu0 %v87
  %395 = vmatmul.mubr.f32.gmra.mrb[0].mxu0 %v86
  %v396 = vpop.f32.mrb[0].mxu0
  %v397 = vadd.f32 %v243, %v396
  %v398 = vpop.f32.mrb[0].mxu0
  %399 = vmatprep.mubr.f32.mxu0 %v91
  %400 = vmatmul.mubr.f32.gmra.mrb[0].mxu0 %v90
  %v401 = vpop.f32.mrb[0].mxu0
  %v402 = vadd.f32 %v243, %v401
  %v403 = vpop.f32.mrb[0].mxu0
  %404 = vmatprep.mubr.f32.mxu0 %v95
  %405 = vmatmul.mubr.f32.gmra.mrb[0].mxu0 %v94
  %v406 = vpop.f32.mrb[0].mxu0
  %v407 = vadd.f32 %v243, %v406
  %v408 = vpop.f32.mrb[0].mxu0
  %409 = vmatprep.mubr.f32.mxu0 %v99
  %410 = vmatmul.mubr.f32.gmra.mrb[0].mxu0 %v98
  %v411 = vpop.f32.mrb[0].mxu0
  %v412 = vadd.f32 %v243, %v411
  %v413 = vpop.f32.mrb[0].mxu0
  %414 = vmatprep.mubr.f32.mxu0 %v103
  %415 = vmatmul.mubr.f32.gmra.mrb[0].mxu0 %v102
  %v416 = vpop.f32.mrb[0].mxu0
  %v417 = vadd.f32 %v243, %v416
  %v418 = vpop.f32.mrb[0].mxu0
  %419 = vmatprep.mubr.f32.mxu0 %v107
  %420 = vmatmul.mubr.f32.gmra.mrb[0].mxu0 %v106
  %v421 = vpop.f32.mrb[0].mxu0
  %v422 = vadd.f32 %v243, %v421
  %v423 = vpop.f32.mrb[0].mxu0
  %424 = vmatprep.mubr.f32.mxu0 %v111
  %425 = vmatmul.mubr.f32.gmra.mrb[0].mxu0 %v110
  %v426 = vpop.f32.mrb[0].mxu0
  %v427 = vadd.f32 %v243, %v426
  %v428 = vpop.f32.mrb[0].mxu0
  %429 = vmatprep.mubr.f32.mxu0 %v115
  %430 = vmatmul.mubr.f32.gmra.mrb[0].mxu0 %v114
  %v431 = vpop.f32.mrb[0].mxu0
  %v432 = vadd.f32 %v243, %v431
  %v433 = vpop.f32.mrb[0].mxu0
  %434 = vmatprep.mubr.f32.mxu0 %v119
  %435 = vmatmul.mubr.f32.gmra.mrb[0].mxu0 %v118
  %v436 = vpop.f32.mrb[0].mxu0
  %v437 = vadd.f32 %v243, %v436
  %v438 = vpop.f32.mrb[0].mxu0
  %439 = vmatprep.mubr.f32.mxu0 %v123
  %440 = vmatmul.mubr.f32.gmra.mrb[0].mxu0 %v122
  %v441 = vpop.f32.mrb[0].mxu0
  %v442 = vadd.f32 %v243, %v441
  %v443 = vpop.f32.mrb[0].mxu0
  %444 = vmatprep.mubr.f32.mxu0 %v127
  %445 = vmatmul.mubr.f32.gmra.mrb[0].mxu0 %v126
  %v446 = vpop.f32.mrb[0].mxu0
  %v447 = vadd.f32 %v243, %v446
  %v448 = vpop.f32.mrb[0].mxu0
  %449 = vmatprep.mubr.f32.mxu0 %v131
  %450 = vmatmul.mubr.f32.gmra.mrb[0].mxu0 %v130
  %v451 = vpop.f32.mrb[0].mxu0
  %v452 = vadd.f32 %v243, %v451
  %v453 = vpop.f32.mrb[0].mxu0
  %454 = vmatprep.mubr.f32.mxu0 %v135
  %455 = vmatmul.mubr.f32.gmra.mrb[0].mxu0 %v134
  %v456 = vpop.f32.mrb[0].mxu0
  %v457 = vadd.f32 %v243, %v456
  %v458 = vpop.f32.mrb[0].mxu0
  %459 = vmatprep.mubr.f32.mxu0 %v139
  %460 = vmatmul.mubr.f32.gmra.mrb[0].mxu0 %v138
  %v461 = vpop.f32.mrb[0].mxu0
  %v462 = vadd.f32 %v243, %v461
  %v463 = vpop.f32.mrb[0].mxu0
  %464 = vmatprep.mubr.f32.mxu0 %v143
  %465 = vmatmul.mubr.f32.gmra.mrb[0].mxu0 %v142
  %v466 = vpop.f32.mrb[0].mxu0
  %v467 = vadd.f32 %v243, %v466
  %v468 = vpop.f32.mrb[0].mxu0
  %469 = vmatprep.mubr.f32.mxu0 %v147
  %470 = vmatmul.mubr.f32.gmra.mrb[0].mxu0 %v146
  %v471 = vpop.f32.mrb[0].mxu0
  %v472 = vadd.f32 %v243, %v471
  %v473 = vpop.f32.mrb[0].mxu0
  %474 = vmatprep.mubr.f32.mxu0 %v151
  %475 = vmatmul.mubr.f32.gmra.mrb[0].mxu0 %v150
  %v476 = vpop.f32.mrb[0].mxu0
  %v477 = vadd.f32 %v243, %v476
  %v478 = vpop.f32.mrb[0].mxu0
  %479 = vmatprep.mubr.f32.mxu0 %v155
  %480 = vmatmul.mubr.f32.gmra.mrb[0].mxu0 %v154
  %v481 = vpop.f32.mrb[0].mxu0
  %v482 = vadd.f32 %v243, %v481
  %v483 = vpop.f32.mrb[0].mxu0
  %484 = vmatprep.mubr.f32.mxu0 %v159
  %485 = vmatmul.mubr.f32.gmra.mrb[0].mxu0 %v158
  %v486 = vpop.f32.mrb[0].mxu0
  %v487 = vadd.f32 %v243, %v486
  %v488 = vpop.f32.mrb[0].mxu0
  %489 = vmatprep.mubr.f32.mxu0 %v163
  %490 = vmatmul.mubr.f32.gmra.mrb[0].mxu0 %v162
  %v491 = vpop.f32.mrb[0].mxu0
  %v492 = vadd.f32 %v243, %v491
  %v493 = vpop.f32.mrb[0].mxu0
  %494 = vmatprep.mubr.f32.mxu0 %v167
  %495 = vmatmul.mubr.f32.gmra.mrb[0].mxu0 %v166
  %v496 = vpop.f32.mrb[0].mxu0
  %v497 = vadd.f32 %v243, %v496
  %v498 = vpop.f32.mrb[0].mxu0
  %499 = vmatprep.mubr.f32.mxu0 %v171
  %500 = vmatmul.mubr.f32.gmra.mrb[0].mxu0 %v170
  %v501 = vpop.f32.mrb[0].mxu0
  %v502 = vadd.f32 %v243, %v501
  %v503 = vpop.f32.mrb[0].mxu0
  %504 = vdwg.mxu0
  %505 = vmatprep.subr.mxu0 0.0
  %506 = vmatpush1.msra.mxu0 %v206
  %507 = vmatprep.subr.mxu0 0.0
  %508 = vmatpush1.msra.mxu0 %v207
  %509 = vmatprep.subr.mxu0 0.0
  %510 = vmatpush1.msra.mxu0 %v208
  %511 = vmatprep.subr.mxu0 0.0
  %512 = vmatpush1.msra.mxu0 %v209
  %513 = vmatprep.subr.mxu0 0.0
  %514 = vmatpush1.msra.mxu0 %v210
  %515 = vmatprep.subr.mxu0 0.0
  %516 = vmatpush1.msra.mxu0 %v211
  %517 = vmatprep.subr.mxu0 0.0
  %518 = vmatpush1.msra.mxu0 %v212
  %519 = vmatprep.subr.mxu0 0.0
  %520 = vmatpush1.msra.mxu0 %v213
  %521 = vmatprep.subr.mxu0 0.0
  %522 = vmatpush1.msra.mxu0 %v214
  %523 = vmatprep.subr.mxu0 0.0
  %524 = vmatpush1.msra.mxu0 %v215
  %525 = vmatprep.subr.mxu0 0.0
  %526 = vmatpush1.msra.mxu0 %v216
  %527 = vmatprep.subr.mxu0 0.0
  %528 = vmatpush1.msra.mxu0 %v217
  %529 = vmatprep.subr.mxu0 0.0
  %530 = vmatpush1.msra.mxu0 %v218
  %531 = vmatprep.subr.mxu0 0.0
  %532 = vmatpush1.msra.mxu0 %v219
  %533 = vmatprep.subr.mxu0 0.0
  %534 = vmatpush1.msra.mxu0 %v220
  %535 = vmatprep.subr.mxu0 0.0
  %536 = vmatpush1.msra.mxu0 %v221
  %537 = vmatprep.subr.mxu0 0.0
  %538 = vmatpush1.msra.mxu0 %v222
  %539 = vmatprep.subr.mxu0 0.0
  %540 = vmatpush1.msra.mxu0 %v223
  %541 = vmatprep.subr.mxu0 0.0
  %542 = vmatpush1.msra.mxu0 %v224
  %543 = vmatprep.subr.mxu0 0.0
  %544 = vmatpush1.msra.mxu0 %v225
  %545 = vmatprep.subr.mxu0 0.0
  %546 = vmatpush1.msra.mxu0 %v226
  %547 = vmatprep.subr.mxu0 0.0
  %548 = vmatpush1.msra.mxu0 %v227
  %549 = vmatprep.subr.mxu0 0.0
  %550 = vmatpush1.msra.mxu0 %v228
  %551 = vmatprep.subr.mxu0 0.0
  %552 = vmatpush1.msra.mxu0 %v229
  %553 = vmatprep.subr.mxu0 0.0
  %554 = vmatpush1.msra.mxu0 %v230
  %555 = vmatprep.subr.mxu0 0.0
  %556 = vmatpush1.msra.mxu0 %v231
  %557 = vmatprep.subr.mxu0 0.0
  %558 = vmatpush1.msra.mxu0 %v232
  %559 = vmatprep.subr.mxu0 0.0
  %560 = vmatpush1.msra.mxu0 %v233
  %561 = vmatprep.subr.mxu0 0.0
  %562 = vmatpush1.msra.mxu0 %v234
  %563 = vmatprep.subr.mxu0 0.0
  %564 = vmatpush1.msra.mxu0 %v235
  %565 = vmatprep.subr.mxu0 0.0
  %566 = vmatpush1.msra.mxu0 %v236
  %567 = vmatprep.subr.mxu0 0.0
  %568 = vmatpush1.msra.mxu0 %v237
  %569 = vmatprep.mubr.f32.mxu0 %v21
  %570 = vmatmul.mubr.f32.gmra.mrb[0].mxu0 %v20
  %v571 = vpop.f32.mrb[0].mxu0
  %v572 = vadd.f32 %v312, %v571
  %v573 = vpop.f32.mrb[0].mxu0
  %574 = vmatprep.mubr.f32.mxu0 %v25
  %575 = vmatmul.mubr.f32.gmra.mrb[0].mxu0 %v24
  %v576 = vpop.f32.mrb[0].mxu0
  %v577 = vadd.f32 %v317, %v576
  %v578 = vpop.f32.mrb[0].mxu0
  %579 = vmatprep.mubr.f32.mxu0 %v29
  %580 = vmatmul.mubr.f32.gmra.mrb[0].mxu0 %v28
  %v581 = vpop.f32.mrb[0].mxu0
  %v582 = vadd.f32 %v322, %v581
  %v583 = vpop.f32.mrb[0].mxu0
  %584 = vmatprep.mubr.f32.mxu0 %v33
  %585 = vmatmul.mubr.f32.gmra.mrb[0].mxu0 %v32
  %v586 = vpop.f32.mrb[0].mxu0
  %v587 = vadd.f32 %v327, %v586
  %v588 = vpop.f32.mrb[0].mxu0
  %589 = vmatprep.mubr.f32.mxu0 %v37
  %590 = vmatmul.mubr.f32.gmra.mrb[0].mxu0 %v36
  %v591 = vpop.f32.mrb[0].mxu0
  %v592 = vadd.f32 %v332, %v591
  %v593 = vpop.f32.mrb[0].mxu0
  %594 = vmatprep.mubr.f32.mxu0 %v41
  %595 = vmatmul.mubr.f32.gmra.mrb[0].mxu0 %v40
  %v596 = vpop.f32.mrb[0].mxu0
  %v597 = vadd.f32 %v337, %v596
  %v598 = vpop.f32.mrb[0].mxu0
  %599 = vmatprep.mubr.f32.mxu0 %v45
  %600 = vmatmul.mubr.f32.gmra.mrb[0].mxu0 %v44
  %v601 = vpop.f32.mrb[0].mxu0
  %v602 = vadd.f32 %v342, %v601
  %v603 = vpop.f32.mrb[0].mxu0
  %604 = vmatprep.mubr.f32.mxu0 %v49
  %605 = vmatmul.mubr.f32.gmra.mrb[0].mxu0 %v48
  %v606 = vpop.f32.mrb[0].mxu0
  %v607 = vadd.f32 %v347, %v606
  %v608 = vpop.f32.mrb[0].mxu0
  %609 = vmatprep.mubr.f32.mxu0 %v53
  %610 = vmatmul.mubr.f32.gmra.mrb[0].mxu0 %v52
  %v611 = vpop.f32.mrb[0].mxu0
  %v612 = vadd.f32 %v352, %v611
  %v613 = vpop.f32.mrb[0].mxu0
  %614 = vmatprep.mubr.f32.mxu0 %v57
  %615 = vmatmul.mubr.f32.gmra.mrb[0].mxu0 %v56
  %v616 = vpop.f32.mrb[0].mxu0
  %v617 = vadd.f32 %v357, %v616
  %v618 = vpop.f32.mrb[0].mxu0
  %619 = vmatprep.mubr.f32.mxu0 %v61
  %620 = vmatmul.mubr.f32.gmra.mrb[0].mxu0 %v60
  %v621 = vpop.f32.mrb[0].mxu0
  %v622 = vadd.f32 %v362, %v621
  %v623 = vpop.f32.mrb[0].mxu0
  %624 = vmatprep.mubr.f32.mxu0 %v65
  %625 = vmatmul.mubr.f32.gmra.mrb[0].mxu0 %v64
  %v626 = vpop.f32.mrb[0].mxu0
  %v627 = vadd.f32 %v367, %v626
  %v628 = vpop.f32.mrb[0].mxu0
  %629 = vmatprep.mubr.f32.mxu0 %v69
  %630 = vmatmul.mubr.f32.gmra.mrb[0].mxu0 %v68
  %v631 = vpop.f32.mrb[0].mxu0
  %v632 = vadd.f32 %v372, %v631
  %v633 = vpop.f32.mrb[0].mxu0
  %634 = vmatprep.mubr.f32.mxu0 %v73
  %635 = vmatmul.mubr.f32.gmra.mrb[0].mxu0 %v72
  %v636 = vpop.f32.mrb[0].mxu0
  %v637 = vadd.f32 %v377, %v636
  %v638 = vpop.f32.mrb[0].mxu0
  %639 = vmatprep.mubr.f32.mxu0 %v77
  %640 = vmatmul.mubr.f32.gmra.mrb[0].mxu0 %v76
  %v641 = vpop.f32.mrb[0].mxu0
  %v642 = vadd.f32 %v382, %v641
  %v643 = vpop.f32.mrb[0].mxu0
  %644 = vmatprep.mubr.f32.mxu0 %v81
  %645 = vmatmul.mubr.f32.gmra.mrb[0].mxu0 %v80
  %v646 = vpop.f32.mrb[0].mxu0
  %v647 = vadd.f32 %v387, %v646
  %v648 = vpop.f32.mrb[0].mxu0
  %649 = vmatprep.mubr.f32.mxu0 %v85
  %650 = vmatmul.mubr.f32.gmra.mrb[0].mxu0 %v84
  %v651 = vpop.f32.mrb[0].mxu0
  %v652 = vadd.f32 %v392, %v651
  %v653 = vpop.f32.mrb[0].mxu0
  %654 = vmatprep.mubr.f32.mxu0 %v89
  %655 = vmatmul.mubr.f32.gmra.mrb[0].mxu0 %v88
  %v656 = vpop.f32.mrb[0].mxu0
  %v657 = vadd.f32 %v397, %v656
  %v658 = vpop.f32.mrb[0].mxu0
  %659 = vmatprep.mubr.f32.mxu0 %v93
  %660 = vmatmul.mubr.f32.gmra.mrb[0].mxu0 %v92
  %v661 = vpop.f32.mrb[0].mxu0
  %v662 = vadd.f32 %v402, %v661
  %v663 = vpop.f32.mrb[0].mxu0
  %664 = vmatprep.mubr.f32.mxu0 %v97
  %665 = vmatmul.mubr.f32.gmra.mrb[0].mxu0 %v96
  %v666 = vpop.f32.mrb[0].mxu0
  %v667 = vadd.f32 %v407, %v666
  %v668 = vpop.f32.mrb[0].mxu0
  %669 = vmatprep.mubr.f32.mxu0 %v101
  %670 = vmatmul.mubr.f32.gmra.mrb[0].mxu0 %v100
  %v671 = vpop.f32.mrb[0].mxu0
  %v672 = vadd.f32 %v412, %v671
  %v673 = vpop.f32.mrb[0].mxu0
  %674 = vmatprep.mubr.f32.mxu0 %v105
  %675 = vmatmul.mubr.f32.gmra.mrb[0].mxu0 %v104
  %v676 = vpop.f32.mrb[0].mxu0
  %v677 = vadd.f32 %v417, %v676
  %v678 = vpop.f32.mrb[0].mxu0
  %679 = vmatprep.mubr.f32.mxu0 %v109
  %680 = vmatmul.mubr.f32.gmra.mrb[0].mxu0 %v108
  %v681 = vpop.f32.mrb[0].mxu0
  %v682 = vadd.f32 %v422, %v681
  %v683 = vpop.f32.mrb[0].mxu0
  %684 = vmatprep.mubr.f32.mxu0 %v113
  %685 = vmatmul.mubr.f32.gmra.mrb[0].mxu0 %v112
  %v686 = vpop.f32.mrb[0].mxu0
  %v687 = vadd.f32 %v427, %v686
  %v688 = vpop.f32.mrb[0].mxu0
  %689 = vmatprep.mubr.f32.mxu0 %v117
  %690 = vmatmul.mubr.f32.gmra.mrb[0].mxu0 %v116
  %v691 = vpop.f32.mrb[0].mxu0
  %v692 = vadd.f32 %v432, %v691
  %v693 = vpop.f32.mrb[0].mxu0
  %694 = vmatprep.mubr.f32.mxu0 %v121
  %695 = vmatmul.mubr.f32.gmra.mrb[0].mxu0 %v120
  %v696 = vpop.f32.mrb[0].mxu0
  %v697 = vadd.f32 %v437, %v696
  %v698 = vpop.f32.mrb[0].mxu0
  %699 = vmatprep.mubr.f32.mxu0 %v125
  %700 = vmatmul.mubr.f32.gmra.mrb[0].mxu0 %v124
  %v701 = vpop.f32.mrb[0].mxu0
  %v702 = vadd.f32 %v442, %v701
  %v703 = vpop.f32.mrb[0].mxu0
  %704 = vmatprep.mubr.f32.mxu0 %v129
  %705 = vmatmul.mubr.f32.gmra.mrb[0].mxu0 %v128
  %v706 = vpop.f32.mrb[0].mxu0
  %v707 = vadd.f32 %v447, %v706
  %v708 = vpop.f32.mrb[0].mxu0
  %709 = vmatprep.mubr.f32.mxu0 %v133
  %710 = vmatmul.mubr.f32.gmra.mrb[0].mxu0 %v132
  %v711 = vpop.f32.mrb[0].mxu0
  %v712 = vadd.f32 %v452, %v711
  %v713 = vpop.f32.mrb[0].mxu0
  %714 = vmatprep.mubr.f32.mxu0 %v137
  %715 = vmatmul.mubr.f32.gmra.mrb[0].mxu0 %v136
  %v716 = vpop.f32.mrb[0].mxu0
  %v717 = vadd.f32 %v457, %v716
  %v718 = vpop.f32.mrb[0].mxu0
  %719 = vmatprep.mubr.f32.mxu0 %v141
  %720 = vmatmul.mubr.f32.gmra.mrb[0].mxu0 %v140
  %v721 = vpop.f32.mrb[0].mxu0
  %v722 = vadd.f32 %v462, %v721
  %v723 = vpop.f32.mrb[0].mxu0
  %724 = vmatprep.mubr.f32.mxu0 %v145
  %725 = vmatmul.mubr.f32.gmra.mrb[0].mxu0 %v144
  %v726 = vpop.f32.mrb[0].mxu0
  %v727 = vadd.f32 %v467, %v726
  %v728 = vpop.f32.mrb[0].mxu0
  %729 = vmatprep.mubr.f32.mxu0 %v149
  %730 = vmatmul.mubr.f32.gmra.mrb[0].mxu0 %v148
  %v731 = vpop.f32.mrb[0].mxu0
  %v732 = vadd.f32 %v472, %v731
  %v733 = vpop.f32.mrb[0].mxu0
  %734 = vmatprep.mubr.f32.mxu0 %v153
  %735 = vmatmul.mubr.f32.gmra.mrb[0].mxu0 %v152
  %v736 = vpop.f32.mrb[0].mxu0
  %v737 = vadd.f32 %v477, %v736
  %v738 = vpop.f32.mrb[0].mxu0
  %739 = vmatprep.mubr.f32.mxu0 %v157
  %740 = vmatmul.mubr.f32.gmra.mrb[0].mxu0 %v156
  %v741 = vpop.f32.mrb[0].mxu0
  %v742 = vadd.f32 %v482, %v741
  %v743 = vpop.f32.mrb[0].mxu0
  %744 = vmatprep.mubr.f32.mxu0 %v161
  %745 = vmatmul.mubr.f32.gmra.mrb[0].mxu0 %v160
  %v746 = vpop.f32.mrb[0].mxu0
  %v747 = vadd.f32 %v487, %v746
  %v748 = vpop.f32.mrb[0].mxu0
  %749 = vmatprep.mubr.f32.mxu0 %v165
  %750 = vmatmul.mubr.f32.gmra.mrb[0].mxu0 %v164
  %v751 = vpop.f32.mrb[0].mxu0
  %v752 = vadd.f32 %v492, %v751
  %v753 = vpop.f32.mrb[0].mxu0
  %754 = vmatprep.mubr.f32.mxu0 %v169
  %755 = vmatmul.mubr.f32.gmra.mrb[0].mxu0 %v168
  %v756 = vpop.f32.mrb[0].mxu0
  %v757 = vadd.f32 %v497, %v756
  %v758 = vpop.f32.mrb[0].mxu0
  %759 = vmatprep.mubr.f32.mxu0 %v173
  %760 = vmatmul.mubr.f32.gmra.mrb[0].mxu0 %v172
  %v761 = vpop.f32.mrb[0].mxu0
  %v762 = vadd.f32 %v502, %v761
  %v763 = vpop.f32.mrb[0].mxu0
  %764 = vdwg.mxu0
  %s765 = sld [smem:[#allocation2]]
  %vm766 = vcmp.ge.f32.partialorder %v572, 0.0
  %vm767 = vcmp.ge.f32.partialorder %v577, 0.0
  %vm768 = vcmp.ge.f32.partialorder %v582, 0.0
  %vm769 = vcmp.ge.f32.partialorder %v587, 0.0
  %vm770 = vcmp.ge.f32.partialorder %v592, 0.0
  %vm771 = vcmp.ge.f32.partialorder %v597, 0.0
  %vm772 = vcmp.ge.f32.partialorder %v602, 0.0
  %vm773 = vcmp.ge.f32.partialorder %v607, 0.0
  %vm774 = vcmp.ge.f32.partialorder %v612, 0.0
  %vm775 = vcmp.ge.f32.partialorder %v617, 0.0
  %vm776 = vcmp.ge.f32.partialorder %v622, 0.0
  %vm777 = vcmp.ge.f32.partialorder %v627, 0.0
  %vm778 = vcmp.ge.f32.partialorder %v632, 0.0
  %vm779 = vcmp.ge.f32.partialorder %v637, 0.0
  %vm780 = vcmp.ge.f32.partialorder %v642, 0.0
  %vm781 = vcmp.ge.f32.partialorder %v647, 0.0
  %vm782 = vcmp.ge.f32.partialorder %v652, 0.0
  %vm783 = vcmp.ge.f32.partialorder %v657, 0.0
  %vm784 = vcmp.ge.f32.partialorder %v662, 0.0
  %vm785 = vcmp.ge.f32.partialorder %v667, 0.0
  %vm786 = vcmp.ge.f32.partialorder %v672, 0.0
  %vm787 = vcmp.ge.f32.partialorder %v677, 0.0
  %vm788 = vcmp.ge.f32.partialorder %v682, 0.0
  %vm789 = vcmp.ge.f32.partialorder %v687, 0.0
  %vm790 = vcmp.ge.f32.partialorder %v692, 0.0
  %vm791 = vcmp.ge.f32.partialorder %v697, 0.0
  %vm792 = vcmp.ge.f32.partialorder %v702, 0.0
  %vm793 = vcmp.ge.f32.partialorder %v707, 0.0
  %vm794 = vcmp.ge.f32.partialorder %v712, 0.0
  %vm795 = vcmp.ge.f32.partialorder %v717, 0.0
  %vm796 = vcmp.ge.f32.partialorder %v722, 0.0
  %vm797 = vcmp.ge.f32.partialorder %v727, 0.0
  %vm798 = vcmp.ge.f32.partialorder %v732, 0.0
  %vm799 = vcmp.ge.f32.partialorder %v737, 0.0
  %vm800 = vcmp.ge.f32.partialorder %v742, 0.0
  %vm801 = vcmp.ge.f32.partialorder %v747, 0.0
  %vm802 = vcmp.ge.f32.partialorder %v752, 0.0
  %vm803 = vcmp.ge.f32.partialorder %v757, 0.0
  %vm804 = vcmp.ge.f32.partialorder %v762, 0.0
  %v805 = vstv %s765
  %v806 = vmul.f32 %v805, %v572
  %v807 = vmul.f32 %v805, %v577
  %v808 = vmul.f32 %v805, %v582
  %v809 = vmul.f32 %v805, %v587
  %v810 = vmul.f32 %v805, %v592
  %v811 = vmul.f32 %v805, %v597
  %v812 = vmul.f32 %v805, %v602
  %v813 = vmul.f32 %v805, %v607
  %v814 = vmul.f32 %v805, %v612
  %v815 = vmul.f32 %v805, %v617
  %v816 = vmul.f32 %v805, %v622
  %v817 = vmul.f32 %v805, %v627
  %v818 = vmul.f32 %v805, %v632
  %v819 = vmul.f32 %v805, %v637
  %v820 = vmul.f32 %v805, %v642
  %v821 = vmul.f32 %v805, %v647
  %v822 = vmul.f32 %v805, %v652
  %v823 = vmul.f32 %v805, %v657
  %v824 = vmul.f32 %v805, %v662
  %v825 = vmul.f32 %v805, %v667
  %v826 = vmul.f32 %v805, %v672
  %v827 = vmul.f32 %v805, %v677
  %v828 = vmul.f32 %v805, %v682
  %v829 = vmul.f32 %v805, %v687
  %v830 = vmul.f32 %v805, %v692
  %v831 = vmul.f32 %v805, %v697
  %v832 = vmul.f32 %v805, %v702
  %v833 = vmul.f32 %v805, %v707
  %v834 = vmul.f32 %v805, %v712
  %v835 = vmul.f32 %v805, %v717
  %v836 = vmul.f32 %v805, %v722
  %v837 = vmul.f32 %v805, %v727
  %v838 = vmul.f32 %v805, %v732
  %v839 = vmul.f32 %v805, %v737
  %v840 = vmul.f32 %v805, %v742
  %v841 = vmul.f32 %v805, %v747
  %v842 = vmul.f32 %v805, %v752
  %v843 = vmul.f32 %v805, %v757
  %v844 = vmul.f32 %v805, %v762
  %v845 = vsel %vm766, %v572, %v806
  %v846 = vsel %vm767, %v577, %v807
  %v847 = vsel %vm768, %v582, %v808
  %v848 = vsel %vm769, %v587, %v809
  %v849 = vsel %vm770, %v592, %v810
  %v850 = vsel %vm771, %v597, %v811
  %v851 = vsel %vm772, %v602, %v812
  %v852 = vsel %vm773, %v607, %v813
  %v853 = vsel %vm774, %v612, %v814
  %v854 = vsel %vm775, %v617, %v815
  %v855 = vsel %vm776, %v622, %v816
  %v856 = vsel %vm777, %v627, %v817
  %v857 = vsel %vm778, %v632, %v818
  %v858 = vsel %vm779, %v637, %v819
  %v859 = vsel %vm780, %v642, %v820
  %v860 = vsel %vm781, %v647, %v821
  %v861 = vsel %vm782, %v652, %v822
  %v862 = vsel %vm783, %v657, %v823
  %v863 = vsel %vm784, %v662, %v824
  %v864 = vsel %vm785, %v667, %v825
  %v865 = vsel %vm786, %v672, %v826
  %v866 = vsel %vm787, %v677, %v827
  %v867 = vsel %vm788, %v682, %v828
  %v868 = vsel %vm789, %v687, %v829
  %v869 = vsel %vm790, %v692, %v830
  %v870 = vsel %vm791, %v697, %v831
  %v871 = vsel %vm792, %v702, %v832
  %v872 = vsel %vm793, %v707, %v833
  %v873 = vsel %vm794, %v712, %v834
  %v874 = vsel %vm795, %v717, %v835
  %v875 = vsel %vm796, %v722, %v836
  %v876 = vsel %vm797, %v727, %v837
  %v877 = vsel %vm798, %v732, %v838
  %v878 = vsel %vm799, %v737, %v839
  %v879 = vsel %vm800, %v742, %v840
  %v880 = vsel %vm801, %v747, %v841
  %v881 = vsel %vm802, %v752, %v842
  %v882 = vsel %vm803, %v757, %v843
  %v883 = vsel %vm804, %v762, %v844
  %884 = vst [vmem:[%s4] sm:$0xff] %v845
  %885 = vst [vmem:[%s4 + $0x8] sm:$0xff] %v846
  %886 = vst [vmem:[%s4 + $0x10] sm:$0xff] %v847
  %887 = vst [vmem:[%s4 + $0x18] sm:$0xff] %v848
  %888 = vst [vmem:[%s4 + $0x20] sm:$0xff] %v849
  %889 = vst [vmem:[%s4 + $0x28] sm:$0xff] %v850
  %890 = vst [vmem:[%s4 + $0x30] sm:$0xff] %v851
  %891 = vst [vmem:[%s4 + $0x38] sm:$0xff] %v852
  %892 = vst [vmem:[%s4 + $0x40] sm:$0xff] %v853
  %893 = vst [vmem:[%s4 + $0x48] sm:$0xff] %v854
  %894 = vst [vmem:[%s4 + $0x50] sm:$0xff] %v855
  %895 = vst [vmem:[%s4 + $0x58] sm:$0xff] %v856
  %896 = vst [vmem:[%s4 + $0x60] sm:$0xff] %v857
  %897 = vst [vmem:[%s4 + $0x68] sm:$0xff] %v858
  %898 = vst [vmem:[%s4 + $0x70] sm:$0xff] %v859
  %899 = vst [vmem:[%s4 + $0x78] sm:$0xff] %v860
  %900 = vst [vmem:[%s4 + $0x80] sm:$0xff] %v861
  %901 = vst [vmem:[%s4 + $0x88] sm:$0xff] %v862
  %902 = vst [vmem:[%s4 + $0x90] sm:$0xff] %v863
  %903 = vst [vmem:[%s4 + $0x98] sm:$0xff] %v864
  %904 = vst [vmem:[%s4 + $0xa0] sm:$0xff] %v865
  %905 = vst [vmem:[%s4 + $0xa8] sm:$0xff] %v866
  %906 = vst [vmem:[%s4 + $0xb0] sm:$0xff] %v867
  %907 = vst [vmem:[%s4 + $0xb8] sm:$0xff] %v868
  %908 = vst [vmem:[%s4 + $0xc0] sm:$0xff] %v869
  %909 = vst [vmem:[%s4 + $0xc8] sm:$0xff] %v870
  %910 = vst [vmem:[%s4 + $0xd0] sm:$0xff] %v871
  %911 = vst [vmem:[%s4 + $0xd8] sm:$0xff] %v872
  %912 = vst [vmem:[%s4 + $0xe0] sm:$0xff] %v873
  %913 = vst [vmem:[%s4 + $0xe8] sm:$0xff] %v874
  %914 = vst [vmem:[%s4 + $0xf0] sm:$0xff] %v875
  %915 = vst [vmem:[%s4 + $0xf8] sm:$0xff] %v876
  %916 = vst [vmem:[%s4 + $0x100] sm:$0xff] %v877
  %917 = vst [vmem:[%s4 + $0x108] sm:$0xff] %v878
  %918 = vst [vmem:[%s4 + $0x110] sm:$0xff] %v879
  %919 = vst [vmem:[%s4 + $0x118] sm:$0xff] %v880
  %920 = vst [vmem:[%s4 + $0x120] sm:$0xff] %v881
  %921 = vst [vmem:[%s4 + $0x128] sm:$0xff] %v882
  %922 = vst [vmem:[%s4 + $0x130] sm:$0xff] %v883
  // Predicated region
  $region18: #{auto_encoder_forward.11} parent=0 // pred_check
    _
  $region19: #{auto_encoder_forward.11} parent=0 // pred_check_branch
    %924 = sbr.rel (0) target = $region21
  $region20: #{auto_encoder_forward.11} parent=0 // pred_region
    _
  $region21: #{auto_encoder_forward.11} parent=0 // pred_fallthru
    _
  // Predicated region
  $region22: #{auto_encoder_forward.11} parent=0 // pred_check
    _
  $region23: #{auto_encoder_forward.11} parent=0 // pred_check_branch
    %926 = sbr.rel (0) target = $region25
  $region24: #{auto_encoder_forward.11} parent=0 // pred_region
    _
  $region25: #{auto_encoder_forward.11} parent=0 // pred_fallthru
    _

</llo_original>
